<compile_context>
chip_gen: v7x
topology: tpu7x:2x2x1
jax: 0.10.0
libtpu: 0.0.40
codegen_flags: <defaults>
</compile_context>

<pallas_src>
import jax
import jax.numpy as jnp
import numpy as np
from jax.experimental import pallas as pl
from jax.experimental.pallas import tpu as pltpu


def tvs_kernel(x_ref,
               wir_ref, wiz_ref, win_ref,
               whr_ref, whz_ref, whn_ref,
               br_ref, bz_ref, bin_ref, bhn_ref,
               wfc_ref, bfc_ref,
               out_ref,
               gir_s, giz_s, gin_s, h_s, hall_s):
    """Single-invocation GRU + Linear.

    Refs:
      x_ref    : (T, Bp, Din)  time-major, batch padded to Bp
      wi*_ref  : (Din, H)      per-gate input weights (transposed), gates r/z/n
      wh*_ref  : (H, H)        per-gate hidden weights (transposed)
      br/bz    : (1, H)        combined b_i + b_h for reset / update gates
      bin/bhn  : (1, H)        b_in (outside r*) and b_hn (inside r*) for the new gate
      wfc_ref  : (H, H)        final Linear weight (transposed), bfc_ref (1, H)
      out_ref  : (T, Bp, H)
      scratch  : gi[r,z,n] (T,Bp,H), h (Bp,H), hall (T,Bp,H) gru outputs
    """
    T, Bp, Din = x_ref.shape
    H = h_s.shape[-1]

    # ---- Phase 1: hoisted input projections for ALL time steps (off the serial chain).
    x2d = x_ref[...].reshape(T * Bp, Din)
    gir_s[...] = (jnp.dot(x2d, wir_ref[...], preferred_element_type=jnp.float32)
                  + br_ref[...]).reshape(T, Bp, H)
    giz_s[...] = (jnp.dot(x2d, wiz_ref[...], preferred_element_type=jnp.float32)
                  + bz_ref[...]).reshape(T, Bp, H)
    gin_s[...] = (jnp.dot(x2d, win_ref[...], preferred_element_type=jnp.float32)
                  + bin_ref[...]).reshape(T, Bp, H)

    # ---- Phase 2: GRU recurrence. Only the h-dependent work is inside the loop.
    h_s[...] = jnp.zeros_like(h_s)

    def step(t, carry):
        h = h_s[...]
        ghr = jnp.dot(h, whr_ref[...], preferred_element_type=jnp.float32)
        ghz = jnp.dot(h, whz_ref[...], preferred_element_type=jnp.float32)
        ghn = jnp.dot(h, whn_ref[...], preferred_element_type=jnp.float32) + bhn_ref[...]
        # PyTorch GRU: r,z gates; b_hn stays inside the r * (.) term for the new gate.
        r = jax.nn.sigmoid(gir_s[t] + ghr)
        z = jax.nn.sigmoid(giz_s[t] + ghz)
        n = jnp.tanh(gin_s[t] + r * ghn)
        h_new = (1.0 - z) * n + z * h
        h_s[...] = h_new
        hall_s[t] = h_new
        return carry

    jax.lax.fori_loop(0, T, step, 0, unroll=True)

    # ---- Phase 3: hoisted VariableSelectionNetwork (single input => plain Linear).
    gru2d = hall_s[...].reshape(T * Bp, H)
    out2d = jnp.dot(gru2d, wfc_ref[...], preferred_element_type=jnp.float32) + bfc_ref[...]
    out_ref[...] = out2d.reshape(T, Bp, H).astype(out_ref.dtype)


def temporal_variable_selection(x, params):
    """x: (B, T, Din) float32  ->  (B, T, H) float32  (eval mode: dropout = identity)."""
    B, T, Din = x.shape
    H = params["whr_t"].shape[0]
    Bp = max(8, ((B + 7) // 8) * 8)          # pad batch to a full sublane tile

    x_tm = jnp.transpose(x, (1, 0, 2))       # time-major (T, B, Din)
    if Bp != B:
        x_tm = jnp.pad(x_tm, ((0, 0), (0, Bp - B), (0, 0)))

    def full(shape):
        return pl.BlockSpec(shape, lambda i: (0,) * len(shape))

    out_tm = pl.pallas_call(
        tvs_kernel,
        out_shape=jax.ShapeDtypeStruct((T, Bp, H), jnp.float32),
        grid=(1,),
        in_specs=[
            full((T, Bp, Din)),
            full((Din, H)), full((Din, H)), full((Din, H)),
            full((H, H)), full((H, H)), full((H, H)),
            full((1, H)), full((1, H)), full((1, H)), full((1, H)),
            full((H, H)), full((1, H)),
        ],
        out_specs=full((T, Bp, H)),
        scratch_shapes=[
            pltpu.VMEM((T, Bp, H), jnp.float32),   # gi_r (all steps)
            pltpu.VMEM((T, Bp, H), jnp.float32),   # gi_z
            pltpu.VMEM((T, Bp, H), jnp.float32),   # gi_n
            pltpu.VMEM((Bp, H), jnp.float32),      # recurrent hidden state
            pltpu.VMEM((T, Bp, H), jnp.float32),   # gru outputs (all steps)
        ],
        compiler_params=pltpu.CompilerParams(
            dimension_semantics=("arbitrary",),
        ),
    )(
        x_tm,
        params["wir_t"], params["wiz_t"], params["win_t"],
        params["whr_t"], params["whz_t"], params["whn_t"],
        params["b_r"], params["b_z"], params["b_in"], params["b_hn"],
        params["wfc_t"], params["bfc"],
    )
    return jnp.transpose(out_tm[:, :B, :], (1, 0, 2))


# ----------------------------------------------------------------------------- helpers

def prepare_params(tp):
    """Split PyTorch-layout GRU/Linear parameters into per-gate transposed kernel params."""
    w_ih, w_hh = tp["weight_ih_l0"], tp["weight_hh_l0"]      # (3H, Din), (3H, H)
    b_ih, b_hh = tp["bias_ih_l0"], tp["bias_hh_l0"]          # (3H,), (3H,)
    fc_w, fc_b = tp["fc_weight"], tp["fc_bias"]              # (H, H), (H,)
    H = w_hh.shape[1]
    sl = lambda a, g: a[g * H:(g + 1) * H]
    return {
        "wir_t": sl(w_ih, 0).T, "wiz_t": sl(w_ih, 1).T, "win_t": sl(w_ih, 2).T,
        "whr_t": sl(w_hh, 0).T, "whz_t": sl(w_hh, 1).T, "whn_t": sl(w_hh, 2).T,
        "b_r": (sl(b_ih, 0) + sl(b_hh, 0)).reshape(1, H),
        "b_z": (sl(b_ih, 1) + sl(b_hh, 1)).reshape(1, H),
        "b_in": sl(b_ih, 2).reshape(1, H),
        "b_hn": sl(b_hh, 2).reshape(1, H),
        "wfc_t": fc_w.T,
        "bfc": fc_b.reshape(1, H),
    }


def reference_forward(x, tp):
    """Pure-JAX reference (lax.scan GRU + Linear) from PyTorch-layout params."""
    B, T, Din = x.shape
    w_ih, w_hh = tp["weight_ih_l0"], tp["weight_hh_l0"]
    b_ih, b_hh = tp["bias_ih_l0"], tp["bias_hh_l0"]
    fc_w, fc_b = tp["fc_weight"], tp["fc_bias"]
    H = w_hh.shape[1]

    def step(h, x_t):
        gi = x_t @ w_ih.T + b_ih
        gh = h @ w_hh.T + b_hh
        r = jax.nn.sigmoid(gi[:, :H] + gh[:, :H])
        z = jax.nn.sigmoid(gi[:, H:2 * H] + gh[:, H:2 * H])
        n = jnp.tanh(gi[:, 2 * H:] + r * gh[:, 2 * H:])
        h_new = (1.0 - z) * n + z * h
        return h_new, h_new

    h0 = jnp.zeros((B, H), jnp.float32)
    _, hs = jax.lax.scan(step, h0, jnp.transpose(x, (1, 0, 2)))  # (T, B, H)
    gru_out = jnp.transpose(hs, (1, 0, 2))                        # (B, T, H)
    return gru_out @ fc_w.T + fc_b


def init_torch_style_params(key, input_size, hidden_size):
    """Deterministic synthetic parameters in PyTorch nn.GRU / nn.Linear layout."""
    H, D = hidden_size, input_size
    k = 1.0 / np.sqrt(H)
    keys = jax.random.split(key, 6)
    u = lambda kk, shape: jax.random.uniform(kk, shape, jnp.float32, -k, k)
    return {
        "weight_ih_l0": u(keys[0], (3 * H, D)),
        "weight_hh_l0": u(keys[1], (3 * H, H)),
        "bias_ih_l0":   u(keys[2], (3 * H,)),
        "bias_hh_l0":   u(keys[3], (3 * H,)),
        "fc_weight":    u(keys[4], (H, H)),
        "fc_bias":      u(keys[5], (H,)),
    }


if __name__ == "__main__":
    B, T, Din, H = 2, 8, 8, 32

    key = jax.random.PRNGKey(0)
    kx, kp = jax.random.split(key)
    x = jax.random.normal(kx, (B, T, Din), jnp.float32)
    tparams = init_torch_style_params(kp, Din, H)
    params = prepare_params(tparams)

    out = jax.block_until_ready(temporal_variable_selection(x, params))
    ref = jax.block_until_ready(reference_forward(x, tparams))
    np.testing.assert_allclose(np.asarray(out), np.asarray(ref), rtol=1e-5, atol=1e-5)

    assert out.shape == (B, T, H)
    print("KERNEL_OK")
</pallas_src>

<mosaic_0001>
module attributes {stable_mosaic.version = 11 : i64} {
  func.func @tvs_kernel(%arg0: i32, %arg1: memref<8x8x8xf32, #tpu.memory_space<vmem>>, %arg2: memref<8x32xf32, #tpu.memory_space<vmem>>, %arg3: memref<8x32xf32, #tpu.memory_space<vmem>>, %arg4: memref<8x32xf32, #tpu.memory_space<vmem>>, %arg5: memref<32x32xf32, #tpu.memory_space<vmem>>, %arg6: memref<32x32xf32, #tpu.memory_space<vmem>>, %arg7: memref<32x32xf32, #tpu.memory_space<vmem>>, %arg8: memref<1x32xf32, #tpu.memory_space<vmem>>, %arg9: memref<1x32xf32, #tpu.memory_space<vmem>>, %arg10: memref<1x32xf32, #tpu.memory_space<vmem>>, %arg11: memref<1x32xf32, #tpu.memory_space<vmem>>, %arg12: memref<32x32xf32, #tpu.memory_space<vmem>>, %arg13: memref<1x32xf32, #tpu.memory_space<vmem>>, %arg14: memref<8x8x32xf32, #tpu.memory_space<vmem>>, %arg15: memref<8x8x32xf32, #tpu.memory_space<vmem>>, %arg16: memref<8x8x32xf32, #tpu.memory_space<vmem>>, %arg17: memref<8x8x32xf32, #tpu.memory_space<vmem>>, %arg18: memref<8x32xf32, #tpu.memory_space<vmem>>, %arg19: memref<8x8x32xf32, #tpu.memory_space<vmem>>) attributes {dimension_semantics = [#tpu.dimension_semantics<arbitrary>], iteration_bounds = array<i64: 1>, scalar_prefetch = 0 : i64, scratch_operands = 5 : i64, tpu.core_type = #tpu.core_type<tc>, window_params = [{pipeline_mode = #tpu.pipeline_mode<synchronous>, transform_indices = @transform_0, window_bounds = array<i64: 8, 8, 8>}, {pipeline_mode = #tpu.pipeline_mode<synchronous>, transform_indices = @transform_1, window_bounds = array<i64: 8, 32>}, {pipeline_mode = #tpu.pipeline_mode<synchronous>, transform_indices = @transform_2, window_bounds = array<i64: 8, 32>}, {pipeline_mode = #tpu.pipeline_mode<synchronous>, transform_indices = @transform_3, window_bounds = array<i64: 8, 32>}, {pipeline_mode = #tpu.pipeline_mode<synchronous>, transform_indices = @transform_4, window_bounds = array<i64: 32, 32>}, {pipeline_mode = #tpu.pipeline_mode<synchronous>, transform_indices = @transform_5, window_bounds = array<i64: 32, 32>}, {pipeline_mode = #tpu.pipeline_mode<synchronous>, transform_indices = @transform_6, window_bounds = array<i64: 32, 32>}, {pipeline_mode = #tpu.pipeline_mode<synchronous>, transform_indices = @transform_7, window_bounds = array<i64: 1, 32>}, {pipeline_mode = #tpu.pipeline_mode<synchronous>, transform_indices = @transform_8, window_bounds = array<i64: 1, 32>}, {pipeline_mode = #tpu.pipeline_mode<synchronous>, transform_indices = @transform_9, window_bounds = array<i64: 1, 32>}, {pipeline_mode = #tpu.pipeline_mode<synchronous>, transform_indices = @transform_10, window_bounds = array<i64: 1, 32>}, {pipeline_mode = #tpu.pipeline_mode<synchronous>, transform_indices = @transform_11, window_bounds = array<i64: 32, 32>}, {pipeline_mode = #tpu.pipeline_mode<synchronous>, transform_indices = @transform_12, window_bounds = array<i64: 1, 32>}, {pipeline_mode = #tpu.pipeline_mode<synchronous>, transform_indices = @transform_13, window_bounds = array<i64: 8, 8, 32>}]} {
    %c0 = arith.constant 0 : index
    %c0_0 = arith.constant 0 : index
    %c0_1 = arith.constant 0 : index
    %0 = vector.load %arg1[%c0, %c0_0, %c0_1] : memref<8x8x8xf32, #tpu.memory_space<vmem>>, vector<8x8x8xf32>
    %1 = vector.shape_cast %0 : vector<8x8x8xf32> to vector<64x8xf32>
    %c0_2 = arith.constant 0 : index
    %c0_3 = arith.constant 0 : index
    %2 = vector.load %arg2[%c0_2, %c0_3] : memref<8x32xf32, #tpu.memory_space<vmem>>, vector<8x32xf32>
    %cst = arith.constant dense<0.000000e+00> : vector<64x32xf32>
    %3 = tpu.matmul %1, %2, %cst {dimension_numbers = #tpu.dot_dimension_numbers<[1], [0], [0], [1], [0, 0, 1, 1], [], []>} : vector<64x8xf32>, vector<8x32xf32>, vector<64x32xf32> -> vector<64x32xf32>
    %c0_4 = arith.constant 0 : index
    %c0_5 = arith.constant 0 : index
    %4 = vector.load %arg8[%c0_4, %c0_5] : memref<1x32xf32, #tpu.memory_space<vmem>>, vector<1x32xf32>
    %5 = vector.broadcast %4 : vector<1x32xf32> to vector<64x32xf32>
    %6 = arith.addf %3, %5 : vector<64x32xf32>
    %7 = vector.shape_cast %6 : vector<64x32xf32> to vector<8x8x32xf32>
    %c0_6 = arith.constant 0 : index
    %c0_7 = arith.constant 0 : index
    %c0_8 = arith.constant 0 : index
    %8 = vector.load %arg15[%c0_6, %c0_7, %c0_8] : memref<8x8x32xf32, #tpu.memory_space<vmem>>, vector<8x8x32xf32>
    tpu.vector_store %arg15[%c0_6, %c0_7, %c0_8], %7 {strides = array<i32>} : memref<8x8x32xf32, #tpu.memory_space<vmem>>, vector<8x8x32xf32>,
    %c0_9 = arith.constant 0 : index
    %c0_10 = arith.constant 0 : index
    %9 = vector.load %arg3[%c0_9, %c0_10] : memref<8x32xf32, #tpu.memory_space<vmem>>, vector<8x32xf32>
    %cst_11 = arith.constant dense<0.000000e+00> : vector<64x32xf32>
    %10 = tpu.matmul %1, %9, %cst_11 {dimension_numbers = #tpu.dot_dimension_numbers<[1], [0], [0], [1], [0, 0, 1, 1], [], []>} : vector<64x8xf32>, vector<8x32xf32>, vector<64x32xf32> -> vector<64x32xf32>
    %c0_12 = arith.constant 0 : index
    %c0_13 = arith.constant 0 : index
    %11 = vector.load %arg9[%c0_12, %c0_13] : memref<1x32xf32, #tpu.memory_space<vmem>>, vector<1x32xf32>
    %12 = vector.broadcast %11 : vector<1x32xf32> to vector<64x32xf32>
    %13 = arith.addf %10, %12 : vector<64x32xf32>
    %14 = vector.shape_cast %13 : vector<64x32xf32> to vector<8x8x32xf32>
    %c0_14 = arith.constant 0 : index
    %c0_15 = arith.constant 0 : index
    %c0_16 = arith.constant 0 : index
    %15 = vector.load %arg16[%c0_14, %c0_15, %c0_16] : memref<8x8x32xf32, #tpu.memory_space<vmem>>, vector<8x8x32xf32>
    tpu.vector_store %arg16[%c0_14, %c0_15, %c0_16], %14 {strides = array<i32>} : memref<8x8x32xf32, #tpu.memory_space<vmem>>, vector<8x8x32xf32>,
    %c0_17 = arith.constant 0 : index
    %c0_18 = arith.constant 0 : index
    %16 = vector.load %arg4[%c0_17, %c0_18] : memref<8x32xf32, #tpu.memory_space<vmem>>, vector<8x32xf32>
    %cst_19 = arith.constant dense<0.000000e+00> : vector<64x32xf32>
    %17 = tpu.matmul %1, %16, %cst_19 {dimension_numbers = #tpu.dot_dimension_numbers<[1], [0], [0], [1], [0, 0, 1, 1], [], []>} : vector<64x8xf32>, vector<8x32xf32>, vector<64x32xf32> -> vector<64x32xf32>
    %c0_20 = arith.constant 0 : index
    %c0_21 = arith.constant 0 : index
    %18 = vector.load %arg10[%c0_20, %c0_21] : memref<1x32xf32, #tpu.memory_space<vmem>>, vector<1x32xf32>
    %19 = vector.broadcast %18 : vector<1x32xf32> to vector<64x32xf32>
    %20 = arith.addf %17, %19 : vector<64x32xf32>
    %21 = vector.shape_cast %20 : vector<64x32xf32> to vector<8x8x32xf32>
    %c0_22 = arith.constant 0 : index
    %c0_23 = arith.constant 0 : index
    %c0_24 = arith.constant 0 : index
    %22 = vector.load %arg17[%c0_22, %c0_23, %c0_24] : memref<8x8x32xf32, #tpu.memory_space<vmem>>, vector<8x8x32xf32>
    tpu.vector_store %arg17[%c0_22, %c0_23, %c0_24], %21 {strides = array<i32>} : memref<8x8x32xf32, #tpu.memory_space<vmem>>, vector<8x8x32xf32>,
    %cst_25 = arith.constant 0.000000e+00 : f32
    %23 = vector.broadcast %cst_25 : f32 to vector<8x32xf32>
    %c0_26 = arith.constant 0 : index
    %c0_27 = arith.constant 0 : index
    %24 = vector.load %arg18[%c0_26, %c0_27] : memref<8x32xf32, #tpu.memory_space<vmem>>, vector<8x32xf32>
    tpu.vector_store %arg18[%c0_26, %c0_27], %23 {strides = array<i32>} : memref<8x32xf32, #tpu.memory_space<vmem>>, vector<8x32xf32>,
    %c0_i32 = arith.constant 0 : i32
    %c0_28 = arith.constant 0 : index
    %c0_29 = arith.constant 0 : index
    %25 = vector.load %arg18[%c0_28, %c0_29] : memref<8x32xf32, #tpu.memory_space<vmem>>, vector<8x32xf32>
    %c0_30 = arith.constant 0 : index
    %c0_31 = arith.constant 0 : index
    %26 = vector.load %arg5[%c0_30, %c0_31] : memref<32x32xf32, #tpu.memory_space<vmem>>, vector<32x32xf32>
    %cst_32 = arith.constant dense<0.000000e+00> : vector<8x32xf32>
    %27 = tpu.matmul %25, %26, %cst_32 {dimension_numbers = #tpu.dot_dimension_numbers<[1], [0], [0], [1], [0, 0, 1, 1], [], []>} : vector<8x32xf32>, vector<32x32xf32>, vector<8x32xf32> -> vector<8x32xf32>
    %c0_33 = arith.constant 0 : index
    %c0_34 = arith.constant 0 : index
    %28 = vector.load %arg6[%c0_33, %c0_34] : memref<32x32xf32, #tpu.memory_space<vmem>>, vector<32x32xf32>
    %cst_35 = arith.constant dense<0.000000e+00> : vector<8x32xf32>
    %29 = tpu.matmul %25, %28, %cst_35 {dimension_numbers = #tpu.dot_dimension_numbers<[1], [0], [0], [1], [0, 0, 1, 1], [], []>} : vector<8x32xf32>, vector<32x32xf32>, vector<8x32xf32> -> vector<8x32xf32>
    %c0_36 = arith.constant 0 : index
    %c0_37 = arith.constant 0 : index
    %30 = vector.load %arg7[%c0_36, %c0_37] : memref<32x32xf32, #tpu.memory_space<vmem>>, vector<32x32xf32>
    %cst_38 = arith.constant dense<0.000000e+00> : vector<8x32xf32>
    %31 = tpu.matmul %25, %30, %cst_38 {dimension_numbers = #tpu.dot_dimension_numbers<[1], [0], [0], [1], [0, 0, 1, 1], [], []>} : vector<8x32xf32>, vector<32x32xf32>, vector<8x32xf32> -> vector<8x32xf32>
    %c0_39 = arith.constant 0 : index
    %c0_40 = arith.constant 0 : index
    %32 = vector.load %arg11[%c0_39, %c0_40] : memref<1x32xf32, #tpu.memory_space<vmem>>, vector<1x32xf32>
    %33 = vector.broadcast %32 : vector<1x32xf32> to vector<8x32xf32>
    %34 = arith.addf %31, %33 : vector<8x32xf32>
    %35 = arith.index_cast %c0_i32 : i32 to index
    %c0_41 = arith.constant 0 : index
    %c0_42 = arith.constant 0 : index
    %36 = vector.load %arg15[%35, %c0_41, %c0_42] : memref<8x8x32xf32, #tpu.memory_space<vmem>>, vector<1x8x32xf32>
    %37 = vector.shape_cast %36 : vector<1x8x32xf32> to vector<8x32xf32>
    %38 = arith.addf %37, %27 : vector<8x32xf32>
    %39 = arith.negf %38 : vector<8x32xf32>
    %40 = math.exp %39 : vector<8x32xf32>
    %cst_43 = arith.constant 1.000000e+00 : f32
    %41 = vector.broadcast %cst_43 : f32 to vector<8x32xf32>
    %42 = arith.addf %41, %40 : vector<8x32xf32>
    %43 = arith.divf %41, %42 : vector<8x32xf32>
    %44 = arith.index_cast %c0_i32 : i32 to index
    %c0_44 = arith.constant 0 : index
    %c0_45 = arith.constant 0 : index
    %45 = vector.load %arg16[%44, %c0_44, %c0_45] : memref<8x8x32xf32, #tpu.memory_space<vmem>>, vector<1x8x32xf32>
    %46 = vector.shape_cast %45 : vector<1x8x32xf32> to vector<8x32xf32>
    %47 = arith.addf %46, %29 : vector<8x32xf32>
    %48 = arith.negf %47 : vector<8x32xf32>
    %49 = math.exp %48 : vector<8x32xf32>
    %cst_46 = arith.constant 1.000000e+00 : f32
    %50 = vector.broadcast %cst_46 : f32 to vector<8x32xf32>
    %51 = arith.addf %50, %49 : vector<8x32xf32>
    %52 = arith.divf %50, %51 : vector<8x32xf32>
    %53 = arith.index_cast %c0_i32 : i32 to index
    %c0_47 = arith.constant 0 : index
    %c0_48 = arith.constant 0 : index
    %54 = vector.load %arg17[%53, %c0_47, %c0_48] : memref<8x8x32xf32, #tpu.memory_space<vmem>>, vector<1x8x32xf32>
    %55 = vector.shape_cast %54 : vector<1x8x32xf32> to vector<8x32xf32>
    %56 = arith.mulf %43, %34 : vector<8x32xf32>
    %57 = arith.addf %55, %56 : vector<8x32xf32>
    %58 = math.tanh %57 : vector<8x32xf32>
    %cst_49 = arith.constant 1.000000e+00 : f32
    %59 = vector.broadcast %cst_49 : f32 to vector<8x32xf32>
    %60 = arith.subf %59, %52 : vector<8x32xf32>
    %61 = arith.mulf %60, %58 : vector<8x32xf32>
    %62 = arith.mulf %52, %25 : vector<8x32xf32>
    %63 = arith.addf %61, %62 : vector<8x32xf32>
    %c0_50 = arith.constant 0 : index
    %c0_51 = arith.constant 0 : index
    %64 = vector.load %arg18[%c0_50, %c0_51] : memref<8x32xf32, #tpu.memory_space<vmem>>, vector<8x32xf32>
    tpu.vector_store %arg18[%c0_50, %c0_51], %63 {strides = array<i32>} : memref<8x32xf32, #tpu.memory_space<vmem>>, vector<8x32xf32>,
    %65 = arith.index_cast %c0_i32 : i32 to index
    %c0_52 = arith.constant 0 : index
    %c0_53 = arith.constant 0 : index
    %66 = vector.load %arg19[%65, %c0_52, %c0_53] : memref<8x8x32xf32, #tpu.memory_space<vmem>>, vector<1x8x32xf32>
    %67 = vector.shape_cast %66 : vector<1x8x32xf32> to vector<8x32xf32>
    %68 = vector.shape_cast %63 : vector<8x32xf32> to vector<1x8x32xf32>
    tpu.vector_store %arg19[%65, %c0_52, %c0_53], %68 {strides = array<i32>} : memref<8x8x32xf32, #tpu.memory_space<vmem>>, vector<1x8x32xf32>,
    %c1_i32 = arith.constant 1 : i32
    %c0_54 = arith.constant 0 : index
    %c0_55 = arith.constant 0 : index
    %69 = vector.load %arg18[%c0_54, %c0_55] : memref<8x32xf32, #tpu.memory_space<vmem>>, vector<8x32xf32>
    %c0_56 = arith.constant 0 : index
    %c0_57 = arith.constant 0 : index
    %70 = vector.load %arg5[%c0_56, %c0_57] : memref<32x32xf32, #tpu.memory_space<vmem>>, vector<32x32xf32>
    %cst_58 = arith.constant dense<0.000000e+00> : vector<8x32xf32>
    %71 = tpu.matmul %69, %70, %cst_58 {dimension_numbers = #tpu.dot_dimension_numbers<[1], [0], [0], [1], [0, 0, 1, 1], [], []>} : vector<8x32xf32>, vector<32x32xf32>, vector<8x32xf32> -> vector<8x32xf32>
    %c0_59 = arith.constant 0 : index
    %c0_60 = arith.constant 0 : index
    %72 = vector.load %arg6[%c0_59, %c0_60] : memref<32x32xf32, #tpu.memory_space<vmem>>, vector<32x32xf32>
    %cst_61 = arith.constant dense<0.000000e+00> : vector<8x32xf32>
    %73 = tpu.matmul %69, %72, %cst_61 {dimension_numbers = #tpu.dot_dimension_numbers<[1], [0], [0], [1], [0, 0, 1, 1], [], []>} : vector<8x32xf32>, vector<32x32xf32>, vector<8x32xf32> -> vector<8x32xf32>
    %c0_62 = arith.constant 0 : index
    %c0_63 = arith.constant 0 : index
    %74 = vector.load %arg7[%c0_62, %c0_63] : memref<32x32xf32, #tpu.memory_space<vmem>>, vector<32x32xf32>
    %cst_64 = arith.constant dense<0.000000e+00> : vector<8x32xf32>
    %75 = tpu.matmul %69, %74, %cst_64 {dimension_numbers = #tpu.dot_dimension_numbers<[1], [0], [0], [1], [0, 0, 1, 1], [], []>} : vector<8x32xf32>, vector<32x32xf32>, vector<8x32xf32> -> vector<8x32xf32>
    %c0_65 = arith.constant 0 : index
    %c0_66 = arith.constant 0 : index
    %76 = vector.load %arg11[%c0_65, %c0_66] : memref<1x32xf32, #tpu.memory_space<vmem>>, vector<1x32xf32>
    %77 = vector.broadcast %76 : vector<1x32xf32> to vector<8x32xf32>
    %78 = arith.addf %75, %77 : vector<8x32xf32>
    %79 = arith.index_cast %c1_i32 : i32 to index
    %c0_67 = arith.constant 0 : index
    %c0_68 = arith.constant 0 : index
    %80 = vector.load %arg15[%79, %c0_67, %c0_68] : memref<8x8x32xf32, #tpu.memory_space<vmem>>, vector<1x8x32xf32>
    %81 = vector.shape_cast %80 : vector<1x8x32xf32> to vector<8x32xf32>
    %82 = arith.addf %81, %71 : vector<8x32xf32>
    %83 = arith.negf %82 : vector<8x32xf32>
    %84 = math.exp %83 : vector<8x32xf32>
    %cst_69 = arith.constant 1.000000e+00 : f32
    %85 = vector.broadcast %cst_69 : f32 to vector<8x32xf32>
    %86 = arith.addf %85, %84 : vector<8x32xf32>
    %87 = arith.divf %85, %86 : vector<8x32xf32>
    %88 = arith.index_cast %c1_i32 : i32 to index
    %c0_70 = arith.constant 0 : index
    %c0_71 = arith.constant 0 : index
    %89 = vector.load %arg16[%88, %c0_70, %c0_71] : memref<8x8x32xf32, #tpu.memory_space<vmem>>, vector<1x8x32xf32>
    %90 = vector.shape_cast %89 : vector<1x8x32xf32> to vector<8x32xf32>
    %91 = arith.addf %90, %73 : vector<8x32xf32>
    %92 = arith.negf %91 : vector<8x32xf32>
    %93 = math.exp %92 : vector<8x32xf32>
    %cst_72 = arith.constant 1.000000e+00 : f32
    %94 = vector.broadcast %cst_72 : f32 to vector<8x32xf32>
    %95 = arith.addf %94, %93 : vector<8x32xf32>
    %96 = arith.divf %94, %95 : vector<8x32xf32>
    %97 = arith.index_cast %c1_i32 : i32 to index
    %c0_73 = arith.constant 0 : index
    %c0_74 = arith.constant 0 : index
    %98 = vector.load %arg17[%97, %c0_73, %c0_74] : memref<8x8x32xf32, #tpu.memory_space<vmem>>, vector<1x8x32xf32>
    %99 = vector.shape_cast %98 : vector<1x8x32xf32> to vector<8x32xf32>
    %100 = arith.mulf %87, %78 : vector<8x32xf32>
    %101 = arith.addf %99, %100 : vector<8x32xf32>
    %102 = math.tanh %101 : vector<8x32xf32>
    %cst_75 = arith.constant 1.000000e+00 : f32
    %103 = vector.broadcast %cst_75 : f32 to vector<8x32xf32>
    %104 = arith.subf %103, %96 : vector<8x32xf32>
    %105 = arith.mulf %104, %102 : vector<8x32xf32>
    %106 = arith.mulf %96, %69 : vector<8x32xf32>
    %107 = arith.addf %105, %106 : vector<8x32xf32>
    %c0_76 = arith.constant 0 : index
    %c0_77 = arith.constant 0 : index
    %108 = vector.load %arg18[%c0_76, %c0_77] : memref<8x32xf32, #tpu.memory_space<vmem>>, vector<8x32xf32>
    tpu.vector_store %arg18[%c0_76, %c0_77], %107 {strides = array<i32>} : memref<8x32xf32, #tpu.memory_space<vmem>>, vector<8x32xf32>,
    %109 = arith.index_cast %c1_i32 : i32 to index
    %c0_78 = arith.constant 0 : index
    %c0_79 = arith.constant 0 : index
    %110 = vector.load %arg19[%109, %c0_78, %c0_79] : memref<8x8x32xf32, #tpu.memory_space<vmem>>, vector<1x8x32xf32>
    %111 = vector.shape_cast %110 : vector<1x8x32xf32> to vector<8x32xf32>
    %112 = vector.shape_cast %107 : vector<8x32xf32> to vector<1x8x32xf32>
    tpu.vector_store %arg19[%109, %c0_78, %c0_79], %112 {strides = array<i32>} : memref<8x8x32xf32, #tpu.memory_space<vmem>>, vector<1x8x32xf32>,
    %c2_i32 = arith.constant 2 : i32
    %c0_80 = arith.constant 0 : index
    %c0_81 = arith.constant 0 : index
    %113 = vector.load %arg18[%c0_80, %c0_81] : memref<8x32xf32, #tpu.memory_space<vmem>>, vector<8x32xf32>
    %c0_82 = arith.constant 0 : index
    %c0_83 = arith.constant 0 : index
    %114 = vector.load %arg5[%c0_82, %c0_83] : memref<32x32xf32, #tpu.memory_space<vmem>>, vector<32x32xf32>
    %cst_84 = arith.constant dense<0.000000e+00> : vector<8x32xf32>
    %115 = tpu.matmul %113, %114, %cst_84 {dimension_numbers = #tpu.dot_dimension_numbers<[1], [0], [0], [1], [0, 0, 1, 1], [], []>} : vector<8x32xf32>, vector<32x32xf32>, vector<8x32xf32> -> vector<8x32xf32>
    %c0_85 = arith.constant 0 : index
    %c0_86 = arith.constant 0 : index
    %116 = vector.load %arg6[%c0_85, %c0_86] : memref<32x32xf32, #tpu.memory_space<vmem>>, vector<32x32xf32>
    %cst_87 = arith.constant dense<0.000000e+00> : vector<8x32xf32>
    %117 = tpu.matmul %113, %116, %cst_87 {dimension_numbers = #tpu.dot_dimension_numbers<[1], [0], [0], [1], [0, 0, 1, 1], [], []>} : vector<8x32xf32>, vector<32x32xf32>, vector<8x32xf32> -> vector<8x32xf32>
    %c0_88 = arith.constant 0 : index
    %c0_89 = arith.constant 0 : index
    %118 = vector.load %arg7[%c0_88, %c0_89] : memref<32x32xf32, #tpu.memory_space<vmem>>, vector<32x32xf32>
    %cst_90 = arith.constant dense<0.000000e+00> : vector<8x32xf32>
    %119 = tpu.matmul %113, %118, %cst_90 {dimension_numbers = #tpu.dot_dimension_numbers<[1], [0], [0], [1], [0, 0, 1, 1], [], []>} : vector<8x32xf32>, vector<32x32xf32>, vector<8x32xf32> -> vector<8x32xf32>
    %c0_91 = arith.constant 0 : index
    %c0_92 = arith.constant 0 : index
    %120 = vector.load %arg11[%c0_91, %c0_92] : memref<1x32xf32, #tpu.memory_space<vmem>>, vector<1x32xf32>
    %121 = vector.broadcast %120 : vector<1x32xf32> to vector<8x32xf32>
    %122 = arith.addf %119, %121 : vector<8x32xf32>
    %123 = arith.index_cast %c2_i32 : i32 to index
    %c0_93 = arith.constant 0 : index
    %c0_94 = arith.constant 0 : index
    %124 = vector.load %arg15[%123, %c0_93, %c0_94] : memref<8x8x32xf32, #tpu.memory_space<vmem>>, vector<1x8x32xf32>
    %125 = vector.shape_cast %124 : vector<1x8x32xf32> to vector<8x32xf32>
    %126 = arith.addf %125, %115 : vector<8x32xf32>
    %127 = arith.negf %126 : vector<8x32xf32>
    %128 = math.exp %127 : vector<8x32xf32>
    %cst_95 = arith.constant 1.000000e+00 : f32
    %129 = vector.broadcast %cst_95 : f32 to vector<8x32xf32>
    %130 = arith.addf %129, %128 : vector<8x32xf32>
    %131 = arith.divf %129, %130 : vector<8x32xf32>
    %132 = arith.index_cast %c2_i32 : i32 to index
    %c0_96 = arith.constant 0 : index
    %c0_97 = arith.constant 0 : index
    %133 = vector.load %arg16[%132, %c0_96, %c0_97] : memref<8x8x32xf32, #tpu.memory_space<vmem>>, vector<1x8x32xf32>
    %134 = vector.shape_cast %133 : vector<1x8x32xf32> to vector<8x32xf32>
    %135 = arith.addf %134, %117 : vector<8x32xf32>
    %136 = arith.negf %135 : vector<8x32xf32>
    %137 = math.exp %136 : vector<8x32xf32>
    %cst_98 = arith.constant 1.000000e+00 : f32
    %138 = vector.broadcast %cst_98 : f32 to vector<8x32xf32>
    %139 = arith.addf %138, %137 : vector<8x32xf32>
    %140 = arith.divf %138, %139 : vector<8x32xf32>
    %141 = arith.index_cast %c2_i32 : i32 to index
    %c0_99 = arith.constant 0 : index
    %c0_100 = arith.constant 0 : index
    %142 = vector.load %arg17[%141, %c0_99, %c0_100] : memref<8x8x32xf32, #tpu.memory_space<vmem>>, vector<1x8x32xf32>
    %143 = vector.shape_cast %142 : vector<1x8x32xf32> to vector<8x32xf32>
    %144 = arith.mulf %131, %122 : vector<8x32xf32>
    %145 = arith.addf %143, %144 : vector<8x32xf32>
    %146 = math.tanh %145 : vector<8x32xf32>
    %cst_101 = arith.constant 1.000000e+00 : f32
    %147 = vector.broadcast %cst_101 : f32 to vector<8x32xf32>
    %148 = arith.subf %147, %140 : vector<8x32xf32>
    %149 = arith.mulf %148, %146 : vector<8x32xf32>
    %150 = arith.mulf %140, %113 : vector<8x32xf32>
    %151 = arith.addf %149, %150 : vector<8x32xf32>
    %c0_102 = arith.constant 0 : index
    %c0_103 = arith.constant 0 : index
    %152 = vector.load %arg18[%c0_102, %c0_103] : memref<8x32xf32, #tpu.memory_space<vmem>>, vector<8x32xf32>
    tpu.vector_store %arg18[%c0_102, %c0_103], %151 {strides = array<i32>} : memref<8x32xf32, #tpu.memory_space<vmem>>, vector<8x32xf32>,
    %153 = arith.index_cast %c2_i32 : i32 to index
    %c0_104 = arith.constant 0 : index
    %c0_105 = arith.constant 0 : index
    %154 = vector.load %arg19[%153, %c0_104, %c0_105] : memref<8x8x32xf32, #tpu.memory_space<vmem>>, vector<1x8x32xf32>
    %155 = vector.shape_cast %154 : vector<1x8x32xf32> to vector<8x32xf32>
    %156 = vector.shape_cast %151 : vector<8x32xf32> to vector<1x8x32xf32>
    tpu.vector_store %arg19[%153, %c0_104, %c0_105], %156 {strides = array<i32>} : memref<8x8x32xf32, #tpu.memory_space<vmem>>, vector<1x8x32xf32>,
    %c3_i32 = arith.constant 3 : i32
    %c0_106 = arith.constant 0 : index
    %c0_107 = arith.constant 0 : index
    %157 = vector.load %arg18[%c0_106, %c0_107] : memref<8x32xf32, #tpu.memory_space<vmem>>, vector<8x32xf32>
    %c0_108 = arith.constant 0 : index
    %c0_109 = arith.constant 0 : index
    %158 = vector.load %arg5[%c0_108, %c0_109] : memref<32x32xf32, #tpu.memory_space<vmem>>, vector<32x32xf32>
    %cst_110 = arith.constant dense<0.000000e+00> : vector<8x32xf32>
    %159 = tpu.matmul %157, %158, %cst_110 {dimension_numbers = #tpu.dot_dimension_numbers<[1], [0], [0], [1], [0, 0, 1, 1], [], []>} : vector<8x32xf32>, vector<32x32xf32>, vector<8x32xf32> -> vector<8x32xf32>
    %c0_111 = arith.constant 0 : index
    %c0_112 = arith.constant 0 : index
    %160 = vector.load %arg6[%c0_111, %c0_112] : memref<32x32xf32, #tpu.memory_space<vmem>>, vector<32x32xf32>
    %cst_113 = arith.constant dense<0.000000e+00> : vector<8x32xf32>
    %161 = tpu.matmul %157, %160, %cst_113 {dimension_numbers = #tpu.dot_dimension_numbers<[1], [0], [0], [1], [0, 0, 1, 1], [], []>} : vector<8x32xf32>, vector<32x32xf32>, vector<8x32xf32> -> vector<8x32xf32>
    %c0_114 = arith.constant 0 : index
    %c0_115 = arith.constant 0 : index
    %162 = vector.load %arg7[%c0_114, %c0_115] : memref<32x32xf32, #tpu.memory_space<vmem>>, vector<32x32xf32>
    %cst_116 = arith.constant dense<0.000000e+00> : vector<8x32xf32>
    %163 = tpu.matmul %157, %162, %cst_116 {dimension_numbers = #tpu.dot_dimension_numbers<[1], [0], [0], [1], [0, 0, 1, 1], [], []>} : vector<8x32xf32>, vector<32x32xf32>, vector<8x32xf32> -> vector<8x32xf32>
    %c0_117 = arith.constant 0 : index
    %c0_118 = arith.constant 0 : index
    %164 = vector.load %arg11[%c0_117, %c0_118] : memref<1x32xf32, #tpu.memory_space<vmem>>, vector<1x32xf32>
    %165 = vector.broadcast %164 : vector<1x32xf32> to vector<8x32xf32>
    %166 = arith.addf %163, %165 : vector<8x32xf32>
    %167 = arith.index_cast %c3_i32 : i32 to index
    %c0_119 = arith.constant 0 : index
    %c0_120 = arith.constant 0 : index
    %168 = vector.load %arg15[%167, %c0_119, %c0_120] : memref<8x8x32xf32, #tpu.memory_space<vmem>>, vector<1x8x32xf32>
    %169 = vector.shape_cast %168 : vector<1x8x32xf32> to vector<8x32xf32>
    %170 = arith.addf %169, %159 : vector<8x32xf32>
    %171 = arith.negf %170 : vector<8x32xf32>
    %172 = math.exp %171 : vector<8x32xf32>
    %cst_121 = arith.constant 1.000000e+00 : f32
    %173 = vector.broadcast %cst_121 : f32 to vector<8x32xf32>
    %174 = arith.addf %173, %172 : vector<8x32xf32>
    %175 = arith.divf %173, %174 : vector<8x32xf32>
    %176 = arith.index_cast %c3_i32 : i32 to index
    %c0_122 = arith.constant 0 : index
    %c0_123 = arith.constant 0 : index
    %177 = vector.load %arg16[%176, %c0_122, %c0_123] : memref<8x8x32xf32, #tpu.memory_space<vmem>>, vector<1x8x32xf32>
    %178 = vector.shape_cast %177 : vector<1x8x32xf32> to vector<8x32xf32>
    %179 = arith.addf %178, %161 : vector<8x32xf32>
    %180 = arith.negf %179 : vector<8x32xf32>
    %181 = math.exp %180 : vector<8x32xf32>
    %cst_124 = arith.constant 1.000000e+00 : f32
    %182 = vector.broadcast %cst_124 : f32 to vector<8x32xf32>
    %183 = arith.addf %182, %181 : vector<8x32xf32>
    %184 = arith.divf %182, %183 : vector<8x32xf32>
    %185 = arith.index_cast %c3_i32 : i32 to index
    %c0_125 = arith.constant 0 : index
    %c0_126 = arith.constant 0 : index
    %186 = vector.load %arg17[%185, %c0_125, %c0_126] : memref<8x8x32xf32, #tpu.memory_space<vmem>>, vector<1x8x32xf32>
    %187 = vector.shape_cast %186 : vector<1x8x32xf32> to vector<8x32xf32>
    %188 = arith.mulf %175, %166 : vector<8x32xf32>
    %189 = arith.addf %187, %188 : vector<8x32xf32>
    %190 = math.tanh %189 : vector<8x32xf32>
    %cst_127 = arith.constant 1.000000e+00 : f32
    %191 = vector.broadcast %cst_127 : f32 to vector<8x32xf32>
    %192 = arith.subf %191, %184 : vector<8x32xf32>
    %193 = arith.mulf %192, %190 : vector<8x32xf32>
    %194 = arith.mulf %184, %157 : vector<8x32xf32>
    %195 = arith.addf %193, %194 : vector<8x32xf32>
    %c0_128 = arith.constant 0 : index
    %c0_129 = arith.constant 0 : index
    %196 = vector.load %arg18[%c0_128, %c0_129] : memref<8x32xf32, #tpu.memory_space<vmem>>, vector<8x32xf32>
    tpu.vector_store %arg18[%c0_128, %c0_129], %195 {strides = array<i32>} : memref<8x32xf32, #tpu.memory_space<vmem>>, vector<8x32xf32>,
    %197 = arith.index_cast %c3_i32 : i32 to index
    %c0_130 = arith.constant 0 : index
    %c0_131 = arith.constant 0 : index
    %198 = vector.load %arg19[%197, %c0_130, %c0_131] : memref<8x8x32xf32, #tpu.memory_space<vmem>>, vector<1x8x32xf32>
    %199 = vector.shape_cast %198 : vector<1x8x32xf32> to vector<8x32xf32>
    %200 = vector.shape_cast %195 : vector<8x32xf32> to vector<1x8x32xf32>
    tpu.vector_store %arg19[%197, %c0_130, %c0_131], %200 {strides = array<i32>} : memref<8x8x32xf32, #tpu.memory_space<vmem>>, vector<1x8x32xf32>,
    %c4_i32 = arith.constant 4 : i32
    %c0_132 = arith.constant 0 : index
    %c0_133 = arith.constant 0 : index
    %201 = vector.load %arg18[%c0_132, %c0_133] : memref<8x32xf32, #tpu.memory_space<vmem>>, vector<8x32xf32>
    %c0_134 = arith.constant 0 : index
    %c0_135 = arith.constant 0 : index
    %202 = vector.load %arg5[%c0_134, %c0_135] : memref<32x32xf32, #tpu.memory_space<vmem>>, vector<32x32xf32>
    %cst_136 = arith.constant dense<0.000000e+00> : vector<8x32xf32>
    %203 = tpu.matmul %201, %202, %cst_136 {dimension_numbers = #tpu.dot_dimension_numbers<[1], [0], [0], [1], [0, 0, 1, 1], [], []>} : vector<8x32xf32>, vector<32x32xf32>, vector<8x32xf32> -> vector<8x32xf32>
    %c0_137 = arith.constant 0 : index
    %c0_138 = arith.constant 0 : index
    %204 = vector.load %arg6[%c0_137, %c0_138] : memref<32x32xf32, #tpu.memory_space<vmem>>, vector<32x32xf32>
    %cst_139 = arith.constant dense<0.000000e+00> : vector<8x32xf32>
    %205 = tpu.matmul %201, %204, %cst_139 {dimension_numbers = #tpu.dot_dimension_numbers<[1], [0], [0], [1], [0, 0, 1, 1], [], []>} : vector<8x32xf32>, vector<32x32xf32>, vector<8x32xf32> -> vector<8x32xf32>
    %c0_140 = arith.constant 0 : index
    %c0_141 = arith.constant 0 : index
    %206 = vector.load %arg7[%c0_140, %c0_141] : memref<32x32xf32, #tpu.memory_space<vmem>>, vector<32x32xf32>
    %cst_142 = arith.constant dense<0.000000e+00> : vector<8x32xf32>
    %207 = tpu.matmul %201, %206, %cst_142 {dimension_numbers = #tpu.dot_dimension_numbers<[1], [0], [0], [1], [0, 0, 1, 1], [], []>} : vector<8x32xf32>, vector<32x32xf32>, vector<8x32xf32> -> vector<8x32xf32>
    %c0_143 = arith.constant 0 : index
    %c0_144 = arith.constant 0 : index
    %208 = vector.load %arg11[%c0_143, %c0_144] : memref<1x32xf32, #tpu.memory_space<vmem>>, vector<1x32xf32>
    %209 = vector.broadcast %208 : vector<1x32xf32> to vector<8x32xf32>
    %210 = arith.addf %207, %209 : vector<8x32xf32>
    %211 = arith.index_cast %c4_i32 : i32 to index
    %c0_145 = arith.constant 0 : index
    %c0_146 = arith.constant 0 : index
    %212 = vector.load %arg15[%211, %c0_145, %c0_146] : memref<8x8x32xf32, #tpu.memory_space<vmem>>, vector<1x8x32xf32>
    %213 = vector.shape_cast %212 : vector<1x8x32xf32> to vector<8x32xf32>
    %214 = arith.addf %213, %203 : vector<8x32xf32>
    %215 = arith.negf %214 : vector<8x32xf32>
    %216 = math.exp %215 : vector<8x32xf32>
    %cst_147 = arith.constant 1.000000e+00 : f32
    %217 = vector.broadcast %cst_147 : f32 to vector<8x32xf32>
    %218 = arith.addf %217, %216 : vector<8x32xf32>
    %219 = arith.divf %217, %218 : vector<8x32xf32>
    %220 = arith.index_cast %c4_i32 : i32 to index
    %c0_148 = arith.constant 0 : index
    %c0_149 = arith.constant 0 : index
    %221 = vector.load %arg16[%220, %c0_148, %c0_149] : memref<8x8x32xf32, #tpu.memory_space<vmem>>, vector<1x8x32xf32>
    %222 = vector.shape_cast %221 : vector<1x8x32xf32> to vector<8x32xf32>
    %223 = arith.addf %222, %205 : vector<8x32xf32>
    %224 = arith.negf %223 : vector<8x32xf32>
    %225 = math.exp %224 : vector<8x32xf32>
    %cst_150 = arith.constant 1.000000e+00 : f32
    %226 = vector.broadcast %cst_150 : f32 to vector<8x32xf32>
    %227 = arith.addf %226, %225 : vector<8x32xf32>
    %228 = arith.divf %226, %227 : vector<8x32xf32>
    %229 = arith.index_cast %c4_i32 : i32 to index
    %c0_151 = arith.constant 0 : index
    %c0_152 = arith.constant 0 : index
    %230 = vector.load %arg17[%229, %c0_151, %c0_152] : memref<8x8x32xf32, #tpu.memory_space<vmem>>, vector<1x8x32xf32>
    %231 = vector.shape_cast %230 : vector<1x8x32xf32> to vector<8x32xf32>
    %232 = arith.mulf %219, %210 : vector<8x32xf32>
    %233 = arith.addf %231, %232 : vector<8x32xf32>
    %234 = math.tanh %233 : vector<8x32xf32>
    %cst_153 = arith.constant 1.000000e+00 : f32
    %235 = vector.broadcast %cst_153 : f32 to vector<8x32xf32>
    %236 = arith.subf %235, %228 : vector<8x32xf32>
    %237 = arith.mulf %236, %234 : vector<8x32xf32>
    %238 = arith.mulf %228, %201 : vector<8x32xf32>
    %239 = arith.addf %237, %238 : vector<8x32xf32>
    %c0_154 = arith.constant 0 : index
    %c0_155 = arith.constant 0 : index
    %240 = vector.load %arg18[%c0_154, %c0_155] : memref<8x32xf32, #tpu.memory_space<vmem>>, vector<8x32xf32>
    tpu.vector_store %arg18[%c0_154, %c0_155], %239 {strides = array<i32>} : memref<8x32xf32, #tpu.memory_space<vmem>>, vector<8x32xf32>,
    %241 = arith.index_cast %c4_i32 : i32 to index
    %c0_156 = arith.constant 0 : index
    %c0_157 = arith.constant 0 : index
    %242 = vector.load %arg19[%241, %c0_156, %c0_157] : memref<8x8x32xf32, #tpu.memory_space<vmem>>, vector<1x8x32xf32>
    %243 = vector.shape_cast %242 : vector<1x8x32xf32> to vector<8x32xf32>
    %244 = vector.shape_cast %239 : vector<8x32xf32> to vector<1x8x32xf32>
    tpu.vector_store %arg19[%241, %c0_156, %c0_157], %244 {strides = array<i32>} : memref<8x8x32xf32, #tpu.memory_space<vmem>>, vector<1x8x32xf32>,
    %c5_i32 = arith.constant 5 : i32
    %c0_158 = arith.constant 0 : index
    %c0_159 = arith.constant 0 : index
    %245 = vector.load %arg18[%c0_158, %c0_159] : memref<8x32xf32, #tpu.memory_space<vmem>>, vector<8x32xf32>
    %c0_160 = arith.constant 0 : index
    %c0_161 = arith.constant 0 : index
    %246 = vector.load %arg5[%c0_160, %c0_161] : memref<32x32xf32, #tpu.memory_space<vmem>>, vector<32x32xf32>
    %cst_162 = arith.constant dense<0.000000e+00> : vector<8x32xf32>
    %247 = tpu.matmul %245, %246, %cst_162 {dimension_numbers = #tpu.dot_dimension_numbers<[1], [0], [0], [1], [0, 0, 1, 1], [], []>} : vector<8x32xf32>, vector<32x32xf32>, vector<8x32xf32> -> vector<8x32xf32>
    %c0_163 = arith.constant 0 : index
    %c0_164 = arith.constant 0 : index
    %248 = vector.load %arg6[%c0_163, %c0_164] : memref<32x32xf32, #tpu.memory_space<vmem>>, vector<32x32xf32>
    %cst_165 = arith.constant dense<0.000000e+00> : vector<8x32xf32>
    %249 = tpu.matmul %245, %248, %cst_165 {dimension_numbers = #tpu.dot_dimension_numbers<[1], [0], [0], [1], [0, 0, 1, 1], [], []>} : vector<8x32xf32>, vector<32x32xf32>, vector<8x32xf32> -> vector<8x32xf32>
    %c0_166 = arith.constant 0 : index
    %c0_167 = arith.constant 0 : index
    %250 = vector.load %arg7[%c0_166, %c0_167] : memref<32x32xf32, #tpu.memory_space<vmem>>, vector<32x32xf32>
    %cst_168 = arith.constant dense<0.000000e+00> : vector<8x32xf32>
    %251 = tpu.matmul %245, %250, %cst_168 {dimension_numbers = #tpu.dot_dimension_numbers<[1], [0], [0], [1], [0, 0, 1, 1], [], []>} : vector<8x32xf32>, vector<32x32xf32>, vector<8x32xf32> -> vector<8x32xf32>
    %c0_169 = arith.constant 0 : index
    %c0_170 = arith.constant 0 : index
    %252 = vector.load %arg11[%c0_169, %c0_170] : memref<1x32xf32, #tpu.memory_space<vmem>>, vector<1x32xf32>
    %253 = vector.broadcast %252 : vector<1x32xf32> to vector<8x32xf32>
    %254 = arith.addf %251, %253 : vector<8x32xf32>
    %255 = arith.index_cast %c5_i32 : i32 to index
    %c0_171 = arith.constant 0 : index
    %c0_172 = arith.constant 0 : index
    %256 = vector.load %arg15[%255, %c0_171, %c0_172] : memref<8x8x32xf32, #tpu.memory_space<vmem>>, vector<1x8x32xf32>
    %257 = vector.shape_cast %256 : vector<1x8x32xf32> to vector<8x32xf32>
    %258 = arith.addf %257, %247 : vector<8x32xf32>
    %259 = arith.negf %258 : vector<8x32xf32>
    %260 = math.exp %259 : vector<8x32xf32>
    %cst_173 = arith.constant 1.000000e+00 : f32
    %261 = vector.broadcast %cst_173 : f32 to vector<8x32xf32>
    %262 = arith.addf %261, %260 : vector<8x32xf32>
    %263 = arith.divf %261, %262 : vector<8x32xf32>
    %264 = arith.index_cast %c5_i32 : i32 to index
    %c0_174 = arith.constant 0 : index
    %c0_175 = arith.constant 0 : index
    %265 = vector.load %arg16[%264, %c0_174, %c0_175] : memref<8x8x32xf32, #tpu.memory_space<vmem>>, vector<1x8x32xf32>
    %266 = vector.shape_cast %265 : vector<1x8x32xf32> to vector<8x32xf32>
    %267 = arith.addf %266, %249 : vector<8x32xf32>
    %268 = arith.negf %267 : vector<8x32xf32>
    %269 = math.exp %268 : vector<8x32xf32>
    %cst_176 = arith.constant 1.000000e+00 : f32
    %270 = vector.broadcast %cst_176 : f32 to vector<8x32xf32>
    %271 = arith.addf %270, %269 : vector<8x32xf32>
    %272 = arith.divf %270, %271 : vector<8x32xf32>
    %273 = arith.index_cast %c5_i32 : i32 to index
    %c0_177 = arith.constant 0 : index
    %c0_178 = arith.constant 0 : index
    %274 = vector.load %arg17[%273, %c0_177, %c0_178] : memref<8x8x32xf32, #tpu.memory_space<vmem>>, vector<1x8x32xf32>
    %275 = vector.shape_cast %274 : vector<1x8x32xf32> to vector<8x32xf32>
    %276 = arith.mulf %263, %254 : vector<8x32xf32>
    %277 = arith.addf %275, %276 : vector<8x32xf32>
    %278 = math.tanh %277 : vector<8x32xf32>
    %cst_179 = arith.constant 1.000000e+00 : f32
    %279 = vector.broadcast %cst_179 : f32 to vector<8x32xf32>
    %280 = arith.subf %279, %272 : vector<8x32xf32>
    %281 = arith.mulf %280, %278 : vector<8x32xf32>
    %282 = arith.mulf %272, %245 : vector<8x32xf32>
    %283 = arith.addf %281, %282 : vector<8x32xf32>
    %c0_180 = arith.constant 0 : index
    %c0_181 = arith.constant 0 : index
    %284 = vector.load %arg18[%c0_180, %c0_181] : memref<8x32xf32, #tpu.memory_space<vmem>>, vector<8x32xf32>
    tpu.vector_store %arg18[%c0_180, %c0_181], %283 {strides = array<i32>} : memref<8x32xf32, #tpu.memory_space<vmem>>, vector<8x32xf32>,
    %285 = arith.index_cast %c5_i32 : i32 to index
    %c0_182 = arith.constant 0 : index
    %c0_183 = arith.constant 0 : index
    %286 = vector.load %arg19[%285, %c0_182, %c0_183] : memref<8x8x32xf32, #tpu.memory_space<vmem>>, vector<1x8x32xf32>
    %287 = vector.shape_cast %286 : vector<1x8x32xf32> to vector<8x32xf32>
    %288 = vector.shape_cast %283 : vector<8x32xf32> to vector<1x8x32xf32>
    tpu.vector_store %arg19[%285, %c0_182, %c0_183], %288 {strides = array<i32>} : memref<8x8x32xf32, #tpu.memory_space<vmem>>, vector<1x8x32xf32>,
    %c6_i32 = arith.constant 6 : i32
    %c0_184 = arith.constant 0 : index
    %c0_185 = arith.constant 0 : index
    %289 = vector.load %arg18[%c0_184, %c0_185] : memref<8x32xf32, #tpu.memory_space<vmem>>, vector<8x32xf32>
    %c0_186 = arith.constant 0 : index
    %c0_187 = arith.constant 0 : index
    %290 = vector.load %arg5[%c0_186, %c0_187] : memref<32x32xf32, #tpu.memory_space<vmem>>, vector<32x32xf32>
    %cst_188 = arith.constant dense<0.000000e+00> : vector<8x32xf32>
    %291 = tpu.matmul %289, %290, %cst_188 {dimension_numbers = #tpu.dot_dimension_numbers<[1], [0], [0], [1], [0, 0, 1, 1], [], []>} : vector<8x32xf32>, vector<32x32xf32>, vector<8x32xf32> -> vector<8x32xf32>
    %c0_189 = arith.constant 0 : index
    %c0_190 = arith.constant 0 : index
    %292 = vector.load %arg6[%c0_189, %c0_190] : memref<32x32xf32, #tpu.memory_space<vmem>>, vector<32x32xf32>
    %cst_191 = arith.constant dense<0.000000e+00> : vector<8x32xf32>
    %293 = tpu.matmul %289, %292, %cst_191 {dimension_numbers = #tpu.dot_dimension_numbers<[1], [0], [0], [1], [0, 0, 1, 1], [], []>} : vector<8x32xf32>, vector<32x32xf32>, vector<8x32xf32> -> vector<8x32xf32>
    %c0_192 = arith.constant 0 : index
    %c0_193 = arith.constant 0 : index
    %294 = vector.load %arg7[%c0_192, %c0_193] : memref<32x32xf32, #tpu.memory_space<vmem>>, vector<32x32xf32>
    %cst_194 = arith.constant dense<0.000000e+00> : vector<8x32xf32>
    %295 = tpu.matmul %289, %294, %cst_194 {dimension_numbers = #tpu.dot_dimension_numbers<[1], [0], [0], [1], [0, 0, 1, 1], [], []>} : vector<8x32xf32>, vector<32x32xf32>, vector<8x32xf32> -> vector<8x32xf32>
    %c0_195 = arith.constant 0 : index
    %c0_196 = arith.constant 0 : index
    %296 = vector.load %arg11[%c0_195, %c0_196] : memref<1x32xf32, #tpu.memory_space<vmem>>, vector<1x32xf32>
    %297 = vector.broadcast %296 : vector<1x32xf32> to vector<8x32xf32>
    %298 = arith.addf %295, %297 : vector<8x32xf32>
    %299 = arith.index_cast %c6_i32 : i32 to index
    %c0_197 = arith.constant 0 : index
    %c0_198 = arith.constant 0 : index
    %300 = vector.load %arg15[%299, %c0_197, %c0_198] : memref<8x8x32xf32, #tpu.memory_space<vmem>>, vector<1x8x32xf32>
    %301 = vector.shape_cast %300 : vector<1x8x32xf32> to vector<8x32xf32>
    %302 = arith.addf %301, %291 : vector<8x32xf32>
    %303 = arith.negf %302 : vector<8x32xf32>
    %304 = math.exp %303 : vector<8x32xf32>
    %cst_199 = arith.constant 1.000000e+00 : f32
    %305 = vector.broadcast %cst_199 : f32 to vector<8x32xf32>
    %306 = arith.addf %305, %304 : vector<8x32xf32>
    %307 = arith.divf %305, %306 : vector<8x32xf32>
    %308 = arith.index_cast %c6_i32 : i32 to index
    %c0_200 = arith.constant 0 : index
    %c0_201 = arith.constant 0 : index
    %309 = vector.load %arg16[%308, %c0_200, %c0_201] : memref<8x8x32xf32, #tpu.memory_space<vmem>>, vector<1x8x32xf32>
    %310 = vector.shape_cast %309 : vector<1x8x32xf32> to vector<8x32xf32>
    %311 = arith.addf %310, %293 : vector<8x32xf32>
    %312 = arith.negf %311 : vector<8x32xf32>
    %313 = math.exp %312 : vector<8x32xf32>
    %cst_202 = arith.constant 1.000000e+00 : f32
    %314 = vector.broadcast %cst_202 : f32 to vector<8x32xf32>
    %315 = arith.addf %314, %313 : vector<8x32xf32>
    %316 = arith.divf %314, %315 : vector<8x32xf32>
    %317 = arith.index_cast %c6_i32 : i32 to index
    %c0_203 = arith.constant 0 : index
    %c0_204 = arith.constant 0 : index
    %318 = vector.load %arg17[%317, %c0_203, %c0_204] : memref<8x8x32xf32, #tpu.memory_space<vmem>>, vector<1x8x32xf32>
    %319 = vector.shape_cast %318 : vector<1x8x32xf32> to vector<8x32xf32>
    %320 = arith.mulf %307, %298 : vector<8x32xf32>
    %321 = arith.addf %319, %320 : vector<8x32xf32>
    %322 = math.tanh %321 : vector<8x32xf32>
    %cst_205 = arith.constant 1.000000e+00 : f32
    %323 = vector.broadcast %cst_205 : f32 to vector<8x32xf32>
    %324 = arith.subf %323, %316 : vector<8x32xf32>
    %325 = arith.mulf %324, %322 : vector<8x32xf32>
    %326 = arith.mulf %316, %289 : vector<8x32xf32>
    %327 = arith.addf %325, %326 : vector<8x32xf32>
    %c0_206 = arith.constant 0 : index
    %c0_207 = arith.constant 0 : index
    %328 = vector.load %arg18[%c0_206, %c0_207] : memref<8x32xf32, #tpu.memory_space<vmem>>, vector<8x32xf32>
    tpu.vector_store %arg18[%c0_206, %c0_207], %327 {strides = array<i32>} : memref<8x32xf32, #tpu.memory_space<vmem>>, vector<8x32xf32>,
    %329 = arith.index_cast %c6_i32 : i32 to index
    %c0_208 = arith.constant 0 : index
    %c0_209 = arith.constant 0 : index
    %330 = vector.load %arg19[%329, %c0_208, %c0_209] : memref<8x8x32xf32, #tpu.memory_space<vmem>>, vector<1x8x32xf32>
    %331 = vector.shape_cast %330 : vector<1x8x32xf32> to vector<8x32xf32>
    %332 = vector.shape_cast %327 : vector<8x32xf32> to vector<1x8x32xf32>
    tpu.vector_store %arg19[%329, %c0_208, %c0_209], %332 {strides = array<i32>} : memref<8x8x32xf32, #tpu.memory_space<vmem>>, vector<1x8x32xf32>,
    %c7_i32 = arith.constant 7 : i32
    %c0_210 = arith.constant 0 : index
    %c0_211 = arith.constant 0 : index
    %333 = vector.load %arg18[%c0_210, %c0_211] : memref<8x32xf32, #tpu.memory_space<vmem>>, vector<8x32xf32>
    %c0_212 = arith.constant 0 : index
    %c0_213 = arith.constant 0 : index
    %334 = vector.load %arg5[%c0_212, %c0_213] : memref<32x32xf32, #tpu.memory_space<vmem>>, vector<32x32xf32>
    %cst_214 = arith.constant dense<0.000000e+00> : vector<8x32xf32>
    %335 = tpu.matmul %333, %334, %cst_214 {dimension_numbers = #tpu.dot_dimension_numbers<[1], [0], [0], [1], [0, 0, 1, 1], [], []>} : vector<8x32xf32>, vector<32x32xf32>, vector<8x32xf32> -> vector<8x32xf32>
    %c0_215 = arith.constant 0 : index
    %c0_216 = arith.constant 0 : index
    %336 = vector.load %arg6[%c0_215, %c0_216] : memref<32x32xf32, #tpu.memory_space<vmem>>, vector<32x32xf32>
    %cst_217 = arith.constant dense<0.000000e+00> : vector<8x32xf32>
    %337 = tpu.matmul %333, %336, %cst_217 {dimension_numbers = #tpu.dot_dimension_numbers<[1], [0], [0], [1], [0, 0, 1, 1], [], []>} : vector<8x32xf32>, vector<32x32xf32>, vector<8x32xf32> -> vector<8x32xf32>
    %c0_218 = arith.constant 0 : index
    %c0_219 = arith.constant 0 : index
    %338 = vector.load %arg7[%c0_218, %c0_219] : memref<32x32xf32, #tpu.memory_space<vmem>>, vector<32x32xf32>
    %cst_220 = arith.constant dense<0.000000e+00> : vector<8x32xf32>
    %339 = tpu.matmul %333, %338, %cst_220 {dimension_numbers = #tpu.dot_dimension_numbers<[1], [0], [0], [1], [0, 0, 1, 1], [], []>} : vector<8x32xf32>, vector<32x32xf32>, vector<8x32xf32> -> vector<8x32xf32>
    %c0_221 = arith.constant 0 : index
    %c0_222 = arith.constant 0 : index
    %340 = vector.load %arg11[%c0_221, %c0_222] : memref<1x32xf32, #tpu.memory_space<vmem>>, vector<1x32xf32>
    %341 = vector.broadcast %340 : vector<1x32xf32> to vector<8x32xf32>
    %342 = arith.addf %339, %341 : vector<8x32xf32>
    %343 = arith.index_cast %c7_i32 : i32 to index
    %c0_223 = arith.constant 0 : index
    %c0_224 = arith.constant 0 : index
    %344 = vector.load %arg15[%343, %c0_223, %c0_224] : memref<8x8x32xf32, #tpu.memory_space<vmem>>, vector<1x8x32xf32>
    %345 = vector.shape_cast %344 : vector<1x8x32xf32> to vector<8x32xf32>
    %346 = arith.addf %345, %335 : vector<8x32xf32>
    %347 = arith.negf %346 : vector<8x32xf32>
    %348 = math.exp %347 : vector<8x32xf32>
    %cst_225 = arith.constant 1.000000e+00 : f32
    %349 = vector.broadcast %cst_225 : f32 to vector<8x32xf32>
    %350 = arith.addf %349, %348 : vector<8x32xf32>
    %351 = arith.divf %349, %350 : vector<8x32xf32>
    %352 = arith.index_cast %c7_i32 : i32 to index
    %c0_226 = arith.constant 0 : index
    %c0_227 = arith.constant 0 : index
    %353 = vector.load %arg16[%352, %c0_226, %c0_227] : memref<8x8x32xf32, #tpu.memory_space<vmem>>, vector<1x8x32xf32>
    %354 = vector.shape_cast %353 : vector<1x8x32xf32> to vector<8x32xf32>
    %355 = arith.addf %354, %337 : vector<8x32xf32>
    %356 = arith.negf %355 : vector<8x32xf32>
    %357 = math.exp %356 : vector<8x32xf32>
    %cst_228 = arith.constant 1.000000e+00 : f32
    %358 = vector.broadcast %cst_228 : f32 to vector<8x32xf32>
    %359 = arith.addf %358, %357 : vector<8x32xf32>
    %360 = arith.divf %358, %359 : vector<8x32xf32>
    %361 = arith.index_cast %c7_i32 : i32 to index
    %c0_229 = arith.constant 0 : index
    %c0_230 = arith.constant 0 : index
    %362 = vector.load %arg17[%361, %c0_229, %c0_230] : memref<8x8x32xf32, #tpu.memory_space<vmem>>, vector<1x8x32xf32>
    %363 = vector.shape_cast %362 : vector<1x8x32xf32> to vector<8x32xf32>
    %364 = arith.mulf %351, %342 : vector<8x32xf32>
    %365 = arith.addf %363, %364 : vector<8x32xf32>
    %366 = math.tanh %365 : vector<8x32xf32>
    %cst_231 = arith.constant 1.000000e+00 : f32
    %367 = vector.broadcast %cst_231 : f32 to vector<8x32xf32>
    %368 = arith.subf %367, %360 : vector<8x32xf32>
    %369 = arith.mulf %368, %366 : vector<8x32xf32>
    %370 = arith.mulf %360, %333 : vector<8x32xf32>
    %371 = arith.addf %369, %370 : vector<8x32xf32>
    %c0_232 = arith.constant 0 : index
    %c0_233 = arith.constant 0 : index
    %372 = vector.load %arg18[%c0_232, %c0_233] : memref<8x32xf32, #tpu.memory_space<vmem>>, vector<8x32xf32>
    tpu.vector_store %arg18[%c0_232, %c0_233], %371 {strides = array<i32>} : memref<8x32xf32, #tpu.memory_space<vmem>>, vector<8x32xf32>,
    %373 = arith.index_cast %c7_i32 : i32 to index
    %c0_234 = arith.constant 0 : index
    %c0_235 = arith.constant 0 : index
    %374 = vector.load %arg19[%373, %c0_234, %c0_235] : memref<8x8x32xf32, #tpu.memory_space<vmem>>, vector<1x8x32xf32>
    %375 = vector.shape_cast %374 : vector<1x8x32xf32> to vector<8x32xf32>
    %376 = vector.shape_cast %371 : vector<8x32xf32> to vector<1x8x32xf32>
    tpu.vector_store %arg19[%373, %c0_234, %c0_235], %376 {strides = array<i32>} : memref<8x8x32xf32, #tpu.memory_space<vmem>>, vector<1x8x32xf32>,
    %c8_i32 = arith.constant 8 : i32
    %c0_236 = arith.constant 0 : index
    %c0_237 = arith.constant 0 : index
    %c0_238 = arith.constant 0 : index
    %377 = vector.load %arg19[%c0_236, %c0_237, %c0_238] : memref<8x8x32xf32, #tpu.memory_space<vmem>>, vector<8x8x32xf32>
    %378 = vector.shape_cast %377 : vector<8x8x32xf32> to vector<64x32xf32>
    %c0_239 = arith.constant 0 : index
    %c0_240 = arith.constant 0 : index
    %379 = vector.load %arg12[%c0_239, %c0_240] : memref<32x32xf32, #tpu.memory_space<vmem>>, vector<32x32xf32>
    %cst_241 = arith.constant dense<0.000000e+00> : vector<64x32xf32>
    %380 = tpu.matmul %378, %379, %cst_241 {dimension_numbers = #tpu.dot_dimension_numbers<[1], [0], [0], [1], [0, 0, 1, 1], [], []>} : vector<64x32xf32>, vector<32x32xf32>, vector<64x32xf32> -> vector<64x32xf32>
    %c0_242 = arith.constant 0 : index
    %c0_243 = arith.constant 0 : index
    %381 = vector.load %arg13[%c0_242, %c0_243] : memref<1x32xf32, #tpu.memory_space<vmem>>, vector<1x32xf32>
    %382 = vector.broadcast %381 : vector<1x32xf32> to vector<64x32xf32>
    %383 = arith.addf %380, %382 : vector<64x32xf32>
    %384 = vector.shape_cast %383 : vector<64x32xf32> to vector<8x8x32xf32>
    %c0_244 = arith.constant 0 : index
    %c0_245 = arith.constant 0 : index
    %c0_246 = arith.constant 0 : index
    %385 = vector.load %arg14[%c0_244, %c0_245, %c0_246] : memref<8x8x32xf32, #tpu.memory_space<vmem>>, vector<8x8x32xf32>
    tpu.vector_store %arg14[%c0_244, %c0_245, %c0_246], %384 {strides = array<i32>} : memref<8x8x32xf32, #tpu.memory_space<vmem>>, vector<8x8x32xf32>,
    return
  }
  func.func @transform_0(%arg0: i32) -> (i32, i32, i32) {
    %c0_i32 = arith.constant 0 : i32
    %c0_i32_0 = arith.constant 0 : i32
    %c0_i32_1 = arith.constant 0 : i32
    %c0_i32_2 = arith.constant 0 : i32
    return %c0_i32, %c0_i32_0, %c0_i32_1 : i32, i32, i32
  }
  func.func @transform_1(%arg0: i32) -> (i32, i32) {
    %c0_i32 = arith.constant 0 : i32
    %c0_i32_0 = arith.constant 0 : i32
    %c0_i32_1 = arith.constant 0 : i32
    return %c0_i32, %c0_i32_0 : i32, i32
  }
  func.func @transform_2(%arg0: i32) -> (i32, i32) {
    %c0_i32 = arith.constant 0 : i32
    %c0_i32_0 = arith.constant 0 : i32
    %c0_i32_1 = arith.constant 0 : i32
    return %c0_i32, %c0_i32_0 : i32, i32
  }
  func.func @transform_3(%arg0: i32) -> (i32, i32) {
    %c0_i32 = arith.constant 0 : i32
    %c0_i32_0 = arith.constant 0 : i32
    %c0_i32_1 = arith.constant 0 : i32
    return %c0_i32, %c0_i32_0 : i32, i32
  }
  func.func @transform_4(%arg0: i32) -> (i32, i32) {
    %c0_i32 = arith.constant 0 : i32
    %c0_i32_0 = arith.constant 0 : i32
    %c0_i32_1 = arith.constant 0 : i32
    return %c0_i32, %c0_i32_0 : i32, i32
  }
  func.func @transform_5(%arg0: i32) -> (i32, i32) {
    %c0_i32 = arith.constant 0 : i32
    %c0_i32_0 = arith.constant 0 : i32
    %c0_i32_1 = arith.constant 0 : i32
    return %c0_i32, %c0_i32_0 : i32, i32
  }
  func.func @transform_6(%arg0: i32) -> (i32, i32) {
    %c0_i32 = arith.constant 0 : i32
    %c0_i32_0 = arith.constant 0 : i32
    %c0_i32_1 = arith.constant 0 : i32
    return %c0_i32, %c0_i32_0 : i32, i32
  }
  func.func @transform_7(%arg0: i32) -> (i32, i32) {
    %c0_i32 = arith.constant 0 : i32
    %c0_i32_0 = arith.constant 0 : i32
    %c0_i32_1 = arith.constant 0 : i32
    return %c0_i32, %c0_i32_0 : i32, i32
  }
  func.func @transform_8(%arg0: i32) -> (i32, i32) {
    %c0_i32 = arith.constant 0 : i32
    %c0_i32_0 = arith.constant 0 : i32
    %c0_i32_1 = arith.constant 0 : i32
    return %c0_i32, %c0_i32_0 : i32, i32
  }
  func.func @transform_9(%arg0: i32) -> (i32, i32) {
    %c0_i32 = arith.constant 0 : i32
    %c0_i32_0 = arith.constant 0 : i32
    %c0_i32_1 = arith.constant 0 : i32
    return %c0_i32, %c0_i32_0 : i32, i32
  }
  func.func @transform_10(%arg0: i32) -> (i32, i32) {
    %c0_i32 = arith.constant 0 : i32
    %c0_i32_0 = arith.constant 0 : i32
    %c0_i32_1 = arith.constant 0 : i32
    return %c0_i32, %c0_i32_0 : i32, i32
  }
  func.func @transform_11(%arg0: i32) -> (i32, i32) {
    %c0_i32 = arith.constant 0 : i32
    %c0_i32_0 = arith.constant 0 : i32
    %c0_i32_1 = arith.constant 0 : i32
    return %c0_i32, %c0_i32_0 : i32, i32
  }
  func.func @transform_12(%arg0: i32) -> (i32, i32) {
    %c0_i32 = arith.constant 0 : i32
    %c0_i32_0 = arith.constant 0 : i32
    %c0_i32_1 = arith.constant 0 : i32
    return %c0_i32, %c0_i32_0 : i32, i32
  }
  func.func @transform_13(%arg0: i32) -> (i32, i32, i32) {
    %c0_i32 = arith.constant 0 : i32
    %c0_i32_0 = arith.constant 0 : i32
    %c0_i32_1 = arith.constant 0 : i32
    %c0_i32_2 = arith.constant 0 : i32
    return %c0_i32, %c0_i32_0, %c0_i32_1 : i32, i32, i32
  }
}

</mosaic_0001>

<llo_original>
// kernel: tpu_custom_call.1
$region0: #{tpu_custom_call.1}
  #allocation0 [shape = 'u32[]', space=smem, size = 0x4, offset = 0x4, fixed_abs, tag = 'smem constant byte address 0x4 - core index']
  #allocation1 [shape = 'u32[144,128]{1,0:T(1,128)}', space=vmem, size = 0x12000, scoped, tag = 'internal scratch']
  #allocation2 [shape = 'f32[8,8,32]{2,1,0:T(8,128)}', space=vmem, size = 0x8000, scoped, tag = 'scratch operand']
  #allocation3 [shape = 'f32[8,8,32]{2,1,0:T(8,128)}', space=vmem, size = 0x8000, scoped, tag = 'scratch operand']
  #allocation4 [shape = 'f32[8,8,32]{2,1,0:T(8,128)}', space=vmem, size = 0x8000, scoped, tag = 'scratch operand']
  #allocation5 [shape = 'f32[8,32]{1,0:T(8,128)}', space=vmem, size = 0x1000, scoped, tag = 'scratch operand']
  #allocation6 [shape = 'f32[8,8,32]{2,1,0:T(8,128)}', space=vmem, size = 0x8000, scoped, tag = 'scratch operand']
  %s0 = inlined_call_operand.hbm [shape: f32[8,8,8], index: 0, kind: input, shape index: {}]
  %s1 = inlined_call_operand.hbm [shape: f32[8,32], index: 1, kind: input, shape index: {}]
  %s2 = inlined_call_operand.hbm [shape: f32[8,32], index: 2, kind: input, shape index: {}]
  %s3 = inlined_call_operand.vmem [shape: f32[8,32], index: 3, kind: input, shape index: {}]
  %s4 = inlined_call_operand.hbm [shape: f32[32,32], index: 4, kind: input, shape index: {}]
  %s5 = inlined_call_operand.hbm [shape: f32[32,32], index: 5, kind: input, shape index: {}]
  %s6 = inlined_call_operand.hbm [shape: f32[32,32], index: 6, kind: input, shape index: {}]
  %s7 = inlined_call_operand.vmem [shape: f32[1,32], index: 7, kind: input, shape index: {}]
  %s8 = inlined_call_operand.hbm [shape: f32[1,32], index: 8, kind: input, shape index: {}]
  %s9 = inlined_call_operand.hbm [shape: f32[1,32], index: 9, kind: input, shape index: {}]
  %s10 = inlined_call_operand.hbm [shape: f32[1,32], index: 10, kind: input, shape index: {}]
  %s11 = inlined_call_operand.vmem [shape: f32[32,32], index: 11, kind: input, shape index: {}]
  %s12 = inlined_call_operand.vmem [shape: f32[1,32], index: 12, kind: input, shape index: {}]
  %s13 = inlined_call_operand.hbm [shape: f32[8,8,32], index: 13, kind: output, shape index: {}]
  %s14 = sld [smem:[#allocation0]]
  $region98: #{tpu_custom_call.1} parent=0
    _
  %s16 = ssub.s32 1, %s14
  %s17 = scalar_select 0, %s16, %s14
  $region1: #{tpu_custom_call.1} parent=0
    #allocation7 [shape = 'u8[32768]{0}', space=vmem, size = 0x8000, scoped, tag = 'input window, operand 0, single buffered']
    #allocation8 [shape = 's32[1]{0}', space=sflag, size = 0x4, scoped, tag = 'scoped memory for tpu_custom_call.1']
    #allocation9 [shape = 's32[1]{0}', space=sflag, size = 0x4, scoped, tag = 'scoped memory for tpu_custom_call.1']
    #allocation10 [shape = 'u8[4096]{0}', space=vmem, size = 0x1000, scoped, tag = 'input window, operand 1, single buffered']
    #allocation11 [shape = 's32[1]{0}', space=sflag, size = 0x4, scoped, tag = 'scoped memory for tpu_custom_call.1']
    #allocation12 [shape = 'u8[4096]{0}', space=vmem, size = 0x1000, scoped, tag = 'input window, operand 2, single buffered']
    #allocation13 [shape = 'u8[16384]{0}', space=vmem, size = 0x4000, scoped, tag = 'input window, operand 4, single buffered']
    #allocation14 [shape = 's32[1]{0}', space=sflag, size = 0x4, scoped, tag = 'scoped memory for tpu_custom_call.1']
    #allocation15 [shape = 'u8[16384]{0}', space=vmem, size = 0x4000, scoped, tag = 'input window, operand 5, single buffered']
    #allocation16 [shape = 'u8[16384]{0}', space=vmem, size = 0x4000, scoped, tag = 'input window, operand 6, single buffered']
    #allocation17 [shape = 's32[1]{0}', space=sflag, size = 0x4, scoped, tag = 'scoped memory for tpu_custom_call.1']
    #allocation18 [shape = 'u8[512]{0}', space=vmem, size = 0x400, scoped, tag = 'input window, operand 8, single buffered']
    #allocation19 [shape = 'u8[512]{0}', space=vmem, size = 0x400, scoped, tag = 'input window, operand 9, single buffered']
    #allocation20 [shape = 's32[1]{0}', space=sflag, size = 0x4, scoped, tag = 'scoped memory for tpu_custom_call.1']
    #allocation21 [shape = 'u8[512]{0}', space=vmem, size = 0x400, scoped, tag = 'input window, operand 10, single buffered']
    #allocation22 [shape = 'u8[32768]{0}', space=vmem, size = 0x8000, scoped, tag = 'output window, operand 0, single buffered']
    %18 = vsyncpa [#allocation8], 0
    %19 = vsyncpa [#allocation11], 0
    %20 = vsyncpa [#allocation14], 0
    %21 = vsyncpa [#allocation17], 0
    %22 = vsyncpa [#allocation20], 0
    %23 = vsyncpa [#allocation9], 0
    // Predicated region
    $region2: #{tpu_custom_call.1} parent=1 // pred_check
      _
    $region3: #{tpu_custom_call.1} parent=1 // pred_check_branch
      %25 = sbr.rel (0) target = $region5
    $region4: #{tpu_custom_call.1} parent=1 // pred_region
      %s27 = ssub.s32 1024, 1024
      %28 = vsyncadd [#allocation8], %s27
      %s29 = sshll.u32 [#allocation7], 4
      %s30 = int_to_ptr.vmem [resolvable:$true] %s29
      %35 = dma.hbm_to_vmem [thread:$0]  %s0, 1024, %s30, [#allocation8], 128, 128, 8
    $region5: #{tpu_custom_call.1} parent=1 // pred_fallthru
      _
    // Predicated region
    $region6: #{tpu_custom_call.1} parent=1 // pred_check
      _
    $region7: #{tpu_custom_call.1} parent=1 // pred_check_branch
      %37 = sbr.rel (0) target = $region9
    $region8: #{tpu_custom_call.1} parent=1 // pred_region
      %s39 = ssub.s32 128, 128
      %40 = vsyncadd [#allocation11], %s39
      %s42 = sshll.u32 [#allocation10], 4
      %s43 = int_to_ptr.vmem [resolvable:$true] %s42
      %45 = dma.hbm_to_vmem [thread:$0]  %s1, 128, %s43, [#allocation11]
    $region9: #{tpu_custom_call.1} parent=1 // pred_fallthru
      _
    // Predicated region
    $region10: #{tpu_custom_call.1} parent=1 // pred_check
      _
    $region11: #{tpu_custom_call.1} parent=1 // pred_check_branch
      %47 = sbr.rel (0) target = $region13
    $region12: #{tpu_custom_call.1} parent=1 // pred_region
      %s49 = ssub.s32 128, 128
      %50 = vsyncadd [#allocation11], %s49
      %s52 = sshll.u32 [#allocation12], 4
      %s53 = int_to_ptr.vmem [resolvable:$true] %s52
      %55 = dma.hbm_to_vmem [thread:$0]  %s2, 128, %s53, [#allocation11]
    $region13: #{tpu_custom_call.1} parent=1 // pred_fallthru
      _
    // Predicated region
    $region14: #{tpu_custom_call.1} parent=1 // pred_check
      _
    $region15: #{tpu_custom_call.1} parent=1 // pred_check_branch
      %57 = sbr.rel (0) target = $region17
    $region16: #{tpu_custom_call.1} parent=1 // pred_region
      _
    $region17: #{tpu_custom_call.1} parent=1 // pred_fallthru
      _
    // Predicated region
    $region18: #{tpu_custom_call.1} parent=1 // pred_check
      _
    $region19: #{tpu_custom_call.1} parent=1 // pred_check_branch
      %59 = sbr.rel (0) target = $region21
    $region20: #{tpu_custom_call.1} parent=1 // pred_region
      %s61 = ssub.s32 512, 512
      %62 = vsyncadd [#allocation14], %s61
      %s63 = sshll.u32 [#allocation13], 4
      %s64 = int_to_ptr.vmem [resolvable:$true] %s63
      %69 = dma.hbm_to_vmem [thread:$0]  %s4, 512, %s64, [#allocation14], 128, 128, 8
    $region21: #{tpu_custom_call.1} parent=1 // pred_fallthru
      _
    // Predicated region
    $region22: #{tpu_custom_call.1} parent=1 // pred_check
      _
    $region23: #{tpu_custom_call.1} parent=1 // pred_check_branch
      %71 = sbr.rel (0) target = $region25
    $region24: #{tpu_custom_call.1} parent=1 // pred_region
      %s73 = ssub.s32 512, 512
      %74 = vsyncadd [#allocation14], %s73
      %s75 = sshll.u32 [#allocation15], 4
      %s76 = int_to_ptr.vmem [resolvable:$true] %s75
      %81 = dma.hbm_to_vmem [thread:$0]  %s5, 512, %s76, [#allocation14], 128, 128, 8
    $region25: #{tpu_custom_call.1} parent=1 // pred_fallthru
      _
    // Predicated region
    $region26: #{tpu_custom_call.1} parent=1 // pred_check
      _
    $region27: #{tpu_custom_call.1} parent=1 // pred_check_branch
      %83 = sbr.rel (0) target = $region29
    $region28: #{tpu_custom_call.1} parent=1 // pred_region
      %s85 = ssub.s32 512, 512
      %86 = vsyncadd [#allocation17], %s85
      %s87 = sshll.u32 [#allocation16], 4
      %s88 = int_to_ptr.vmem [resolvable:$true] %s87
      %93 = dma.hbm_to_vmem [thread:$0]  %s6, 512, %s88, [#allocation17], 128, 128, 8
    $region29: #{tpu_custom_call.1} parent=1 // pred_fallthru
      _
    // Predicated region
    $region30: #{tpu_custom_call.1} parent=1 // pred_check
      _
    $region31: #{tpu_custom_call.1} parent=1 // pred_check_branch
      %95 = sbr.rel (0) target = $region33
    $region32: #{tpu_custom_call.1} parent=1 // pred_region
      _
    $region33: #{tpu_custom_call.1} parent=1 // pred_fallthru
      _
    // Predicated region
    $region34: #{tpu_custom_call.1} parent=1 // pred_check
      _
    $region35: #{tpu_custom_call.1} parent=1 // pred_check_branch
      %97 = sbr.rel (0) target = $region37
    $region36: #{tpu_custom_call.1} parent=1 // pred_region
      %s99 = ssub.s32 16, 16
      %100 = vsyncadd [#allocation17], %s99
      %s102 = sshll.u32 [#allocation18], 4
      %s103 = int_to_ptr.vmem [resolvable:$true] %s102
      %105 = dma.hbm_to_vmem [thread:$0]  %s8, 16, %s103, [#allocation17]
    $region37: #{tpu_custom_call.1} parent=1 // pred_fallthru
      _
    // Predicated region
    $region38: #{tpu_custom_call.1} parent=1 // pred_check
      _
    $region39: #{tpu_custom_call.1} parent=1 // pred_check_branch
      %107 = sbr.rel (0) target = $region41
    $region40: #{tpu_custom_call.1} parent=1 // pred_region
      %s109 = ssub.s32 16, 16
      %110 = vsyncadd [#allocation20], %s109
      %s112 = sshll.u32 [#allocation19], 4
      %s113 = int_to_ptr.vmem [resolvable:$true] %s112
      %115 = dma.hbm_to_vmem [thread:$0]  %s9, 16, %s113, [#allocation20]
    $region41: #{tpu_custom_call.1} parent=1 // pred_fallthru
      _
    // Predicated region
    $region42: #{tpu_custom_call.1} parent=1 // pred_check
      _
    $region43: #{tpu_custom_call.1} parent=1 // pred_check_branch
      %117 = sbr.rel (0) target = $region45
    $region44: #{tpu_custom_call.1} parent=1 // pred_region
      %s119 = ssub.s32 16, 16
      %120 = vsyncadd [#allocation20], %s119
      %s122 = sshll.u32 [#allocation21], 4
      %s123 = int_to_ptr.vmem [resolvable:$true] %s122
      %125 = dma.hbm_to_vmem [thread:$0]  %s10, 16, %s123, [#allocation20]
    $region45: #{tpu_custom_call.1} parent=1 // pred_fallthru
      _
    // Predicated region
    $region46: #{tpu_custom_call.1} parent=1 // pred_check
      _
    $region47: #{tpu_custom_call.1} parent=1 // pred_check_branch
      %127 = sbr.rel (0) target = $region49
    $region48: #{tpu_custom_call.1} parent=1 // pred_region
      _
    $region49: #{tpu_custom_call.1} parent=1 // pred_fallthru
      _
    // Predicated region
    $region50: #{tpu_custom_call.1} parent=1 // pred_check
      _
    $region51: #{tpu_custom_call.1} parent=1 // pred_check_branch
      %129 = sbr.rel (0) target = $region53
    $region52: #{tpu_custom_call.1} parent=1 // pred_region
      _
    $region53: #{tpu_custom_call.1} parent=1 // pred_fallthru
      _
    // Predicated region
    $region54: #{tpu_custom_call.1} parent=1 // pred_check
      _
    $region55: #{tpu_custom_call.1} parent=1 // pred_check_branch
      %131 = sbr.rel (0) target = $region57
    $region56: #{tpu_custom_call.1} parent=1 // pred_region
      %132 = dma.done [#allocation8], 1024
    $region57: #{tpu_custom_call.1} parent=1 // pred_fallthru
      _
    // Predicated region
    $region58: #{tpu_custom_call.1} parent=1 // pred_check
      _
    $region59: #{tpu_custom_call.1} parent=1 // pred_check_branch
      %134 = sbr.rel (0) target = $region61
    $region60: #{tpu_custom_call.1} parent=1 // pred_region
      %135 = dma.done [#allocation11], 128
    $region61: #{tpu_custom_call.1} parent=1 // pred_fallthru
      _
    // Predicated region
    $region62: #{tpu_custom_call.1} parent=1 // pred_check
      _
    $region63: #{tpu_custom_call.1} parent=1 // pred_check_branch
      %137 = sbr.rel (0) target = $region65
    $region64: #{tpu_custom_call.1} parent=1 // pred_region
      %138 = dma.done [#allocation11], 128
    $region65: #{tpu_custom_call.1} parent=1 // pred_fallthru
      _
    // Predicated region
    $region66: #{tpu_custom_call.1} parent=1 // pred_check
      _
    $region67: #{tpu_custom_call.1} parent=1 // pred_check_branch
      %140 = sbr.rel (0) target = $region69
    $region68: #{tpu_custom_call.1} parent=1 // pred_region
      %141 = dma.done [#allocation14], 512
    $region69: #{tpu_custom_call.1} parent=1 // pred_fallthru
      _
    // Predicated region
    $region70: #{tpu_custom_call.1} parent=1 // pred_check
      _
    $region71: #{tpu_custom_call.1} parent=1 // pred_check_branch
      %143 = sbr.rel (0) target = $region73
    $region72: #{tpu_custom_call.1} parent=1 // pred_region
      %144 = dma.done [#allocation14], 512
    $region73: #{tpu_custom_call.1} parent=1 // pred_fallthru
      _
    // Predicated region
    $region74: #{tpu_custom_call.1} parent=1 // pred_check
      _
    $region75: #{tpu_custom_call.1} parent=1 // pred_check_branch
      %146 = sbr.rel (0) target = $region77
    $region76: #{tpu_custom_call.1} parent=1 // pred_region
      %147 = dma.done [#allocation17], 512
    $region77: #{tpu_custom_call.1} parent=1 // pred_fallthru
      _
    // Predicated region
    $region78: #{tpu_custom_call.1} parent=1 // pred_check
      _
    $region79: #{tpu_custom_call.1} parent=1 // pred_check_branch
      %149 = sbr.rel (0) target = $region81
    $region80: #{tpu_custom_call.1} parent=1 // pred_region
      %150 = dma.done [#allocation17], 16
    $region81: #{tpu_custom_call.1} parent=1 // pred_fallthru
      _
    // Predicated region
    $region82: #{tpu_custom_call.1} parent=1 // pred_check
      _
    $region83: #{tpu_custom_call.1} parent=1 // pred_check_branch
      %152 = sbr.rel (0) target = $region85
    $region84: #{tpu_custom_call.1} parent=1 // pred_region
      %153 = dma.done [#allocation20], 16
    $region85: #{tpu_custom_call.1} parent=1 // pred_fallthru
      _
    // Predicated region
    $region86: #{tpu_custom_call.1} parent=1 // pred_check
      _
    $region87: #{tpu_custom_call.1} parent=1 // pred_check_branch
      %155 = sbr.rel (0) target = $region89
    $region88: #{tpu_custom_call.1} parent=1 // pred_region
      %156 = dma.done [#allocation20], 16
    $region89: #{tpu_custom_call.1} parent=1 // pred_fallthru
      _
    %v157 = vld [vmem:[#allocation7] sm:$0xff]
    %v158 = vld [vmem:[#allocation7 + $0x8] sm:$0xff]
    %v159 = vld [vmem:[#allocation7 + $0x10] sm:$0xff]
    %v160 = vld [vmem:[#allocation7 + $0x18] sm:$0xff]
    %v161 = vld [vmem:[#allocation7 + $0x20] sm:$0xff]
    %v162 = vld [vmem:[#allocation7 + $0x28] sm:$0xff]
    %v163 = vld [vmem:[#allocation7 + $0x30] sm:$0xff]
    %v164 = vld [vmem:[#allocation7 + $0x38] sm:$0xff]
    %v165 = vld [vmem:[#allocation10] sm:$0xff]
    %v166 = vld [vmem:[%s7] sm:$0x1]
    %v168 = vlaneseq
    %v169 = vshrl.u32 %v168, 7
    %v170 = vsub.s32 0, %v169
    %v171 = vrot.slane %v166, %v170
    %vm173 = vcmask 64512
    %v175 = vsel %vm173, %v157, 0
    %v178 = vsel %vm173, %v158, 0
    %v181 = vsel %vm173, %v159, 0
    %v184 = vsel %vm173, %v160, 0
    %v187 = vsel %vm173, %v161, 0
    %v190 = vsel %vm173, %v162, 0
    %v193 = vsel %vm173, %v163, 0
    %v196 = vsel %vm173, %v164, 0
    %198 = vmatprep.subr.mxu0 0.0
    %199 = vmatpush1.msra.mxu0 %v165
    %200 = vmatprep.subr.mxu0 0.0
    %201 = vmatpush1.msra.mxu0 0.0
    %202 = vmatprep.subr.mxu0 0.0
    %203 = vmatpush1.msra.mxu0 0.0
    %204 = vmatprep.subr.mxu0 0.0
    %205 = vmatpush1.msra.mxu0 0.0
    %206 = vmatprep.subr.mxu0 0.0
    %207 = vmatpush1.msra.mxu0 0.0
    %208 = vmatprep.subr.mxu0 0.0
    %209 = vmatpush1.msra.mxu0 0.0
    %210 = vmatprep.subr.mxu0 0.0
    %211 = vmatpush1.msra.mxu0 0.0
    %212 = vmatprep.subr.mxu0 0.0
    %213 = vmatpush1.msra.mxu0 0.0
    %214 = vmatprep.subr.mxu0 0.0
    %215 = vmatpush1.msra.mxu0 0.0
    %216 = vmatprep.subr.mxu0 0.0
    %217 = vmatpush1.msra.mxu0 0.0
    %218 = vmatprep.subr.mxu0 0.0
    %219 = vmatpush1.msra.mxu0 0.0
    %220 = vmatprep.subr.mxu0 0.0
    %221 = vmatpush1.msra.mxu0 0.0
    %222 = vmatprep.subr.mxu0 0.0
    %223 = vmatpush1.msra.mxu0 0.0
    %224 = vmatprep.subr.mxu0 0.0
    %225 = vmatpush1.msra.mxu0 0.0
    %226 = vmatprep.subr.mxu0 0.0
    %227 = vmatpush1.msra.mxu0 0.0
    %228 = vmatprep.subr.mxu0 0.0
    %229 = vmatpush1.msra.mxu0 0.0
    %230 = vmatprep.subr.mxu0 0.0
    %231 = vmatpush1.msra.mxu0 0.0
    %232 = vmatprep.subr.mxu0 0.0
    %233 = vmatpush1.msra.mxu0 0.0
    %234 = vmatprep.subr.mxu0 0.0
    %235 = vmatpush1.msra.mxu0 0.0
    %236 = vmatprep.subr.mxu0 0.0
    %237 = vmatpush1.msra.mxu0 0.0
    %238 = vmatprep.subr.mxu0 0.0
    %239 = vmatpush1.msra.mxu0 0.0
    %240 = vmatprep.subr.mxu0 0.0
    %241 = vmatpush1.msra.mxu0 0.0
    %242 = vmatprep.subr.mxu0 0.0
    %243 = vmatpush1.msra.mxu0 0.0
    %244 = vmatprep.subr.mxu0 0.0
    %245 = vmatpush1.msra.mxu0 0.0
    %246 = vmatprep.subr.mxu0 0.0
    %247 = vmatpush1.msra.mxu0 0.0
    %248 = vmatprep.subr.mxu0 0.0
    %249 = vmatpush1.msra.mxu0 0.0
    %250 = vmatprep.subr.mxu0 0.0
    %251 = vmatpush1.msra.mxu0 0.0
    %252 = vmatprep.subr.mxu0 0.0
    %253 = vmatpush1.msra.mxu0 0.0
    %254 = vmatprep.subr.mxu0 0.0
    %255 = vmatpush1.msra.mxu0 0.0
    %256 = vmatprep.subr.mxu0 0.0
    %257 = vmatpush1.msra.mxu0 0.0
    %258 = vmatprep.subr.mxu0 0.0
    %259 = vmatpush1.msra.mxu0 0.0
    %260 = vmatprep.subr.mxu0 0.0
    %261 = vmatpush1.msra.mxu0 0.0
    %262 = vmatprep.mubr.f32.mxu0 0.0
    %263 = vmatmul.mubr.f32.gmra.mrb[0].mxu0 %v175
    %v264 = vpop.f32.mrb[0].mxu0
    %v265 = vadd.f32 %v171, %v264
    %v266 = vpop.f32.mrb[0].mxu0
    %267 = vmatprep.mubr.f32.mxu0 0.0
    %268 = vmatmul.mubr.f32.gmra.mrb[0].mxu0 %v178
    %v269 = vpop.f32.mrb[0].mxu0
    %v270 = vadd.f32 %v171, %v269
    %v271 = vpop.f32.mrb[0].mxu0
    %272 = vmatprep.mubr.f32.mxu0 0.0
    %273 = vmatmul.mubr.f32.gmra.mrb[0].mxu0 %v181
    %v274 = vpop.f32.mrb[0].mxu0
    %v275 = vadd.f32 %v171, %v274
    %v276 = vpop.f32.mrb[0].mxu0
    %277 = vmatprep.mubr.f32.mxu0 0.0
    %278 = vmatmul.mubr.f32.gmra.mrb[0].mxu0 %v184
    %v279 = vpop.f32.mrb[0].mxu0
    %v280 = vadd.f32 %v171, %v279
    %v281 = vpop.f32.mrb[0].mxu0
    %282 = vmatprep.mubr.f32.mxu0 0.0
    %283 = vmatmul.mubr.f32.gmra.mrb[0].mxu0 %v187
    %v284 = vpop.f32.mrb[0].mxu0
    %v285 = vadd.f32 %v171, %v284
    %v286 = vpop.f32.mrb[0].mxu0
    %287 = vmatprep.mubr.f32.mxu0 0.0
    %288 = vmatmul.mubr.f32.gmra.mrb[0].mxu0 %v190
    %v289 = vpop.f32.mrb[0].mxu0
    %v290 = vadd.f32 %v171, %v289
    %v291 = vpop.f32.mrb[0].mxu0
    %292 = vmatprep.mubr.f32.mxu0 0.0
    %293 = vmatmul.mubr.f32.gmra.mrb[0].mxu0 %v193
    %v294 = vpop.f32.mrb[0].mxu0
    %v295 = vadd.f32 %v171, %v294
    %v296 = vpop.f32.mrb[0].mxu0
    %297 = vmatprep.mubr.f32.mxu0 0.0
    %298 = vmatmul.mubr.f32.gmra.mrb[0].mxu0 %v196
    %v299 = vpop.f32.mrb[0].mxu0
    %v300 = vadd.f32 %v171, %v299
    %v301 = vpop.f32.mrb[0].mxu0
    %302 = vdwg.mxu0
    %vm303 = vcmask 261120
    %304 = vst.msk [vmem:[#allocation2] sm:$0xff] %vm303, %v265
    %305 = vst.msk [vmem:[#allocation2 + $0x8] sm:$0xff] %vm303, %v270
    %306 = vst.msk [vmem:[#allocation2 + $0x10] sm:$0xff] %vm303, %v275
    %307 = vst.msk [vmem:[#allocation2 + $0x18] sm:$0xff] %vm303, %v280
    %308 = vst.msk [vmem:[#allocation2 + $0x20] sm:$0xff] %vm303, %v285
    %309 = vst.msk [vmem:[#allocation2 + $0x28] sm:$0xff] %vm303, %v290
    %310 = vst.msk [vmem:[#allocation2 + $0x30] sm:$0xff] %vm303, %v295
    %311 = vst.msk [vmem:[#allocation2 + $0x38] sm:$0xff] %vm303, %v300
    %v312 = vld [vmem:[#allocation12] sm:$0xff]
    %v313 = vld [vmem:[#allocation18] sm:$0x1]
    %v315 = vlaneseq
    %v316 = vshrl.u32 %v315, 7
    %v317 = vsub.s32 0, %v316
    %v318 = vrot.slane %v313, %v317
    %320 = vmatprep.subr.mxu0 0.0
    %321 = vmatpush1.msra.mxu0 %v312
    %322 = vmatprep.subr.mxu0 0.0
    %323 = vmatpush1.msra.mxu0 0.0
    %324 = vmatprep.subr.mxu0 0.0
    %325 = vmatpush1.msra.mxu0 0.0
    %326 = vmatprep.subr.mxu0 0.0
    %327 = vmatpush1.msra.mxu0 0.0
    %328 = vmatprep.subr.mxu0 0.0
    %329 = vmatpush1.msra.mxu0 0.0
    %330 = vmatprep.subr.mxu0 0.0
    %331 = vmatpush1.msra.mxu0 0.0
    %332 = vmatprep.subr.mxu0 0.0
    %333 = vmatpush1.msra.mxu0 0.0
    %334 = vmatprep.subr.mxu0 0.0
    %335 = vmatpush1.msra.mxu0 0.0
    %336 = vmatprep.subr.mxu0 0.0
    %337 = vmatpush1.msra.mxu0 0.0
    %338 = vmatprep.subr.mxu0 0.0
    %339 = vmatpush1.msra.mxu0 0.0
    %340 = vmatprep.subr.mxu0 0.0
    %341 = vmatpush1.msra.mxu0 0.0
    %342 = vmatprep.subr.mxu0 0.0
    %343 = vmatpush1.msra.mxu0 0.0
    %344 = vmatprep.subr.mxu0 0.0
    %345 = vmatpush1.msra.mxu0 0.0
    %346 = vmatprep.subr.mxu0 0.0
    %347 = vmatpush1.msra.mxu0 0.0
    %348 = vmatprep.subr.mxu0 0.0
    %349 = vmatpush1.msra.mxu0 0.0
    %350 = vmatprep.subr.mxu0 0.0
    %351 = vmatpush1.msra.mxu0 0.0
    %352 = vmatprep.subr.mxu0 0.0
    %353 = vmatpush1.msra.mxu0 0.0
    %354 = vmatprep.subr.mxu0 0.0
    %355 = vmatpush1.msra.mxu0 0.0
    %356 = vmatprep.subr.mxu0 0.0
    %357 = vmatpush1.msra.mxu0 0.0
    %358 = vmatprep.subr.mxu0 0.0
    %359 = vmatpush1.msra.mxu0 0.0
    %360 = vmatprep.subr.mxu0 0.0
    %361 = vmatpush1.msra.mxu0 0.0
    %362 = vmatprep.subr.mxu0 0.0
    %363 = vmatpush1.msra.mxu0 0.0
    %364 = vmatprep.subr.mxu0 0.0
    %365 = vmatpush1.msra.mxu0 0.0
    %366 = vmatprep.subr.mxu0 0.0
    %367 = vmatpush1.msra.mxu0 0.0
    %368 = vmatprep.subr.mxu0 0.0
    %369 = vmatpush1.msra.mxu0 0.0
    %370 = vmatprep.subr.mxu0 0.0
    %371 = vmatpush1.msra.mxu0 0.0
    %372 = vmatprep.subr.mxu0 0.0
    %373 = vmatpush1.msra.mxu0 0.0
    %374 = vmatprep.subr.mxu0 0.0
    %375 = vmatpush1.msra.mxu0 0.0
    %376 = vmatprep.subr.mxu0 0.0
    %377 = vmatpush1.msra.mxu0 0.0
    %378 = vmatprep.subr.mxu0 0.0
    %379 = vmatpush1.msra.mxu0 0.0
    %380 = vmatprep.subr.mxu0 0.0
    %381 = vmatpush1.msra.mxu0 0.0
    %382 = vmatprep.subr.mxu0 0.0
    %383 = vmatpush1.msra.mxu0 0.0
    %384 = vmatprep.mubr.f32.mxu0 0.0
    %385 = vmatmul.mubr.f32.gmra.mrb[0].mxu0 %v175
    %v386 = vpop.f32.mrb[0].mxu0
    %v387 = vadd.f32 %v318, %v386
    %v388 = vpop.f32.mrb[0].mxu0
    %389 = vmatprep.mubr.f32.mxu0 0.0
    %390 = vmatmul.mubr.f32.gmra.mrb[0].mxu0 %v178
    %v391 = vpop.f32.mrb[0].mxu0
    %v392 = vadd.f32 %v318, %v391
    %v393 = vpop.f32.mrb[0].mxu0
    %394 = vmatprep.mubr.f32.mxu0 0.0
    %395 = vmatmul.mubr.f32.gmra.mrb[0].mxu0 %v181
    %v396 = vpop.f32.mrb[0].mxu0
    %v397 = vadd.f32 %v318, %v396
    %v398 = vpop.f32.mrb[0].mxu0
    %399 = vmatprep.mubr.f32.mxu0 0.0
    %400 = vmatmul.mubr.f32.gmra.mrb[0].mxu0 %v184
    %v401 = vpop.f32.mrb[0].mxu0
    %v402 = vadd.f32 %v318, %v401
    %v403 = vpop.f32.mrb[0].mxu0
    %404 = vmatprep.mubr.f32.mxu0 0.0
    %405 = vmatmul.mubr.f32.gmra.mrb[0].mxu0 %v187
    %v406 = vpop.f32.mrb[0].mxu0
    %v407 = vadd.f32 %v318, %v406
    %v408 = vpop.f32.mrb[0].mxu0
    %409 = vmatprep.mubr.f32.mxu0 0.0
    %410 = vmatmul.mubr.f32.gmra.mrb[0].mxu0 %v190
    %v411 = vpop.f32.mrb[0].mxu0
    %v412 = vadd.f32 %v318, %v411
    %v413 = vpop.f32.mrb[0].mxu0
    %414 = vmatprep.mubr.f32.mxu0 0.0
    %415 = vmatmul.mubr.f32.gmra.mrb[0].mxu0 %v193
    %v416 = vpop.f32.mrb[0].mxu0
    %v417 = vadd.f32 %v318, %v416
    %v418 = vpop.f32.mrb[0].mxu0
    %419 = vmatprep.mubr.f32.mxu0 0.0
    %420 = vmatmul.mubr.f32.gmra.mrb[0].mxu0 %v196
    %v421 = vpop.f32.mrb[0].mxu0
    %v422 = vadd.f32 %v318, %v421
    %v423 = vpop.f32.mrb[0].mxu0
    %424 = vdwg.mxu0
    %425 = vst.msk [vmem:[#allocation3] sm:$0xff] %vm303, %v387
    %426 = vst.msk [vmem:[#allocation3 + $0x8] sm:$0xff] %vm303, %v392
    %427 = vst.msk [vmem:[#allocation3 + $0x10] sm:$0xff] %vm303, %v397
    %428 = vst.msk [vmem:[#allocation3 + $0x18] sm:$0xff] %vm303, %v402
    %429 = vst.msk [vmem:[#allocation3 + $0x20] sm:$0xff] %vm303, %v407
    %430 = vst.msk [vmem:[#allocation3 + $0x28] sm:$0xff] %vm303, %v412
    %431 = vst.msk [vmem:[#allocation3 + $0x30] sm:$0xff] %vm303, %v417
    %432 = vst.msk [vmem:[#allocation3 + $0x38] sm:$0xff] %vm303, %v422
    %v433 = vld [vmem:[%s3] sm:$0xff]
    %v434 = vld [vmem:[#allocation19] sm:$0x1]
    %v436 = vlaneseq
    %v437 = vshrl.u32 %v436, 7
    %v438 = vsub.s32 0, %v437
    %v439 = vrot.slane %v434, %v438
    %441 = vmatprep.subr.mxu0 0.0
    %442 = vmatpush1.msra.mxu0 %v433
    %443 = vmatprep.subr.mxu0 0.0
    %444 = vmatpush1.msra.mxu0 0.0
    %445 = vmatprep.subr.mxu0 0.0
    %446 = vmatpush1.msra.mxu0 0.0
    %447 = vmatprep.subr.mxu0 0.0
    %448 = vmatpush1.msra.mxu0 0.0
    %449 = vmatprep.subr.mxu0 0.0
    %450 = vmatpush1.msra.mxu0 0.0
    %451 = vmatprep.subr.mxu0 0.0
    %452 = vmatpush1.msra.mxu0 0.0
    %453 = vmatprep.subr.mxu0 0.0
    %454 = vmatpush1.msra.mxu0 0.0
    %455 = vmatprep.subr.mxu0 0.0
    %456 = vmatpush1.msra.mxu0 0.0
    %457 = vmatprep.subr.mxu0 0.0
    %458 = vmatpush1.msra.mxu0 0.0
    %459 = vmatprep.subr.mxu0 0.0
    %460 = vmatpush1.msra.mxu0 0.0
    %461 = vmatprep.subr.mxu0 0.0
    %462 = vmatpush1.msra.mxu0 0.0
    %463 = vmatprep.subr.mxu0 0.0
    %464 = vmatpush1.msra.mxu0 0.0
    %465 = vmatprep.subr.mxu0 0.0
    %466 = vmatpush1.msra.mxu0 0.0
    %467 = vmatprep.subr.mxu0 0.0
    %468 = vmatpush1.msra.mxu0 0.0
    %469 = vmatprep.subr.mxu0 0.0
    %470 = vmatpush1.msra.mxu0 0.0
    %471 = vmatprep.subr.mxu0 0.0
    %472 = vmatpush1.msra.mxu0 0.0
    %473 = vmatprep.subr.mxu0 0.0
    %474 = vmatpush1.msra.mxu0 0.0
    %475 = vmatprep.subr.mxu0 0.0
    %476 = vmatpush1.msra.mxu0 0.0
    %477 = vmatprep.subr.mxu0 0.0
    %478 = vmatpush1.msra.mxu0 0.0
    %479 = vmatprep.subr.mxu0 0.0
    %480 = vmatpush1.msra.mxu0 0.0
    %481 = vmatprep.subr.mxu0 0.0
    %482 = vmatpush1.msra.mxu0 0.0
    %483 = vmatprep.subr.mxu0 0.0
    %484 = vmatpush1.msra.mxu0 0.0
    %485 = vmatprep.subr.mxu0 0.0
    %486 = vmatpush1.msra.mxu0 0.0
    %487 = vmatprep.subr.mxu0 0.0
    %488 = vmatpush1.msra.mxu0 0.0
    %489 = vmatprep.subr.mxu0 0.0
    %490 = vmatpush1.msra.mxu0 0.0
    %491 = vmatprep.subr.mxu0 0.0
    %492 = vmatpush1.msra.mxu0 0.0
    %493 = vmatprep.subr.mxu0 0.0
    %494 = vmatpush1.msra.mxu0 0.0
    %495 = vmatprep.subr.mxu0 0.0
    %496 = vmatpush1.msra.mxu0 0.0
    %497 = vmatprep.subr.mxu0 0.0
    %498 = vmatpush1.msra.mxu0 0.0
    %499 = vmatprep.subr.mxu0 0.0
    %500 = vmatpush1.msra.mxu0 0.0
    %501 = vmatprep.subr.mxu0 0.0
    %502 = vmatpush1.msra.mxu0 0.0
    %503 = vmatprep.subr.mxu0 0.0
    %504 = vmatpush1.msra.mxu0 0.0
    %505 = vmatprep.mubr.f32.mxu0 0.0
    %506 = vmatmul.mubr.f32.gmra.mrb[0].mxu0 %v175
    %v507 = vpop.f32.mrb[0].mxu0
    %v508 = vadd.f32 %v439, %v507
    %v509 = vpop.f32.mrb[0].mxu0
    %510 = vmatprep.mubr.f32.mxu0 0.0
    %511 = vmatmul.mubr.f32.gmra.mrb[0].mxu0 %v178
    %v512 = vpop.f32.mrb[0].mxu0
    %v513 = vadd.f32 %v439, %v512
    %v514 = vpop.f32.mrb[0].mxu0
    %515 = vmatprep.mubr.f32.mxu0 0.0
    %516 = vmatmul.mubr.f32.gmra.mrb[0].mxu0 %v181
    %v517 = vpop.f32.mrb[0].mxu0
    %v518 = vadd.f32 %v439, %v517
    %v519 = vpop.f32.mrb[0].mxu0
    %520 = vmatprep.mubr.f32.mxu0 0.0
    %521 = vmatmul.mubr.f32.gmra.mrb[0].mxu0 %v184
    %v522 = vpop.f32.mrb[0].mxu0
    %v523 = vadd.f32 %v439, %v522
    %v524 = vpop.f32.mrb[0].mxu0
    %525 = vmatprep.mubr.f32.mxu0 0.0
    %526 = vmatmul.mubr.f32.gmra.mrb[0].mxu0 %v187
    %v527 = vpop.f32.mrb[0].mxu0
    %v528 = vadd.f32 %v439, %v527
    %v529 = vpop.f32.mrb[0].mxu0
    %530 = vmatprep.mubr.f32.mxu0 0.0
    %531 = vmatmul.mubr.f32.gmra.mrb[0].mxu0 %v190
    %v532 = vpop.f32.mrb[0].mxu0
    %v533 = vadd.f32 %v439, %v532
    %v534 = vpop.f32.mrb[0].mxu0
    %535 = vmatprep.mubr.f32.mxu0 0.0
    %536 = vmatmul.mubr.f32.gmra.mrb[0].mxu0 %v193
    %v537 = vpop.f32.mrb[0].mxu0
    %v538 = vadd.f32 %v439, %v537
    %v539 = vpop.f32.mrb[0].mxu0
    %540 = vmatprep.mubr.f32.mxu0 0.0
    %541 = vmatmul.mubr.f32.gmra.mrb[0].mxu0 %v196
    %v542 = vpop.f32.mrb[0].mxu0
    %v543 = vadd.f32 %v439, %v542
    %v544 = vpop.f32.mrb[0].mxu0
    %545 = vdwg.mxu0
    %546 = vst.msk [vmem:[#allocation4] sm:$0xff] %vm303, %v508
    %547 = vst.msk [vmem:[#allocation4 + $0x8] sm:$0xff] %vm303, %v513
    %548 = vst.msk [vmem:[#allocation4 + $0x10] sm:$0xff] %vm303, %v518
    %549 = vst.msk [vmem:[#allocation4 + $0x18] sm:$0xff] %vm303, %v523
    %550 = vst.msk [vmem:[#allocation4 + $0x20] sm:$0xff] %vm303, %v528
    %551 = vst.msk [vmem:[#allocation4 + $0x28] sm:$0xff] %vm303, %v533
    %552 = vst.msk [vmem:[#allocation4 + $0x30] sm:$0xff] %vm303, %v538
    %553 = vst.msk [vmem:[#allocation4 + $0x38] sm:$0xff] %vm303, %v543
    %554 = vst.msk [vmem:[#allocation5] sm:$0xff] %vm303, 0.0
    %v555 = vld [vmem:[#allocation5] sm:$0xff]
    %v556 = vld [vmem:[#allocation13] sm:$0xff]
    %v557 = vld [vmem:[#allocation13 + $0x8] sm:$0xff]
    %v558 = vld [vmem:[#allocation13 + $0x10] sm:$0xff]
    %v559 = vld [vmem:[#allocation13 + $0x18] sm:$0xff]
    %v561 = vsel %vm303, %v555, 0
    %563 = vmatprep.subr.mxu0 0.0
    %564 = vmatpush1.msra.mxu0 %v556
    %565 = vmatprep.subr.mxu0 0.0
    %566 = vmatpush1.msra.mxu0 %v557
    %567 = vmatprep.subr.mxu0 0.0
    %568 = vmatpush1.msra.mxu0 %v558
    %569 = vmatprep.subr.mxu0 0.0
    %570 = vmatpush1.msra.mxu0 %v559
    %571 = vmatprep.subr.mxu0 0.0
    %572 = vmatpush1.msra.mxu0 0.0
    %573 = vmatprep.subr.mxu0 0.0
    %574 = vmatpush1.msra.mxu0 0.0
    %575 = vmatprep.subr.mxu0 0.0
    %576 = vmatpush1.msra.mxu0 0.0
    %577 = vmatprep.subr.mxu0 0.0
    %578 = vmatpush1.msra.mxu0 0.0
    %579 = vmatprep.subr.mxu0 0.0
    %580 = vmatpush1.msra.mxu0 0.0
    %581 = vmatprep.subr.mxu0 0.0
    %582 = vmatpush1.msra.mxu0 0.0
    %583 = vmatprep.subr.mxu0 0.0
    %584 = vmatpush1.msra.mxu0 0.0
    %585 = vmatprep.subr.mxu0 0.0
    %586 = vmatpush1.msra.mxu0 0.0
    %587 = vmatprep.subr.mxu0 0.0
    %588 = vmatpush1.msra.mxu0 0.0
    %589 = vmatprep.subr.mxu0 0.0
    %590 = vmatpush1.msra.mxu0 0.0
    %591 = vmatprep.subr.mxu0 0.0
    %592 = vmatpush1.msra.mxu0 0.0
    %593 = vmatprep.subr.mxu0 0.0
    %594 = vmatpush1.msra.mxu0 0.0
    %595 = vmatprep.subr.mxu0 0.0
    %596 = vmatpush1.msra.mxu0 0.0
    %597 = vmatprep.subr.mxu0 0.0
    %598 = vmatpush1.msra.mxu0 0.0
    %599 = vmatprep.subr.mxu0 0.0
    %600 = vmatpush1.msra.mxu0 0.0
    %601 = vmatprep.subr.mxu0 0.0
    %602 = vmatpush1.msra.mxu0 0.0
    %603 = vmatprep.subr.mxu0 0.0
    %604 = vmatpush1.msra.mxu0 0.0
    %605 = vmatprep.subr.mxu0 0.0
    %606 = vmatpush1.msra.mxu0 0.0
    %607 = vmatprep.subr.mxu0 0.0
    %608 = vmatpush1.msra.mxu0 0.0
    %609 = vmatprep.subr.mxu0 0.0
    %610 = vmatpush1.msra.mxu0 0.0
    %611 = vmatprep.subr.mxu0 0.0
    %612 = vmatpush1.msra.mxu0 0.0
    %613 = vmatprep.subr.mxu0 0.0
    %614 = vmatpush1.msra.mxu0 0.0
    %615 = vmatprep.subr.mxu0 0.0
    %616 = vmatpush1.msra.mxu0 0.0
    %617 = vmatprep.subr.mxu0 0.0
    %618 = vmatpush1.msra.mxu0 0.0
    %619 = vmatprep.subr.mxu0 0.0
    %620 = vmatpush1.msra.mxu0 0.0
    %621 = vmatprep.subr.mxu0 0.0
    %622 = vmatpush1.msra.mxu0 0.0
    %623 = vmatprep.subr.mxu0 0.0
    %624 = vmatpush1.msra.mxu0 0.0
    %625 = vmatprep.subr.mxu0 0.0
    %626 = vmatpush1.msra.mxu0 0.0
    %627 = vmatprep.mubr.f32.mxu0 0.0
    %628 = vmatmul.mubr.f32.gmra.mrb[0].mxu0 %v561
    %v629 = vpop.f32.mrb[0].mxu0
    %v630 = vadd.f32 0.0, %v629
    %v631 = vpop.f32.mrb[0].mxu0
    %632 = vdwg.mxu0
    %v633 = vld [vmem:[#allocation15] sm:$0xff]
    %v634 = vld [vmem:[#allocation15 + $0x8] sm:$0xff]
    %v635 = vld [vmem:[#allocation15 + $0x10] sm:$0xff]
    %v636 = vld [vmem:[#allocation15 + $0x18] sm:$0xff]
    %637 = vmatprep.subr.mxu0 0.0
    %638 = vmatpush1.msra.mxu0 %v633
    %639 = vmatprep.subr.mxu0 0.0
    %640 = vmatpush1.msra.mxu0 %v634
    %641 = vmatprep.subr.mxu0 0.0
    %642 = vmatpush1.msra.mxu0 %v635
    %643 = vmatprep.subr.mxu0 0.0
    %644 = vmatpush1.msra.mxu0 %v636
    %645 = vmatprep.subr.mxu0 0.0
    %646 = vmatpush1.msra.mxu0 0.0
    %647 = vmatprep.subr.mxu0 0.0
    %648 = vmatpush1.msra.mxu0 0.0
    %649 = vmatprep.subr.mxu0 0.0
    %650 = vmatpush1.msra.mxu0 0.0
    %651 = vmatprep.subr.mxu0 0.0
    %652 = vmatpush1.msra.mxu0 0.0
    %653 = vmatprep.subr.mxu0 0.0
    %654 = vmatpush1.msra.mxu0 0.0
    %655 = vmatprep.subr.mxu0 0.0
    %656 = vmatpush1.msra.mxu0 0.0
    %657 = vmatprep.subr.mxu0 0.0
    %658 = vmatpush1.msra.mxu0 0.0
    %659 = vmatprep.subr.mxu0 0.0
    %660 = vmatpush1.msra.mxu0 0.0
    %661 = vmatprep.subr.mxu0 0.0
    %662 = vmatpush1.msra.mxu0 0.0
    %663 = vmatprep.subr.mxu0 0.0
    %664 = vmatpush1.msra.mxu0 0.0
    %665 = vmatprep.subr.mxu0 0.0
    %666 = vmatpush1.msra.mxu0 0.0
    %667 = vmatprep.subr.mxu0 0.0
    %668 = vmatpush1.msra.mxu0 0.0
    %669 = vmatprep.subr.mxu0 0.0
    %670 = vmatpush1.msra.mxu0 0.0
    %671 = vmatprep.subr.mxu0 0.0
    %672 = vmatpush1.msra.mxu0 0.0
    %673 = vmatprep.subr.mxu0 0.0
    %674 = vmatpush1.msra.mxu0 0.0
    %675 = vmatprep.subr.mxu0 0.0
    %676 = vmatpush1.msra.mxu0 0.0
    %677 = vmatprep.subr.mxu0 0.0
    %678 = vmatpush1.msra.mxu0 0.0
    %679 = vmatprep.subr.mxu0 0.0
    %680 = vmatpush1.msra.mxu0 0.0
    %681 = vmatprep.subr.mxu0 0.0
    %682 = vmatpush1.msra.mxu0 0.0
    %683 = vmatprep.subr.mxu0 0.0
    %684 = vmatpush1.msra.mxu0 0.0
    %685 = vmatprep.subr.mxu0 0.0
    %686 = vmatpush1.msra.mxu0 0.0
    %687 = vmatprep.subr.mxu0 0.0
    %688 = vmatpush1.msra.mxu0 0.0
    %689 = vmatprep.subr.mxu0 0.0
    %690 = vmatpush1.msra.mxu0 0.0
    %691 = vmatprep.subr.mxu0 0.0
    %692 = vmatpush1.msra.mxu0 0.0
    %693 = vmatprep.subr.mxu0 0.0
    %694 = vmatpush1.msra.mxu0 0.0
    %695 = vmatprep.subr.mxu0 0.0
    %696 = vmatpush1.msra.mxu0 0.0
    %697 = vmatprep.subr.mxu0 0.0
    %698 = vmatpush1.msra.mxu0 0.0
    %699 = vmatprep.subr.mxu0 0.0
    %700 = vmatpush1.msra.mxu0 0.0
    %701 = vmatprep.mubr.f32.mxu0 0.0
    %702 = vmatmul.mubr.f32.gmra.mrb[0].mxu0 %v561
    %v703 = vpop.f32.mrb[0].mxu0
    %v704 = vadd.f32 0.0, %v703
    %v705 = vpop.f32.mrb[0].mxu0
    %706 = vdwg.mxu0
    %v707 = vld [vmem:[#allocation16] sm:$0xff]
    %v708 = vld [vmem:[#allocation16 + $0x8] sm:$0xff]
    %v709 = vld [vmem:[#allocation16 + $0x10] sm:$0xff]
    %v710 = vld [vmem:[#allocation16 + $0x18] sm:$0xff]
    %v711 = vld [vmem:[#allocation21] sm:$0x1]
    %v713 = vlaneseq
    %v714 = vshrl.u32 %v713, 7
    %v715 = vsub.s32 0, %v714
    %v716 = vrot.slane %v711, %v715
    %718 = vmatprep.subr.mxu0 0.0
    %719 = vmatpush1.msra.mxu0 %v707
    %720 = vmatprep.subr.mxu0 0.0
    %721 = vmatpush1.msra.mxu0 %v708
    %722 = vmatprep.subr.mxu0 0.0
    %723 = vmatpush1.msra.mxu0 %v709
    %724 = vmatprep.subr.mxu0 0.0
    %725 = vmatpush1.msra.mxu0 %v710
    %726 = vmatprep.subr.mxu0 0.0
    %727 = vmatpush1.msra.mxu0 0.0
    %728 = vmatprep.subr.mxu0 0.0
    %729 = vmatpush1.msra.mxu0 0.0
    %730 = vmatprep.subr.mxu0 0.0
    %731 = vmatpush1.msra.mxu0 0.0
    %732 = vmatprep.subr.mxu0 0.0
    %733 = vmatpush1.msra.mxu0 0.0
    %734 = vmatprep.subr.mxu0 0.0
    %735 = vmatpush1.msra.mxu0 0.0
    %736 = vmatprep.subr.mxu0 0.0
    %737 = vmatpush1.msra.mxu0 0.0
    %738 = vmatprep.subr.mxu0 0.0
    %739 = vmatpush1.msra.mxu0 0.0
    %740 = vmatprep.subr.mxu0 0.0
    %741 = vmatpush1.msra.mxu0 0.0
    %742 = vmatprep.subr.mxu0 0.0
    %743 = vmatpush1.msra.mxu0 0.0
    %744 = vmatprep.subr.mxu0 0.0
    %745 = vmatpush1.msra.mxu0 0.0
    %746 = vmatprep.subr.mxu0 0.0
    %747 = vmatpush1.msra.mxu0 0.0
    %748 = vmatprep.subr.mxu0 0.0
    %749 = vmatpush1.msra.mxu0 0.0
    %750 = vmatprep.subr.mxu0 0.0
    %751 = vmatpush1.msra.mxu0 0.0
    %752 = vmatprep.subr.mxu0 0.0
    %753 = vmatpush1.msra.mxu0 0.0
    %754 = vmatprep.subr.mxu0 0.0
    %755 = vmatpush1.msra.mxu0 0.0
    %756 = vmatprep.subr.mxu0 0.0
    %757 = vmatpush1.msra.mxu0 0.0
    %758 = vmatprep.subr.mxu0 0.0
    %759 = vmatpush1.msra.mxu0 0.0
    %760 = vmatprep.subr.mxu0 0.0
    %761 = vmatpush1.msra.mxu0 0.0
    %762 = vmatprep.subr.mxu0 0.0
    %763 = vmatpush1.msra.mxu0 0.0
    %764 = vmatprep.subr.mxu0 0.0
    %765 = vmatpush1.msra.mxu0 0.0
    %766 = vmatprep.subr.mxu0 0.0
    %767 = vmatpush1.msra.mxu0 0.0
    %768 = vmatprep.subr.mxu0 0.0
    %769 = vmatpush1.msra.mxu0 0.0
    %770 = vmatprep.subr.mxu0 0.0
    %771 = vmatpush1.msra.mxu0 0.0
    %772 = vmatprep.subr.mxu0 0.0
    %773 = vmatpush1.msra.mxu0 0.0
    %774 = vmatprep.subr.mxu0 0.0
    %775 = vmatpush1.msra.mxu0 0.0
    %776 = vmatprep.subr.mxu0 0.0
    %777 = vmatpush1.msra.mxu0 0.0
    %778 = vmatprep.subr.mxu0 0.0
    %779 = vmatpush1.msra.mxu0 0.0
    %780 = vmatprep.subr.mxu0 0.0
    %781 = vmatpush1.msra.mxu0 0.0
    %782 = vmatprep.mubr.f32.mxu0 0.0
    %783 = vmatmul.mubr.f32.gmra.mrb[0].mxu0 %v561
    %v784 = vpop.f32.mrb[0].mxu0
    %v785 = vadd.f32 %v716, %v784
    %v786 = vpop.f32.mrb[0].mxu0
    %787 = vdwg.mxu0
    %v788 = vld [vmem:[#allocation2] sm:$0xff]
    %v789 = vadd.f32 %v788, %v630
    %v790 = vxor.u32 %v789, 2147483648
    %v791 = vmul.f32 %v790, 1.442695
    %v792 = vpow.pop %v791
    %v793 = vadd.f32 %v792, 1.0
    %v794 = vrcp.pop %v793
    %v795 = vmul.f32 1.0, %v794
    %v796 = vld [vmem:[#allocation3] sm:$0xff]
    %v797 = vadd.f32 %v796, %v704
    %v798 = vxor.u32 %v797, 2147483648
    %v799 = vmul.f32 %v798, 1.442695
    %v800 = vpow.pop %v799
    %v801 = vadd.f32 %v800, 1.0
    %v802 = vrcp.pop %v801
    %v803 = vmul.f32 1.0, %v802
    %v804 = vld [vmem:[#allocation4] sm:$0xff]
    %v805 = vmul.f32 %v795, %v785
    %v806 = vadd.f32 %v804, %v805
    %v807 = vtanh.pop %v806
    %v808 = vsub.f32 1.0, %v803
    %v809 = vmul.f32 %v808, %v807
    %v810 = vmul.f32 %v803, %v555
    %v811 = vadd.f32 %v809, %v810
    %812 = vst.msk [vmem:[#allocation5] sm:$0xff] %vm303, %v811
    %813 = vst.msk [vmem:[#allocation6] sm:$0xff] %vm303, %v811
    %v814 = vld [vmem:[#allocation5] sm:$0xff]
    %v815 = vld [vmem:[#allocation13] sm:$0xff]
    %v816 = vld [vmem:[#allocation13 + $0x8] sm:$0xff]
    %v817 = vld [vmem:[#allocation13 + $0x10] sm:$0xff]
    %v818 = vld [vmem:[#allocation13 + $0x18] sm:$0xff]
    %v820 = vsel %vm303, %v814, 0
    %822 = vmatprep.subr.mxu0 0.0
    %823 = vmatpush1.msra.mxu0 %v815
    %824 = vmatprep.subr.mxu0 0.0
    %825 = vmatpush1.msra.mxu0 %v816
    %826 = vmatprep.subr.mxu0 0.0
    %827 = vmatpush1.msra.mxu0 %v817
    %828 = vmatprep.subr.mxu0 0.0
    %829 = vmatpush1.msra.mxu0 %v818
    %830 = vmatprep.subr.mxu0 0.0
    %831 = vmatpush1.msra.mxu0 0.0
    %832 = vmatprep.subr.mxu0 0.0
    %833 = vmatpush1.msra.mxu0 0.0
    %834 = vmatprep.subr.mxu0 0.0
    %835 = vmatpush1.msra.mxu0 0.0
    %836 = vmatprep.subr.mxu0 0.0
    %837 = vmatpush1.msra.mxu0 0.0
    %838 = vmatprep.subr.mxu0 0.0
    %839 = vmatpush1.msra.mxu0 0.0
    %840 = vmatprep.subr.mxu0 0.0
    %841 = vmatpush1.msra.mxu0 0.0
    %842 = vmatprep.subr.mxu0 0.0
    %843 = vmatpush1.msra.mxu0 0.0
    %844 = vmatprep.subr.mxu0 0.0
    %845 = vmatpush1.msra.mxu0 0.0
    %846 = vmatprep.subr.mxu0 0.0
    %847 = vmatpush1.msra.mxu0 0.0
    %848 = vmatprep.subr.mxu0 0.0
    %849 = vmatpush1.msra.mxu0 0.0
    %850 = vmatprep.subr.mxu0 0.0
    %851 = vmatpush1.msra.mxu0 0.0
    %852 = vmatprep.subr.mxu0 0.0
    %853 = vmatpush1.msra.mxu0 0.0
    %854 = vmatprep.subr.mxu0 0.0
    %855 = vmatpush1.msra.mxu0 0.0
    %856 = vmatprep.subr.mxu0 0.0
    %857 = vmatpush1.msra.mxu0 0.0
    %858 = vmatprep.subr.mxu0 0.0
    %859 = vmatpush1.msra.mxu0 0.0
    %860 = vmatprep.subr.mxu0 0.0
    %861 = vmatpush1.msra.mxu0 0.0
    %862 = vmatprep.subr.mxu0 0.0
    %863 = vmatpush1.msra.mxu0 0.0
    %864 = vmatprep.subr.mxu0 0.0
    %865 = vmatpush1.msra.mxu0 0.0
    %866 = vmatprep.subr.mxu0 0.0
    %867 = vmatpush1.msra.mxu0 0.0
    %868 = vmatprep.subr.mxu0 0.0
    %869 = vmatpush1.msra.mxu0 0.0
    %870 = vmatprep.subr.mxu0 0.0
    %871 = vmatpush1.msra.mxu0 0.0
    %872 = vmatprep.subr.mxu0 0.0
    %873 = vmatpush1.msra.mxu0 0.0
    %874 = vmatprep.subr.mxu0 0.0
    %875 = vmatpush1.msra.mxu0 0.0
    %876 = vmatprep.subr.mxu0 0.0
    %877 = vmatpush1.msra.mxu0 0.0
    %878 = vmatprep.subr.mxu0 0.0
    %879 = vmatpush1.msra.mxu0 0.0
    %880 = vmatprep.subr.mxu0 0.0
    %881 = vmatpush1.msra.mxu0 0.0
    %882 = vmatprep.subr.mxu0 0.0
    %883 = vmatpush1.msra.mxu0 0.0
    %884 = vmatprep.subr.mxu0 0.0
    %885 = vmatpush1.msra.mxu0 0.0
    %886 = vmatprep.mubr.f32.mxu0 0.0
    %887 = vmatmul.mubr.f32.gmra.mrb[0].mxu0 %v820
    %v888 = vpop.f32.mrb[0].mxu0
    %v889 = vadd.f32 0.0, %v888
    %v890 = vpop.f32.mrb[0].mxu0
    %891 = vdwg.mxu0
    %v892 = vld [vmem:[#allocation15] sm:$0xff]
    %v893 = vld [vmem:[#allocation15 + $0x8] sm:$0xff]
    %v894 = vld [vmem:[#allocation15 + $0x10] sm:$0xff]
    %v895 = vld [vmem:[#allocation15 + $0x18] sm:$0xff]
    %896 = vmatprep.subr.mxu0 0.0
    %897 = vmatpush1.msra.mxu0 %v892
    %898 = vmatprep.subr.mxu0 0.0
    %899 = vmatpush1.msra.mxu0 %v893
    %900 = vmatprep.subr.mxu0 0.0
    %901 = vmatpush1.msra.mxu0 %v894
    %902 = vmatprep.subr.mxu0 0.0
    %903 = vmatpush1.msra.mxu0 %v895
    %904 = vmatprep.subr.mxu0 0.0
    %905 = vmatpush1.msra.mxu0 0.0
    %906 = vmatprep.subr.mxu0 0.0
    %907 = vmatpush1.msra.mxu0 0.0
    %908 = vmatprep.subr.mxu0 0.0
    %909 = vmatpush1.msra.mxu0 0.0
    %910 = vmatprep.subr.mxu0 0.0
    %911 = vmatpush1.msra.mxu0 0.0
    %912 = vmatprep.subr.mxu0 0.0
    %913 = vmatpush1.msra.mxu0 0.0
    %914 = vmatprep.subr.mxu0 0.0
    %915 = vmatpush1.msra.mxu0 0.0
    %916 = vmatprep.subr.mxu0 0.0
    %917 = vmatpush1.msra.mxu0 0.0
    %918 = vmatprep.subr.mxu0 0.0
    %919 = vmatpush1.msra.mxu0 0.0
    %920 = vmatprep.subr.mxu0 0.0
    %921 = vmatpush1.msra.mxu0 0.0
    %922 = vmatprep.subr.mxu0 0.0
    %923 = vmatpush1.msra.mxu0 0.0
    %924 = vmatprep.subr.mxu0 0.0
    %925 = vmatpush1.msra.mxu0 0.0
    %926 = vmatprep.subr.mxu0 0.0
    %927 = vmatpush1.msra.mxu0 0.0
    %928 = vmatprep.subr.mxu0 0.0
    %929 = vmatpush1.msra.mxu0 0.0
    %930 = vmatprep.subr.mxu0 0.0
    %931 = vmatpush1.msra.mxu0 0.0
    %932 = vmatprep.subr.mxu0 0.0
    %933 = vmatpush1.msra.mxu0 0.0
    %934 = vmatprep.subr.mxu0 0.0
    %935 = vmatpush1.msra.mxu0 0.0
    %936 = vmatprep.subr.mxu0 0.0
    %937 = vmatpush1.msra.mxu0 0.0
    %938 = vmatprep.subr.mxu0 0.0
    %939 = vmatpush1.msra.mxu0 0.0
    %940 = vmatprep.subr.mxu0 0.0
    %941 = vmatpush1.msra.mxu0 0.0
    %942 = vmatprep.subr.mxu0 0.0
    %943 = vmatpush1.msra.mxu0 0.0
    %944 = vmatprep.subr.mxu0 0.0
    %945 = vmatpush1.msra.mxu0 0.0
    %946 = vmatprep.subr.mxu0 0.0
    %947 = vmatpush1.msra.mxu0 0.0
    %948 = vmatprep.subr.mxu0 0.0
    %949 = vmatpush1.msra.mxu0 0.0
    %950 = vmatprep.subr.mxu0 0.0
    %951 = vmatpush1.msra.mxu0 0.0
    %952 = vmatprep.subr.mxu0 0.0
    %953 = vmatpush1.msra.mxu0 0.0
    %954 = vmatprep.subr.mxu0 0.0
    %955 = vmatpush1.msra.mxu0 0.0
    %956 = vmatprep.subr.mxu0 0.0
    %957 = vmatpush1.msra.mxu0 0.0
    %958 = vmatprep.subr.mxu0 0.0
    %959 = vmatpush1.msra.mxu0 0.0
    %960 = vmatprep.mubr.f32.mxu0 0.0
    %961 = vmatmul.mubr.f32.gmra.mrb[0].mxu0 %v820
    %v962 = vpop.f32.mrb[0].mxu0
    %v963 = vadd.f32 0.0, %v962
    %v964 = vpop.f32.mrb[0].mxu0
    %965 = vdwg.mxu0
    %v966 = vld [vmem:[#allocation16] sm:$0xff]
    %v967 = vld [vmem:[#allocation16 + $0x8] sm:$0xff]
    %v968 = vld [vmem:[#allocation16 + $0x10] sm:$0xff]
    %v969 = vld [vmem:[#allocation16 + $0x18] sm:$0xff]
    %v970 = vld [vmem:[#allocation21] sm:$0x1]
    %v972 = vlaneseq
    %v973 = vshrl.u32 %v972, 7
    %v974 = vsub.s32 0, %v973
    %v975 = vrot.slane %v970, %v974
    %977 = vmatprep.subr.mxu0 0.0
    %978 = vmatpush1.msra.mxu0 %v966
    %979 = vmatprep.subr.mxu0 0.0
    %980 = vmatpush1.msra.mxu0 %v967
    %981 = vmatprep.subr.mxu0 0.0
    %982 = vmatpush1.msra.mxu0 %v968
    %983 = vmatprep.subr.mxu0 0.0
    %984 = vmatpush1.msra.mxu0 %v969
    %985 = vmatprep.subr.mxu0 0.0
    %986 = vmatpush1.msra.mxu0 0.0
    %987 = vmatprep.subr.mxu0 0.0
    %988 = vmatpush1.msra.mxu0 0.0
    %989 = vmatprep.subr.mxu0 0.0
    %990 = vmatpush1.msra.mxu0 0.0
    %991 = vmatprep.subr.mxu0 0.0
    %992 = vmatpush1.msra.mxu0 0.0
    %993 = vmatprep.subr.mxu0 0.0
    %994 = vmatpush1.msra.mxu0 0.0
    %995 = vmatprep.subr.mxu0 0.0
    %996 = vmatpush1.msra.mxu0 0.0
    %997 = vmatprep.subr.mxu0 0.0
    %998 = vmatpush1.msra.mxu0 0.0
    %999 = vmatprep.subr.mxu0 0.0
    %1000 = vmatpush1.msra.mxu0 0.0
    %1001 = vmatprep.subr.mxu0 0.0
    %1002 = vmatpush1.msra.mxu0 0.0
    %1003 = vmatprep.subr.mxu0 0.0
    %1004 = vmatpush1.msra.mxu0 0.0
    %1005 = vmatprep.subr.mxu0 0.0
    %1006 = vmatpush1.msra.mxu0 0.0
    %1007 = vmatprep.subr.mxu0 0.0
    %1008 = vmatpush1.msra.mxu0 0.0
    %1009 = vmatprep.subr.mxu0 0.0
    %1010 = vmatpush1.msra.mxu0 0.0
    %1011 = vmatprep.subr.mxu0 0.0
    %1012 = vmatpush1.msra.mxu0 0.0
    %1013 = vmatprep.subr.mxu0 0.0
    %1014 = vmatpush1.msra.mxu0 0.0
    %1015 = vmatprep.subr.mxu0 0.0
    %1016 = vmatpush1.msra.mxu0 0.0
    %1017 = vmatprep.subr.mxu0 0.0
    %1018 = vmatpush1.msra.mxu0 0.0
    %1019 = vmatprep.subr.mxu0 0.0
    %1020 = vmatpush1.msra.mxu0 0.0
    %1021 = vmatprep.subr.mxu0 0.0
    %1022 = vmatpush1.msra.mxu0 0.0
    %1023 = vmatprep.subr.mxu0 0.0
    %1024 = vmatpush1.msra.mxu0 0.0
    %1025 = vmatprep.subr.mxu0 0.0
    %1026 = vmatpush1.msra.mxu0 0.0
    %1027 = vmatprep.subr.mxu0 0.0
    %1028 = vmatpush1.msra.mxu0 0.0
    %1029 = vmatprep.subr.mxu0 0.0
    %1030 = vmatpush1.msra.mxu0 0.0
    %1031 = vmatprep.subr.mxu0 0.0
    %1032 = vmatpush1.msra.mxu0 0.0
    %1033 = vmatprep.subr.mxu0 0.0
    %1034 = vmatpush1.msra.mxu0 0.0
    %1035 = vmatprep.subr.mxu0 0.0
    %1036 = vmatpush1.msra.mxu0 0.0
    %1037 = vmatprep.subr.mxu0 0.0
    %1038 = vmatpush1.msra.mxu0 0.0
    %1039 = vmatprep.subr.mxu0 0.0
    %1040 = vmatpush1.msra.mxu0 0.0
    %1041 = vmatprep.mubr.f32.mxu0 0.0
    %1042 = vmatmul.mubr.f32.gmra.mrb[0].mxu0 %v820
    %v1043 = vpop.f32.mrb[0].mxu0
    %v1044 = vadd.f32 %v975, %v1043
    %v1045 = vpop.f32.mrb[0].mxu0
    %1046 = vdwg.mxu0
    %s1047 = scalar_lea.vmem [#allocation2], 8
    %v1048 = vld [vmem:[%s1047] sm:$0xff]
    %v1049 = vadd.f32 %v1048, %v889
    %v1050 = vxor.u32 %v1049, 2147483648
    %v1051 = vmul.f32 %v1050, 1.442695
    %v1052 = vpow.pop %v1051
    %v1053 = vadd.f32 %v1052, 1.0
    %v1054 = vrcp.pop %v1053
    %v1055 = vmul.f32 1.0, %v1054
    %s1056 = scalar_lea.vmem [#allocation3], 8
    %v1057 = vld [vmem:[%s1056] sm:$0xff]
    %v1058 = vadd.f32 %v1057, %v963
    %v1059 = vxor.u32 %v1058, 2147483648
    %v1060 = vmul.f32 %v1059, 1.442695
    %v1061 = vpow.pop %v1060
    %v1062 = vadd.f32 %v1061, 1.0
    %v1063 = vrcp.pop %v1062
    %v1064 = vmul.f32 1.0, %v1063
    %s1065 = scalar_lea.vmem [#allocation4], 8
    %v1066 = vld [vmem:[%s1065] sm:$0xff]
    %v1067 = vmul.f32 %v1055, %v1044
    %v1068 = vadd.f32 %v1066, %v1067
    %v1069 = vtanh.pop %v1068
    %v1070 = vsub.f32 1.0, %v1064
    %v1071 = vmul.f32 %v1070, %v1069
    %v1072 = vmul.f32 %v1064, %v814
    %v1073 = vadd.f32 %v1071, %v1072
    %1074 = vst.msk [vmem:[#allocation5] sm:$0xff] %vm303, %v1073
    %s1075 = scalar_lea.vmem [#allocation6], 8
    %1076 = vst.msk [vmem:[%s1075] sm:$0xff] %vm303, %v1073
    %v1077 = vld [vmem:[#allocation5] sm:$0xff]
    %v1078 = vld [vmem:[#allocation13] sm:$0xff]
    %v1079 = vld [vmem:[#allocation13 + $0x8] sm:$0xff]
    %v1080 = vld [vmem:[#allocation13 + $0x10] sm:$0xff]
    %v1081 = vld [vmem:[#allocation13 + $0x18] sm:$0xff]
    %v1083 = vsel %vm303, %v1077, 0
    %1085 = vmatprep.subr.mxu0 0.0
    %1086 = vmatpush1.msra.mxu0 %v1078
    %1087 = vmatprep.subr.mxu0 0.0
    %1088 = vmatpush1.msra.mxu0 %v1079
    %1089 = vmatprep.subr.mxu0 0.0
    %1090 = vmatpush1.msra.mxu0 %v1080
    %1091 = vmatprep.subr.mxu0 0.0
    %1092 = vmatpush1.msra.mxu0 %v1081
    %1093 = vmatprep.subr.mxu0 0.0
    %1094 = vmatpush1.msra.mxu0 0.0
    %1095 = vmatprep.subr.mxu0 0.0
    %1096 = vmatpush1.msra.mxu0 0.0
    %1097 = vmatprep.subr.mxu0 0.0
    %1098 = vmatpush1.msra.mxu0 0.0
    %1099 = vmatprep.subr.mxu0 0.0
    %1100 = vmatpush1.msra.mxu0 0.0
    %1101 = vmatprep.subr.mxu0 0.0
    %1102 = vmatpush1.msra.mxu0 0.0
    %1103 = vmatprep.subr.mxu0 0.0
    %1104 = vmatpush1.msra.mxu0 0.0
    %1105 = vmatprep.subr.mxu0 0.0
    %1106 = vmatpush1.msra.mxu0 0.0
    %1107 = vmatprep.subr.mxu0 0.0
    %1108 = vmatpush1.msra.mxu0 0.0
    %1109 = vmatprep.subr.mxu0 0.0
    %1110 = vmatpush1.msra.mxu0 0.0
    %1111 = vmatprep.subr.mxu0 0.0
    %1112 = vmatpush1.msra.mxu0 0.0
    %1113 = vmatprep.subr.mxu0 0.0
    %1114 = vmatpush1.msra.mxu0 0.0
    %1115 = vmatprep.subr.mxu0 0.0
    %1116 = vmatpush1.msra.mxu0 0.0
    %1117 = vmatprep.subr.mxu0 0.0
    %1118 = vmatpush1.msra.mxu0 0.0
    %1119 = vmatprep.subr.mxu0 0.0
    %1120 = vmatpush1.msra.mxu0 0.0
    %1121 = vmatprep.subr.mxu0 0.0
    %1122 = vmatpush1.msra.mxu0 0.0
    %1123 = vmatprep.subr.mxu0 0.0
    %1124 = vmatpush1.msra.mxu0 0.0
    %1125 = vmatprep.subr.mxu0 0.0
    %1126 = vmatpush1.msra.mxu0 0.0
    %1127 = vmatprep.subr.mxu0 0.0
    %1128 = vmatpush1.msra.mxu0 0.0
    %1129 = vmatprep.subr.mxu0 0.0
    %1130 = vmatpush1.msra.mxu0 0.0
    %1131 = vmatprep.subr.mxu0 0.0
    %1132 = vmatpush1.msra.mxu0 0.0
    %1133 = vmatprep.subr.mxu0 0.0
    %1134 = vmatpush1.msra.mxu0 0.0
    %1135 = vmatprep.subr.mxu0 0.0
    %1136 = vmatpush1.msra.mxu0 0.0
    %1137 = vmatprep.subr.mxu0 0.0
    %1138 = vmatpush1.msra.mxu0 0.0
    %1139 = vmatprep.subr.mxu0 0.0
    %1140 = vmatpush1.msra.mxu0 0.0
    %1141 = vmatprep.subr.mxu0 0.0
    %1142 = vmatpush1.msra.mxu0 0.0
    %1143 = vmatprep.subr.mxu0 0.0
    %1144 = vmatpush1.msra.mxu0 0.0
    %1145 = vmatprep.subr.mxu0 0.0
    %1146 = vmatpush1.msra.mxu0 0.0
    %1147 = vmatprep.subr.mxu0 0.0
    %1148 = vmatpush1.msra.mxu0 0.0
    %1149 = vmatprep.mubr.f32.mxu0 0.0
    %1150 = vmatmul.mubr.f32.gmra.mrb[0].mxu0 %v1083
    %v1151 = vpop.f32.mrb[0].mxu0
    %v1152 = vadd.f32 0.0, %v1151
    %v1153 = vpop.f32.mrb[0].mxu0
    %1154 = vdwg.mxu0
    %v1155 = vld [vmem:[#allocation15] sm:$0xff]
    %v1156 = vld [vmem:[#allocation15 + $0x8] sm:$0xff]
    %v1157 = vld [vmem:[#allocation15 + $0x10] sm:$0xff]
    %v1158 = vld [vmem:[#allocation15 + $0x18] sm:$0xff]
    %1159 = vmatprep.subr.mxu0 0.0
    %1160 = vmatpush1.msra.mxu0 %v1155
    %1161 = vmatprep.subr.mxu0 0.0
    %1162 = vmatpush1.msra.mxu0 %v1156
    %1163 = vmatprep.subr.mxu0 0.0
    %1164 = vmatpush1.msra.mxu0 %v1157
    %1165 = vmatprep.subr.mxu0 0.0
    %1166 = vmatpush1.msra.mxu0 %v1158
    %1167 = vmatprep.subr.mxu0 0.0
    %1168 = vmatpush1.msra.mxu0 0.0
    %1169 = vmatprep.subr.mxu0 0.0
    %1170 = vmatpush1.msra.mxu0 0.0
    %1171 = vmatprep.subr.mxu0 0.0
    %1172 = vmatpush1.msra.mxu0 0.0
    %1173 = vmatprep.subr.mxu0 0.0
    %1174 = vmatpush1.msra.mxu0 0.0
    %1175 = vmatprep.subr.mxu0 0.0
    %1176 = vmatpush1.msra.mxu0 0.0
    %1177 = vmatprep.subr.mxu0 0.0
    %1178 = vmatpush1.msra.mxu0 0.0
    %1179 = vmatprep.subr.mxu0 0.0
    %1180 = vmatpush1.msra.mxu0 0.0
    %1181 = vmatprep.subr.mxu0 0.0
    %1182 = vmatpush1.msra.mxu0 0.0
    %1183 = vmatprep.subr.mxu0 0.0
    %1184 = vmatpush1.msra.mxu0 0.0
    %1185 = vmatprep.subr.mxu0 0.0
    %1186 = vmatpush1.msra.mxu0 0.0
    %1187 = vmatprep.subr.mxu0 0.0
    %1188 = vmatpush1.msra.mxu0 0.0
    %1189 = vmatprep.subr.mxu0 0.0
    %1190 = vmatpush1.msra.mxu0 0.0
    %1191 = vmatprep.subr.mxu0 0.0
    %1192 = vmatpush1.msra.mxu0 0.0
    %1193 = vmatprep.subr.mxu0 0.0
    %1194 = vmatpush1.msra.mxu0 0.0
    %1195 = vmatprep.subr.mxu0 0.0
    %1196 = vmatpush1.msra.mxu0 0.0
    %1197 = vmatprep.subr.mxu0 0.0
    %1198 = vmatpush1.msra.mxu0 0.0
    %1199 = vmatprep.subr.mxu0 0.0
    %1200 = vmatpush1.msra.mxu0 0.0
    %1201 = vmatprep.subr.mxu0 0.0
    %1202 = vmatpush1.msra.mxu0 0.0
    %1203 = vmatprep.subr.mxu0 0.0
    %1204 = vmatpush1.msra.mxu0 0.0
    %1205 = vmatprep.subr.mxu0 0.0
    %1206 = vmatpush1.msra.mxu0 0.0
    %1207 = vmatprep.subr.mxu0 0.0
    %1208 = vmatpush1.msra.mxu0 0.0
    %1209 = vmatprep.subr.mxu0 0.0
    %1210 = vmatpush1.msra.mxu0 0.0
    %1211 = vmatprep.subr.mxu0 0.0
    %1212 = vmatpush1.msra.mxu0 0.0
    %1213 = vmatprep.subr.mxu0 0.0
    %1214 = vmatpush1.msra.mxu0 0.0
    %1215 = vmatprep.subr.mxu0 0.0
    %1216 = vmatpush1.msra.mxu0 0.0
    %1217 = vmatprep.subr.mxu0 0.0
    %1218 = vmatpush1.msra.mxu0 0.0
    %1219 = vmatprep.subr.mxu0 0.0
    %1220 = vmatpush1.msra.mxu0 0.0
    %1221 = vmatprep.subr.mxu0 0.0
    %1222 = vmatpush1.msra.mxu0 0.0
    %1223 = vmatprep.mubr.f32.mxu0 0.0
    %1224 = vmatmul.mubr.f32.gmra.mrb[0].mxu0 %v1083
    %v1225 = vpop.f32.mrb[0].mxu0
    %v1226 = vadd.f32 0.0, %v1225
    %v1227 = vpop.f32.mrb[0].mxu0
    %1228 = vdwg.mxu0
    %v1229 = vld [vmem:[#allocation16] sm:$0xff]
    %v1230 = vld [vmem:[#allocation16 + $0x8] sm:$0xff]
    %v1231 = vld [vmem:[#allocation16 + $0x10] sm:$0xff]
    %v1232 = vld [vmem:[#allocation16 + $0x18] sm:$0xff]
    %v1233 = vld [vmem:[#allocation21] sm:$0x1]
    %v1235 = vlaneseq
    %v1236 = vshrl.u32 %v1235, 7
    %v1237 = vsub.s32 0, %v1236
    %v1238 = vrot.slane %v1233, %v1237
    %1240 = vmatprep.subr.mxu0 0.0
    %1241 = vmatpush1.msra.mxu0 %v1229
    %1242 = vmatprep.subr.mxu0 0.0
    %1243 = vmatpush1.msra.mxu0 %v1230
    %1244 = vmatprep.subr.mxu0 0.0
    %1245 = vmatpush1.msra.mxu0 %v1231
    %1246 = vmatprep.subr.mxu0 0.0
    %1247 = vmatpush1.msra.mxu0 %v1232
    %1248 = vmatprep.subr.mxu0 0.0
    %1249 = vmatpush1.msra.mxu0 0.0
    %1250 = vmatprep.subr.mxu0 0.0
    %1251 = vmatpush1.msra.mxu0 0.0
    %1252 = vmatprep.subr.mxu0 0.0
    %1253 = vmatpush1.msra.mxu0 0.0
    %1254 = vmatprep.subr.mxu0 0.0
    %1255 = vmatpush1.msra.mxu0 0.0
    %1256 = vmatprep.subr.mxu0 0.0
    %1257 = vmatpush1.msra.mxu0 0.0
    %1258 = vmatprep.subr.mxu0 0.0
    %1259 = vmatpush1.msra.mxu0 0.0
    %1260 = vmatprep.subr.mxu0 0.0
    %1261 = vmatpush1.msra.mxu0 0.0
    %1262 = vmatprep.subr.mxu0 0.0
    %1263 = vmatpush1.msra.mxu0 0.0
    %1264 = vmatprep.subr.mxu0 0.0
    %1265 = vmatpush1.msra.mxu0 0.0
    %1266 = vmatprep.subr.mxu0 0.0
    %1267 = vmatpush1.msra.mxu0 0.0
    %1268 = vmatprep.subr.mxu0 0.0
    %1269 = vmatpush1.msra.mxu0 0.0
    %1270 = vmatprep.subr.mxu0 0.0
    %1271 = vmatpush1.msra.mxu0 0.0
    %1272 = vmatprep.subr.mxu0 0.0
    %1273 = vmatpush1.msra.mxu0 0.0
    %1274 = vmatprep.subr.mxu0 0.0
    %1275 = vmatpush1.msra.mxu0 0.0
    %1276 = vmatprep.subr.mxu0 0.0
    %1277 = vmatpush1.msra.mxu0 0.0
    %1278 = vmatprep.subr.mxu0 0.0
    %1279 = vmatpush1.msra.mxu0 0.0
    %1280 = vmatprep.subr.mxu0 0.0
    %1281 = vmatpush1.msra.mxu0 0.0
    %1282 = vmatprep.subr.mxu0 0.0
    %1283 = vmatpush1.msra.mxu0 0.0
    %1284 = vmatprep.subr.mxu0 0.0
    %1285 = vmatpush1.msra.mxu0 0.0
    %1286 = vmatprep.subr.mxu0 0.0
    %1287 = vmatpush1.msra.mxu0 0.0
    %1288 = vmatprep.subr.mxu0 0.0
    %1289 = vmatpush1.msra.mxu0 0.0
    %1290 = vmatprep.subr.mxu0 0.0
    %1291 = vmatpush1.msra.mxu0 0.0
    %1292 = vmatprep.subr.mxu0 0.0
    %1293 = vmatpush1.msra.mxu0 0.0
    %1294 = vmatprep.subr.mxu0 0.0
    %1295 = vmatpush1.msra.mxu0 0.0
    %1296 = vmatprep.subr.mxu0 0.0
    %1297 = vmatpush1.msra.mxu0 0.0
    %1298 = vmatprep.subr.mxu0 0.0
    %1299 = vmatpush1.msra.mxu0 0.0
    %1300 = vmatprep.subr.mxu0 0.0
    %1301 = vmatpush1.msra.mxu0 0.0
    %1302 = vmatprep.subr.mxu0 0.0
    %1303 = vmatpush1.msra.mxu0 0.0
    %1304 = vmatprep.mubr.f32.mxu0 0.0
    %1305 = vmatmul.mubr.f32.gmra.mrb[0].mxu0 %v1083
    %v1306 = vpop.f32.mrb[0].mxu0
    %v1307 = vadd.f32 %v1238, %v1306
    %v1308 = vpop.f32.mrb[0].mxu0
    %1309 = vdwg.mxu0
    %s1310 = scalar_lea.vmem [#allocation2], 16
    %v1311 = vld [vmem:[%s1310] sm:$0xff]
    %v1312 = vadd.f32 %v1311, %v1152
    %v1313 = vxor.u32 %v1312, 2147483648
    %v1314 = vmul.f32 %v1313, 1.442695
    %v1315 = vpow.pop %v1314
    %v1316 = vadd.f32 %v1315, 1.0
    %v1317 = vrcp.pop %v1316
    %v1318 = vmul.f32 1.0, %v1317
    %s1319 = scalar_lea.vmem [#allocation3], 16
    %v1320 = vld [vmem:[%s1319] sm:$0xff]
    %v1321 = vadd.f32 %v1320, %v1226
    %v1322 = vxor.u32 %v1321, 2147483648
    %v1323 = vmul.f32 %v1322, 1.442695
    %v1324 = vpow.pop %v1323
    %v1325 = vadd.f32 %v1324, 1.0
    %v1326 = vrcp.pop %v1325
    %v1327 = vmul.f32 1.0, %v1326
    %s1328 = scalar_lea.vmem [#allocation4], 16
    %v1329 = vld [vmem:[%s1328] sm:$0xff]
    %v1330 = vmul.f32 %v1318, %v1307
    %v1331 = vadd.f32 %v1329, %v1330
    %v1332 = vtanh.pop %v1331
    %v1333 = vsub.f32 1.0, %v1327
    %v1334 = vmul.f32 %v1333, %v1332
    %v1335 = vmul.f32 %v1327, %v1077
    %v1336 = vadd.f32 %v1334, %v1335
    %1337 = vst.msk [vmem:[#allocation5] sm:$0xff] %vm303, %v1336
    %s1338 = scalar_lea.vmem [#allocation6], 16
    %1339 = vst.msk [vmem:[%s1338] sm:$0xff] %vm303, %v1336
    %v1340 = vld [vmem:[#allocation5] sm:$0xff]
    %v1341 = vld [vmem:[#allocation13] sm:$0xff]
    %v1342 = vld [vmem:[#allocation13 + $0x8] sm:$0xff]
    %v1343 = vld [vmem:[#allocation13 + $0x10] sm:$0xff]
    %v1344 = vld [vmem:[#allocation13 + $0x18] sm:$0xff]
    %v1346 = vsel %vm303, %v1340, 0
    %1348 = vmatprep.subr.mxu0 0.0
    %1349 = vmatpush1.msra.mxu0 %v1341
    %1350 = vmatprep.subr.mxu0 0.0
    %1351 = vmatpush1.msra.mxu0 %v1342
    %1352 = vmatprep.subr.mxu0 0.0
    %1353 = vmatpush1.msra.mxu0 %v1343
    %1354 = vmatprep.subr.mxu0 0.0
    %1355 = vmatpush1.msra.mxu0 %v1344
    %1356 = vmatprep.subr.mxu0 0.0
    %1357 = vmatpush1.msra.mxu0 0.0
    %1358 = vmatprep.subr.mxu0 0.0
    %1359 = vmatpush1.msra.mxu0 0.0
    %1360 = vmatprep.subr.mxu0 0.0
    %1361 = vmatpush1.msra.mxu0 0.0
    %1362 = vmatprep.subr.mxu0 0.0
    %1363 = vmatpush1.msra.mxu0 0.0
    %1364 = vmatprep.subr.mxu0 0.0
    %1365 = vmatpush1.msra.mxu0 0.0
    %1366 = vmatprep.subr.mxu0 0.0
    %1367 = vmatpush1.msra.mxu0 0.0
    %1368 = vmatprep.subr.mxu0 0.0
    %1369 = vmatpush1.msra.mxu0 0.0
    %1370 = vmatprep.subr.mxu0 0.0
    %1371 = vmatpush1.msra.mxu0 0.0
    %1372 = vmatprep.subr.mxu0 0.0
    %1373 = vmatpush1.msra.mxu0 0.0
    %1374 = vmatprep.subr.mxu0 0.0
    %1375 = vmatpush1.msra.mxu0 0.0
    %1376 = vmatprep.subr.mxu0 0.0
    %1377 = vmatpush1.msra.mxu0 0.0
    %1378 = vmatprep.subr.mxu0 0.0
    %1379 = vmatpush1.msra.mxu0 0.0
    %1380 = vmatprep.subr.mxu0 0.0
    %1381 = vmatpush1.msra.mxu0 0.0
    %1382 = vmatprep.subr.mxu0 0.0
    %1383 = vmatpush1.msra.mxu0 0.0
    %1384 = vmatprep.subr.mxu0 0.0
    %1385 = vmatpush1.msra.mxu0 0.0
    %1386 = vmatprep.subr.mxu0 0.0
    %1387 = vmatpush1.msra.mxu0 0.0
    %1388 = vmatprep.subr.mxu0 0.0
    %1389 = vmatpush1.msra.mxu0 0.0
    %1390 = vmatprep.subr.mxu0 0.0
    %1391 = vmatpush1.msra.mxu0 0.0
    %1392 = vmatprep.subr.mxu0 0.0
    %1393 = vmatpush1.msra.mxu0 0.0
    %1394 = vmatprep.subr.mxu0 0.0
    %1395 = vmatpush1.msra.mxu0 0.0
    %1396 = vmatprep.subr.mxu0 0.0
    %1397 = vmatpush1.msra.mxu0 0.0
    %1398 = vmatprep.subr.mxu0 0.0
    %1399 = vmatpush1.msra.mxu0 0.0
    %1400 = vmatprep.subr.mxu0 0.0
    %1401 = vmatpush1.msra.mxu0 0.0
    %1402 = vmatprep.subr.mxu0 0.0
    %1403 = vmatpush1.msra.mxu0 0.0
    %1404 = vmatprep.subr.mxu0 0.0
    %1405 = vmatpush1.msra.mxu0 0.0
    %1406 = vmatprep.subr.mxu0 0.0
    %1407 = vmatpush1.msra.mxu0 0.0
    %1408 = vmatprep.subr.mxu0 0.0
    %1409 = vmatpush1.msra.mxu0 0.0
    %1410 = vmatprep.subr.mxu0 0.0
    %1411 = vmatpush1.msra.mxu0 0.0
    %1412 = vmatprep.mubr.f32.mxu0 0.0
    %1413 = vmatmul.mubr.f32.gmra.mrb[0].mxu0 %v1346
    %v1414 = vpop.f32.mrb[0].mxu0
    %v1415 = vadd.f32 0.0, %v1414
    %v1416 = vpop.f32.mrb[0].mxu0
    %1417 = vdwg.mxu0
    %v1418 = vld [vmem:[#allocation15] sm:$0xff]
    %v1419 = vld [vmem:[#allocation15 + $0x8] sm:$0xff]
    %v1420 = vld [vmem:[#allocation15 + $0x10] sm:$0xff]
    %v1421 = vld [vmem:[#allocation15 + $0x18] sm:$0xff]
    %1422 = vmatprep.subr.mxu0 0.0
    %1423 = vmatpush1.msra.mxu0 %v1418
    %1424 = vmatprep.subr.mxu0 0.0
    %1425 = vmatpush1.msra.mxu0 %v1419
    %1426 = vmatprep.subr.mxu0 0.0
    %1427 = vmatpush1.msra.mxu0 %v1420
    %1428 = vmatprep.subr.mxu0 0.0
    %1429 = vmatpush1.msra.mxu0 %v1421
    %1430 = vmatprep.subr.mxu0 0.0
    %1431 = vmatpush1.msra.mxu0 0.0
    %1432 = vmatprep.subr.mxu0 0.0
    %1433 = vmatpush1.msra.mxu0 0.0
    %1434 = vmatprep.subr.mxu0 0.0
    %1435 = vmatpush1.msra.mxu0 0.0
    %1436 = vmatprep.subr.mxu0 0.0
    %1437 = vmatpush1.msra.mxu0 0.0
    %1438 = vmatprep.subr.mxu0 0.0
    %1439 = vmatpush1.msra.mxu0 0.0
    %1440 = vmatprep.subr.mxu0 0.0
    %1441 = vmatpush1.msra.mxu0 0.0
    %1442 = vmatprep.subr.mxu0 0.0
    %1443 = vmatpush1.msra.mxu0 0.0
    %1444 = vmatprep.subr.mxu0 0.0
    %1445 = vmatpush1.msra.mxu0 0.0
    %1446 = vmatprep.subr.mxu0 0.0
    %1447 = vmatpush1.msra.mxu0 0.0
    %1448 = vmatprep.subr.mxu0 0.0
    %1449 = vmatpush1.msra.mxu0 0.0
    %1450 = vmatprep.subr.mxu0 0.0
    %1451 = vmatpush1.msra.mxu0 0.0
    %1452 = vmatprep.subr.mxu0 0.0
    %1453 = vmatpush1.msra.mxu0 0.0
    %1454 = vmatprep.subr.mxu0 0.0
    %1455 = vmatpush1.msra.mxu0 0.0
    %1456 = vmatprep.subr.mxu0 0.0
    %1457 = vmatpush1.msra.mxu0 0.0
    %1458 = vmatprep.subr.mxu0 0.0
    %1459 = vmatpush1.msra.mxu0 0.0
    %1460 = vmatprep.subr.mxu0 0.0
    %1461 = vmatpush1.msra.mxu0 0.0
    %1462 = vmatprep.subr.mxu0 0.0
    %1463 = vmatpush1.msra.mxu0 0.0
    %1464 = vmatprep.subr.mxu0 0.0
    %1465 = vmatpush1.msra.mxu0 0.0
    %1466 = vmatprep.subr.mxu0 0.0
    %1467 = vmatpush1.msra.mxu0 0.0
    %1468 = vmatprep.subr.mxu0 0.0
    %1469 = vmatpush1.msra.mxu0 0.0
    %1470 = vmatprep.subr.mxu0 0.0
    %1471 = vmatpush1.msra.mxu0 0.0
    %1472 = vmatprep.subr.mxu0 0.0
    %1473 = vmatpush1.msra.mxu0 0.0
    %1474 = vmatprep.subr.mxu0 0.0
    %1475 = vmatpush1.msra.mxu0 0.0
    %1476 = vmatprep.subr.mxu0 0.0
    %1477 = vmatpush1.msra.mxu0 0.0
    %1478 = vmatprep.subr.mxu0 0.0
    %1479 = vmatpush1.msra.mxu0 0.0
    %1480 = vmatprep.subr.mxu0 0.0
    %1481 = vmatpush1.msra.mxu0 0.0
    %1482 = vmatprep.subr.mxu0 0.0
    %1483 = vmatpush1.msra.mxu0 0.0
    %1484 = vmatprep.subr.mxu0 0.0
    %1485 = vmatpush1.msra.mxu0 0.0
    %1486 = vmatprep.mubr.f32.mxu0 0.0
    %1487 = vmatmul.mubr.f32.gmra.mrb[0].mxu0 %v1346
    %v1488 = vpop.f32.mrb[0].mxu0
    %v1489 = vadd.f32 0.0, %v1488
    %v1490 = vpop.f32.mrb[0].mxu0
    %1491 = vdwg.mxu0
    %v1492 = vld [vmem:[#allocation16] sm:$0xff]
    %v1493 = vld [vmem:[#allocation16 + $0x8] sm:$0xff]
    %v1494 = vld [vmem:[#allocation16 + $0x10] sm:$0xff]
    %v1495 = vld [vmem:[#allocation16 + $0x18] sm:$0xff]
    %v1496 = vld [vmem:[#allocation21] sm:$0x1]
    %v1498 = vlaneseq
    %v1499 = vshrl.u32 %v1498, 7
    %v1500 = vsub.s32 0, %v1499
    %v1501 = vrot.slane %v1496, %v1500
    %1503 = vmatprep.subr.mxu0 0.0
    %1504 = vmatpush1.msra.mxu0 %v1492
    %1505 = vmatprep.subr.mxu0 0.0
    %1506 = vmatpush1.msra.mxu0 %v1493
    %1507 = vmatprep.subr.mxu0 0.0
    %1508 = vmatpush1.msra.mxu0 %v1494
    %1509 = vmatprep.subr.mxu0 0.0
    %1510 = vmatpush1.msra.mxu0 %v1495
    %1511 = vmatprep.subr.mxu0 0.0
    %1512 = vmatpush1.msra.mxu0 0.0
    %1513 = vmatprep.subr.mxu0 0.0
    %1514 = vmatpush1.msra.mxu0 0.0
    %1515 = vmatprep.subr.mxu0 0.0
    %1516 = vmatpush1.msra.mxu0 0.0
    %1517 = vmatprep.subr.mxu0 0.0
    %1518 = vmatpush1.msra.mxu0 0.0
    %1519 = vmatprep.subr.mxu0 0.0
    %1520 = vmatpush1.msra.mxu0 0.0
    %1521 = vmatprep.subr.mxu0 0.0
    %1522 = vmatpush1.msra.mxu0 0.0
    %1523 = vmatprep.subr.mxu0 0.0
    %1524 = vmatpush1.msra.mxu0 0.0
    %1525 = vmatprep.subr.mxu0 0.0
    %1526 = vmatpush1.msra.mxu0 0.0
    %1527 = vmatprep.subr.mxu0 0.0
    %1528 = vmatpush1.msra.mxu0 0.0
    %1529 = vmatprep.subr.mxu0 0.0
    %1530 = vmatpush1.msra.mxu0 0.0
    %1531 = vmatprep.subr.mxu0 0.0
    %1532 = vmatpush1.msra.mxu0 0.0
    %1533 = vmatprep.subr.mxu0 0.0
    %1534 = vmatpush1.msra.mxu0 0.0
    %1535 = vmatprep.subr.mxu0 0.0
    %1536 = vmatpush1.msra.mxu0 0.0
    %1537 = vmatprep.subr.mxu0 0.0
    %1538 = vmatpush1.msra.mxu0 0.0
    %1539 = vmatprep.subr.mxu0 0.0
    %1540 = vmatpush1.msra.mxu0 0.0
    %1541 = vmatprep.subr.mxu0 0.0
    %1542 = vmatpush1.msra.mxu0 0.0
    %1543 = vmatprep.subr.mxu0 0.0
    %1544 = vmatpush1.msra.mxu0 0.0
    %1545 = vmatprep.subr.mxu0 0.0
    %1546 = vmatpush1.msra.mxu0 0.0
    %1547 = vmatprep.subr.mxu0 0.0
    %1548 = vmatpush1.msra.mxu0 0.0
    %1549 = vmatprep.subr.mxu0 0.0
    %1550 = vmatpush1.msra.mxu0 0.0
    %1551 = vmatprep.subr.mxu0 0.0
    %1552 = vmatpush1.msra.mxu0 0.0
    %1553 = vmatprep.subr.mxu0 0.0
    %1554 = vmatpush1.msra.mxu0 0.0
    %1555 = vmatprep.subr.mxu0 0.0
    %1556 = vmatpush1.msra.mxu0 0.0
    %1557 = vmatprep.subr.mxu0 0.0
    %1558 = vmatpush1.msra.mxu0 0.0
    %1559 = vmatprep.subr.mxu0 0.0
    %1560 = vmatpush1.msra.mxu0 0.0
    %1561 = vmatprep.subr.mxu0 0.0
    %1562 = vmatpush1.msra.mxu0 0.0
    %1563 = vmatprep.subr.mxu0 0.0
    %1564 = vmatpush1.msra.mxu0 0.0
    %1565 = vmatprep.subr.mxu0 0.0
    %1566 = vmatpush1.msra.mxu0 0.0
    %1567 = vmatprep.mubr.f32.mxu0 0.0
    %1568 = vmatmul.mubr.f32.gmra.mrb[0].mxu0 %v1346
    %v1569 = vpop.f32.mrb[0].mxu0
    %v1570 = vadd.f32 %v1501, %v1569
    %v1571 = vpop.f32.mrb[0].mxu0
    %1572 = vdwg.mxu0
    %s1573 = scalar_lea.vmem [#allocation2], 24
    %v1574 = vld [vmem:[%s1573] sm:$0xff]
    %v1575 = vadd.f32 %v1574, %v1415
    %v1576 = vxor.u32 %v1575, 2147483648
    %v1577 = vmul.f32 %v1576, 1.442695
    %v1578 = vpow.pop %v1577
    %v1579 = vadd.f32 %v1578, 1.0
    %v1580 = vrcp.pop %v1579
    %v1581 = vmul.f32 1.0, %v1580
    %s1582 = scalar_lea.vmem [#allocation3], 24
    %v1583 = vld [vmem:[%s1582] sm:$0xff]
    %v1584 = vadd.f32 %v1583, %v1489
    %v1585 = vxor.u32 %v1584, 2147483648
    %v1586 = vmul.f32 %v1585, 1.442695
    %v1587 = vpow.pop %v1586
    %v1588 = vadd.f32 %v1587, 1.0
    %v1589 = vrcp.pop %v1588
    %v1590 = vmul.f32 1.0, %v1589
    %s1591 = scalar_lea.vmem [#allocation4], 24
    %v1592 = vld [vmem:[%s1591] sm:$0xff]
    %v1593 = vmul.f32 %v1581, %v1570
    %v1594 = vadd.f32 %v1592, %v1593
    %v1595 = vtanh.pop %v1594
    %v1596 = vsub.f32 1.0, %v1590
    %v1597 = vmul.f32 %v1596, %v1595
    %v1598 = vmul.f32 %v1590, %v1340
    %v1599 = vadd.f32 %v1597, %v1598
    %1600 = vst.msk [vmem:[#allocation5] sm:$0xff] %vm303, %v1599
    %s1601 = scalar_lea.vmem [#allocation6], 24
    %1602 = vst.msk [vmem:[%s1601] sm:$0xff] %vm303, %v1599
    %v1603 = vld [vmem:[#allocation5] sm:$0xff]
    %v1604 = vld [vmem:[#allocation13] sm:$0xff]
    %v1605 = vld [vmem:[#allocation13 + $0x8] sm:$0xff]
    %v1606 = vld [vmem:[#allocation13 + $0x10] sm:$0xff]
    %v1607 = vld [vmem:[#allocation13 + $0x18] sm:$0xff]
    %v1609 = vsel %vm303, %v1603, 0
    %1611 = vmatprep.subr.mxu0 0.0
    %1612 = vmatpush1.msra.mxu0 %v1604
    %1613 = vmatprep.subr.mxu0 0.0
    %1614 = vmatpush1.msra.mxu0 %v1605
    %1615 = vmatprep.subr.mxu0 0.0
    %1616 = vmatpush1.msra.mxu0 %v1606
    %1617 = vmatprep.subr.mxu0 0.0
    %1618 = vmatpush1.msra.mxu0 %v1607
    %1619 = vmatprep.subr.mxu0 0.0
    %1620 = vmatpush1.msra.mxu0 0.0
    %1621 = vmatprep.subr.mxu0 0.0
    %1622 = vmatpush1.msra.mxu0 0.0
    %1623 = vmatprep.subr.mxu0 0.0
    %1624 = vmatpush1.msra.mxu0 0.0
    %1625 = vmatprep.subr.mxu0 0.0
    %1626 = vmatpush1.msra.mxu0 0.0
    %1627 = vmatprep.subr.mxu0 0.0
    %1628 = vmatpush1.msra.mxu0 0.0
    %1629 = vmatprep.subr.mxu0 0.0
    %1630 = vmatpush1.msra.mxu0 0.0
    %1631 = vmatprep.subr.mxu0 0.0
    %1632 = vmatpush1.msra.mxu0 0.0
    %1633 = vmatprep.subr.mxu0 0.0
    %1634 = vmatpush1.msra.mxu0 0.0
    %1635 = vmatprep.subr.mxu0 0.0
    %1636 = vmatpush1.msra.mxu0 0.0
    %1637 = vmatprep.subr.mxu0 0.0
    %1638 = vmatpush1.msra.mxu0 0.0
    %1639 = vmatprep.subr.mxu0 0.0
    %1640 = vmatpush1.msra.mxu0 0.0
    %1641 = vmatprep.subr.mxu0 0.0
    %1642 = vmatpush1.msra.mxu0 0.0
    %1643 = vmatprep.subr.mxu0 0.0
    %1644 = vmatpush1.msra.mxu0 0.0
    %1645 = vmatprep.subr.mxu0 0.0
    %1646 = vmatpush1.msra.mxu0 0.0
    %1647 = vmatprep.subr.mxu0 0.0
    %1648 = vmatpush1.msra.mxu0 0.0
    %1649 = vmatprep.subr.mxu0 0.0
    %1650 = vmatpush1.msra.mxu0 0.0
    %1651 = vmatprep.subr.mxu0 0.0
    %1652 = vmatpush1.msra.mxu0 0.0
    %1653 = vmatprep.subr.mxu0 0.0
    %1654 = vmatpush1.msra.mxu0 0.0
    %1655 = vmatprep.subr.mxu0 0.0
    %1656 = vmatpush1.msra.mxu0 0.0
    %1657 = vmatprep.subr.mxu0 0.0
    %1658 = vmatpush1.msra.mxu0 0.0
    %1659 = vmatprep.subr.mxu0 0.0
    %1660 = vmatpush1.msra.mxu0 0.0
    %1661 = vmatprep.subr.mxu0 0.0
    %1662 = vmatpush1.msra.mxu0 0.0
    %1663 = vmatprep.subr.mxu0 0.0
    %1664 = vmatpush1.msra.mxu0 0.0
    %1665 = vmatprep.subr.mxu0 0.0
    %1666 = vmatpush1.msra.mxu0 0.0
    %1667 = vmatprep.subr.mxu0 0.0
    %1668 = vmatpush1.msra.mxu0 0.0
    %1669 = vmatprep.subr.mxu0 0.0
    %1670 = vmatpush1.msra.mxu0 0.0
    %1671 = vmatprep.subr.mxu0 0.0
    %1672 = vmatpush1.msra.mxu0 0.0
    %1673 = vmatprep.subr.mxu0 0.0
    %1674 = vmatpush1.msra.mxu0 0.0
    %1675 = vmatprep.mubr.f32.mxu0 0.0
    %1676 = vmatmul.mubr.f32.gmra.mrb[0].mxu0 %v1609
    %v1677 = vpop.f32.mrb[0].mxu0
    %v1678 = vadd.f32 0.0, %v1677
    %v1679 = vpop.f32.mrb[0].mxu0
    %1680 = vdwg.mxu0
    %v1681 = vld [vmem:[#allocation15] sm:$0xff]
    %v1682 = vld [vmem:[#allocation15 + $0x8] sm:$0xff]
    %v1683 = vld [vmem:[#allocation15 + $0x10] sm:$0xff]
    %v1684 = vld [vmem:[#allocation15 + $0x18] sm:$0xff]
    %1685 = vmatprep.subr.mxu0 0.0
    %1686 = vmatpush1.msra.mxu0 %v1681
    %1687 = vmatprep.subr.mxu0 0.0
    %1688 = vmatpush1.msra.mxu0 %v1682
    %1689 = vmatprep.subr.mxu0 0.0
    %1690 = vmatpush1.msra.mxu0 %v1683
    %1691 = vmatprep.subr.mxu0 0.0
    %1692 = vmatpush1.msra.mxu0 %v1684
    %1693 = vmatprep.subr.mxu0 0.0
    %1694 = vmatpush1.msra.mxu0 0.0
    %1695 = vmatprep.subr.mxu0 0.0
    %1696 = vmatpush1.msra.mxu0 0.0
    %1697 = vmatprep.subr.mxu0 0.0
    %1698 = vmatpush1.msra.mxu0 0.0
    %1699 = vmatprep.subr.mxu0 0.0
    %1700 = vmatpush1.msra.mxu0 0.0
    %1701 = vmatprep.subr.mxu0 0.0
    %1702 = vmatpush1.msra.mxu0 0.0
    %1703 = vmatprep.subr.mxu0 0.0
    %1704 = vmatpush1.msra.mxu0 0.0
    %1705 = vmatprep.subr.mxu0 0.0
    %1706 = vmatpush1.msra.mxu0 0.0
    %1707 = vmatprep.subr.mxu0 0.0
    %1708 = vmatpush1.msra.mxu0 0.0
    %1709 = vmatprep.subr.mxu0 0.0
    %1710 = vmatpush1.msra.mxu0 0.0
    %1711 = vmatprep.subr.mxu0 0.0
    %1712 = vmatpush1.msra.mxu0 0.0
    %1713 = vmatprep.subr.mxu0 0.0
    %1714 = vmatpush1.msra.mxu0 0.0
    %1715 = vmatprep.subr.mxu0 0.0
    %1716 = vmatpush1.msra.mxu0 0.0
    %1717 = vmatprep.subr.mxu0 0.0
    %1718 = vmatpush1.msra.mxu0 0.0
    %1719 = vmatprep.subr.mxu0 0.0
    %1720 = vmatpush1.msra.mxu0 0.0
    %1721 = vmatprep.subr.mxu0 0.0
    %1722 = vmatpush1.msra.mxu0 0.0
    %1723 = vmatprep.subr.mxu0 0.0
    %1724 = vmatpush1.msra.mxu0 0.0
    %1725 = vmatprep.subr.mxu0 0.0
    %1726 = vmatpush1.msra.mxu0 0.0
    %1727 = vmatprep.subr.mxu0 0.0
    %1728 = vmatpush1.msra.mxu0 0.0
    %1729 = vmatprep.subr.mxu0 0.0
    %1730 = vmatpush1.msra.mxu0 0.0
    %1731 = vmatprep.subr.mxu0 0.0
    %1732 = vmatpush1.msra.mxu0 0.0
    %1733 = vmatprep.subr.mxu0 0.0
    %1734 = vmatpush1.msra.mxu0 0.0
    %1735 = vmatprep.subr.mxu0 0.0
    %1736 = vmatpush1.msra.mxu0 0.0
    %1737 = vmatprep.subr.mxu0 0.0
    %1738 = vmatpush1.msra.mxu0 0.0
    %1739 = vmatprep.subr.mxu0 0.0
    %1740 = vmatpush1.msra.mxu0 0.0
    %1741 = vmatprep.subr.mxu0 0.0
    %1742 = vmatpush1.msra.mxu0 0.0
    %1743 = vmatprep.subr.mxu0 0.0
    %1744 = vmatpush1.msra.mxu0 0.0
    %1745 = vmatprep.subr.mxu0 0.0
    %1746 = vmatpush1.msra.mxu0 0.0
    %1747 = vmatprep.subr.mxu0 0.0
    %1748 = vmatpush1.msra.mxu0 0.0
    %1749 = vmatprep.mubr.f32.mxu0 0.0
    %1750 = vmatmul.mubr.f32.gmra.mrb[0].mxu0 %v1609
    %v1751 = vpop.f32.mrb[0].mxu0
    %v1752 = vadd.f32 0.0, %v1751
    %v1753 = vpop.f32.mrb[0].mxu0
    %1754 = vdwg.mxu0
    %v1755 = vld [vmem:[#allocation16] sm:$0xff]
    %v1756 = vld [vmem:[#allocation16 + $0x8] sm:$0xff]
    %v1757 = vld [vmem:[#allocation16 + $0x10] sm:$0xff]
    %v1758 = vld [vmem:[#allocation16 + $0x18] sm:$0xff]
    %v1759 = vld [vmem:[#allocation21] sm:$0x1]
    %v1761 = vlaneseq
    %v1762 = vshrl.u32 %v1761, 7
    %v1763 = vsub.s32 0, %v1762
    %v1764 = vrot.slane %v1759, %v1763
    %1766 = vmatprep.subr.mxu0 0.0
    %1767 = vmatpush1.msra.mxu0 %v1755
    %1768 = vmatprep.subr.mxu0 0.0
    %1769 = vmatpush1.msra.mxu0 %v1756
    %1770 = vmatprep.subr.mxu0 0.0
    %1771 = vmatpush1.msra.mxu0 %v1757
    %1772 = vmatprep.subr.mxu0 0.0
    %1773 = vmatpush1.msra.mxu0 %v1758
    %1774 = vmatprep.subr.mxu0 0.0
    %1775 = vmatpush1.msra.mxu0 0.0
    %1776 = vmatprep.subr.mxu0 0.0
    %1777 = vmatpush1.msra.mxu0 0.0
    %1778 = vmatprep.subr.mxu0 0.0
    %1779 = vmatpush1.msra.mxu0 0.0
    %1780 = vmatprep.subr.mxu0 0.0
    %1781 = vmatpush1.msra.mxu0 0.0
    %1782 = vmatprep.subr.mxu0 0.0
    %1783 = vmatpush1.msra.mxu0 0.0
    %1784 = vmatprep.subr.mxu0 0.0
    %1785 = vmatpush1.msra.mxu0 0.0
    %1786 = vmatprep.subr.mxu0 0.0
    %1787 = vmatpush1.msra.mxu0 0.0
    %1788 = vmatprep.subr.mxu0 0.0
    %1789 = vmatpush1.msra.mxu0 0.0
    %1790 = vmatprep.subr.mxu0 0.0
    %1791 = vmatpush1.msra.mxu0 0.0
    %1792 = vmatprep.subr.mxu0 0.0
    %1793 = vmatpush1.msra.mxu0 0.0
    %1794 = vmatprep.subr.mxu0 0.0
    %1795 = vmatpush1.msra.mxu0 0.0
    %1796 = vmatprep.subr.mxu0 0.0
    %1797 = vmatpush1.msra.mxu0 0.0
    %1798 = vmatprep.subr.mxu0 0.0
    %1799 = vmatpush1.msra.mxu0 0.0
    %1800 = vmatprep.subr.mxu0 0.0
    %1801 = vmatpush1.msra.mxu0 0.0
    %1802 = vmatprep.subr.mxu0 0.0
    %1803 = vmatpush1.msra.mxu0 0.0
    %1804 = vmatprep.subr.mxu0 0.0
    %1805 = vmatpush1.msra.mxu0 0.0
    %1806 = vmatprep.subr.mxu0 0.0
    %1807 = vmatpush1.msra.mxu0 0.0
    %1808 = vmatprep.subr.mxu0 0.0
    %1809 = vmatpush1.msra.mxu0 0.0
    %1810 = vmatprep.subr.mxu0 0.0
    %1811 = vmatpush1.msra.mxu0 0.0
    %1812 = vmatprep.subr.mxu0 0.0
    %1813 = vmatpush1.msra.mxu0 0.0
    %1814 = vmatprep.subr.mxu0 0.0
    %1815 = vmatpush1.msra.mxu0 0.0
    %1816 = vmatprep.subr.mxu0 0.0
    %1817 = vmatpush1.msra.mxu0 0.0
    %1818 = vmatprep.subr.mxu0 0.0
    %1819 = vmatpush1.msra.mxu0 0.0
    %1820 = vmatprep.subr.mxu0 0.0
    %1821 = vmatpush1.msra.mxu0 0.0
    %1822 = vmatprep.subr.mxu0 0.0
    %1823 = vmatpush1.msra.mxu0 0.0
    %1824 = vmatprep.subr.mxu0 0.0
    %1825 = vmatpush1.msra.mxu0 0.0
    %1826 = vmatprep.subr.mxu0 0.0
    %1827 = vmatpush1.msra.mxu0 0.0
    %1828 = vmatprep.subr.mxu0 0.0
    %1829 = vmatpush1.msra.mxu0 0.0
    %1830 = vmatprep.mubr.f32.mxu0 0.0
    %1831 = vmatmul.mubr.f32.gmra.mrb[0].mxu0 %v1609
    %v1832 = vpop.f32.mrb[0].mxu0
    %v1833 = vadd.f32 %v1764, %v1832
    %v1834 = vpop.f32.mrb[0].mxu0
    %1835 = vdwg.mxu0
    %s1836 = scalar_lea.vmem [#allocation2], 32
    %v1837 = vld [vmem:[%s1836] sm:$0xff]
    %v1838 = vadd.f32 %v1837, %v1678
    %v1839 = vxor.u32 %v1838, 2147483648
    %v1840 = vmul.f32 %v1839, 1.442695
    %v1841 = vpow.pop %v1840
    %v1842 = vadd.f32 %v1841, 1.0
    %v1843 = vrcp.pop %v1842
    %v1844 = vmul.f32 1.0, %v1843
    %s1845 = scalar_lea.vmem [#allocation3], 32
    %v1846 = vld [vmem:[%s1845] sm:$0xff]
    %v1847 = vadd.f32 %v1846, %v1752
    %v1848 = vxor.u32 %v1847, 2147483648
    %v1849 = vmul.f32 %v1848, 1.442695
    %v1850 = vpow.pop %v1849
    %v1851 = vadd.f32 %v1850, 1.0
    %v1852 = vrcp.pop %v1851
    %v1853 = vmul.f32 1.0, %v1852
    %s1854 = scalar_lea.vmem [#allocation4], 32
    %v1855 = vld [vmem:[%s1854] sm:$0xff]
    %v1856 = vmul.f32 %v1844, %v1833
    %v1857 = vadd.f32 %v1855, %v1856
    %v1858 = vtanh.pop %v1857
    %v1859 = vsub.f32 1.0, %v1853
    %v1860 = vmul.f32 %v1859, %v1858
    %v1861 = vmul.f32 %v1853, %v1603
    %v1862 = vadd.f32 %v1860, %v1861
    %1863 = vst.msk [vmem:[#allocation5] sm:$0xff] %vm303, %v1862
    %s1864 = scalar_lea.vmem [#allocation6], 32
    %1865 = vst.msk [vmem:[%s1864] sm:$0xff] %vm303, %v1862
    %v1866 = vld [vmem:[#allocation5] sm:$0xff]
    %v1867 = vld [vmem:[#allocation13] sm:$0xff]
    %v1868 = vld [vmem:[#allocation13 + $0x8] sm:$0xff]
    %v1869 = vld [vmem:[#allocation13 + $0x10] sm:$0xff]
    %v1870 = vld [vmem:[#allocation13 + $0x18] sm:$0xff]
    %v1872 = vsel %vm303, %v1866, 0
    %1874 = vmatprep.subr.mxu0 0.0
    %1875 = vmatpush1.msra.mxu0 %v1867
    %1876 = vmatprep.subr.mxu0 0.0
    %1877 = vmatpush1.msra.mxu0 %v1868
    %1878 = vmatprep.subr.mxu0 0.0
    %1879 = vmatpush1.msra.mxu0 %v1869
    %1880 = vmatprep.subr.mxu0 0.0
    %1881 = vmatpush1.msra.mxu0 %v1870
    %1882 = vmatprep.subr.mxu0 0.0
    %1883 = vmatpush1.msra.mxu0 0.0
    %1884 = vmatprep.subr.mxu0 0.0
    %1885 = vmatpush1.msra.mxu0 0.0
    %1886 = vmatprep.subr.mxu0 0.0
    %1887 = vmatpush1.msra.mxu0 0.0
    %1888 = vmatprep.subr.mxu0 0.0
    %1889 = vmatpush1.msra.mxu0 0.0
    %1890 = vmatprep.subr.mxu0 0.0
    %1891 = vmatpush1.msra.mxu0 0.0
    %1892 = vmatprep.subr.mxu0 0.0
    %1893 = vmatpush1.msra.mxu0 0.0
    %1894 = vmatprep.subr.mxu0 0.0
    %1895 = vmatpush1.msra.mxu0 0.0
    %1896 = vmatprep.subr.mxu0 0.0
    %1897 = vmatpush1.msra.mxu0 0.0
    %1898 = vmatprep.subr.mxu0 0.0
    %1899 = vmatpush1.msra.mxu0 0.0
    %1900 = vmatprep.subr.mxu0 0.0
    %1901 = vmatpush1.msra.mxu0 0.0
    %1902 = vmatprep.subr.mxu0 0.0
    %1903 = vmatpush1.msra.mxu0 0.0
    %1904 = vmatprep.subr.mxu0 0.0
    %1905 = vmatpush1.msra.mxu0 0.0
    %1906 = vmatprep.subr.mxu0 0.0
    %1907 = vmatpush1.msra.mxu0 0.0
    %1908 = vmatprep.subr.mxu0 0.0
    %1909 = vmatpush1.msra.mxu0 0.0
    %1910 = vmatprep.subr.mxu0 0.0
    %1911 = vmatpush1.msra.mxu0 0.0
    %1912 = vmatprep.subr.mxu0 0.0
    %1913 = vmatpush1.msra.mxu0 0.0
    %1914 = vmatprep.subr.mxu0 0.0
    %1915 = vmatpush1.msra.mxu0 0.0
    %1916 = vmatprep.subr.mxu0 0.0
    %1917 = vmatpush1.msra.mxu0 0.0
    %1918 = vmatprep.subr.mxu0 0.0
    %1919 = vmatpush1.msra.mxu0 0.0
    %1920 = vmatprep.subr.mxu0 0.0
    %1921 = vmatpush1.msra.mxu0 0.0
    %1922 = vmatprep.subr.mxu0 0.0
    %1923 = vmatpush1.msra.mxu0 0.0
    %1924 = vmatprep.subr.mxu0 0.0
    %1925 = vmatpush1.msra.mxu0 0.0
    %1926 = vmatprep.subr.mxu0 0.0
    %1927 = vmatpush1.msra.mxu0 0.0
    %1928 = vmatprep.subr.mxu0 0.0
    %1929 = vmatpush1.msra.mxu0 0.0
    %1930 = vmatprep.subr.mxu0 0.0
    %1931 = vmatpush1.msra.mxu0 0.0
    %1932 = vmatprep.subr.mxu0 0.0
    %1933 = vmatpush1.msra.mxu0 0.0
    %1934 = vmatprep.subr.mxu0 0.0
    %1935 = vmatpush1.msra.mxu0 0.0
    %1936 = vmatprep.subr.mxu0 0.0
    %1937 = vmatpush1.msra.mxu0 0.0
    %1938 = vmatprep.mubr.f32.mxu0 0.0
    %1939 = vmatmul.mubr.f32.gmra.mrb[0].mxu0 %v1872
    %v1940 = vpop.f32.mrb[0].mxu0
    %v1941 = vadd.f32 0.0, %v1940
    %v1942 = vpop.f32.mrb[0].mxu0
    %1943 = vdwg.mxu0
    %v1944 = vld [vmem:[#allocation15] sm:$0xff]
    %v1945 = vld [vmem:[#allocation15 + $0x8] sm:$0xff]
    %v1946 = vld [vmem:[#allocation15 + $0x10] sm:$0xff]
    %v1947 = vld [vmem:[#allocation15 + $0x18] sm:$0xff]
    %1948 = vmatprep.subr.mxu0 0.0
    %1949 = vmatpush1.msra.mxu0 %v1944
    %1950 = vmatprep.subr.mxu0 0.0
    %1951 = vmatpush1.msra.mxu0 %v1945
    %1952 = vmatprep.subr.mxu0 0.0
    %1953 = vmatpush1.msra.mxu0 %v1946
    %1954 = vmatprep.subr.mxu0 0.0
    %1955 = vmatpush1.msra.mxu0 %v1947
    %1956 = vmatprep.subr.mxu0 0.0
    %1957 = vmatpush1.msra.mxu0 0.0
    %1958 = vmatprep.subr.mxu0 0.0
    %1959 = vmatpush1.msra.mxu0 0.0
    %1960 = vmatprep.subr.mxu0 0.0
    %1961 = vmatpush1.msra.mxu0 0.0
    %1962 = vmatprep.subr.mxu0 0.0
    %1963 = vmatpush1.msra.mxu0 0.0
    %1964 = vmatprep.subr.mxu0 0.0
    %1965 = vmatpush1.msra.mxu0 0.0
    %1966 = vmatprep.subr.mxu0 0.0
    %1967 = vmatpush1.msra.mxu0 0.0
    %1968 = vmatprep.subr.mxu0 0.0
    %1969 = vmatpush1.msra.mxu0 0.0
    %1970 = vmatprep.subr.mxu0 0.0
    %1971 = vmatpush1.msra.mxu0 0.0
    %1972 = vmatprep.subr.mxu0 0.0
    %1973 = vmatpush1.msra.mxu0 0.0
    %1974 = vmatprep.subr.mxu0 0.0
    %1975 = vmatpush1.msra.mxu0 0.0
    %1976 = vmatprep.subr.mxu0 0.0
    %1977 = vmatpush1.msra.mxu0 0.0
    %1978 = vmatprep.subr.mxu0 0.0
    %1979 = vmatpush1.msra.mxu0 0.0
    %1980 = vmatprep.subr.mxu0 0.0
    %1981 = vmatpush1.msra.mxu0 0.0
    %1982 = vmatprep.subr.mxu0 0.0
    %1983 = vmatpush1.msra.mxu0 0.0
    %1984 = vmatprep.subr.mxu0 0.0
    %1985 = vmatpush1.msra.mxu0 0.0
    %1986 = vmatprep.subr.mxu0 0.0
    %1987 = vmatpush1.msra.mxu0 0.0
    %1988 = vmatprep.subr.mxu0 0.0
    %1989 = vmatpush1.msra.mxu0 0.0
    %1990 = vmatprep.subr.mxu0 0.0
    %1991 = vmatpush1.msra.mxu0 0.0
    %1992 = vmatprep.subr.mxu0 0.0
    %1993 = vmatpush1.msra.mxu0 0.0
    %1994 = vmatprep.subr.mxu0 0.0
    %1995 = vmatpush1.msra.mxu0 0.0
    %1996 = vmatprep.subr.mxu0 0.0
    %1997 = vmatpush1.msra.mxu0 0.0
    %1998 = vmatprep.subr.mxu0 0.0
    %1999 = vmatpush1.msra.mxu0 0.0
    %2000 = vmatprep.subr.mxu0 0.0
    %2001 = vmatpush1.msra.mxu0 0.0
    %2002 = vmatprep.subr.mxu0 0.0
    %2003 = vmatpush1.msra.mxu0 0.0
    %2004 = vmatprep.subr.mxu0 0.0
    %2005 = vmatpush1.msra.mxu0 0.0
    %2006 = vmatprep.subr.mxu0 0.0
    %2007 = vmatpush1.msra.mxu0 0.0
    %2008 = vmatprep.subr.mxu0 0.0
    %2009 = vmatpush1.msra.mxu0 0.0
    %2010 = vmatprep.subr.mxu0 0.0
    %2011 = vmatpush1.msra.mxu0 0.0
    %2012 = vmatprep.mubr.f32.mxu0 0.0
    %2013 = vmatmul.mubr.f32.gmra.mrb[0].mxu0 %v1872
    %v2014 = vpop.f32.mrb[0].mxu0
    %v2015 = vadd.f32 0.0, %v2014
    %v2016 = vpop.f32.mrb[0].mxu0
    %2017 = vdwg.mxu0
    %v2018 = vld [vmem:[#allocation16] sm:$0xff]
    %v2019 = vld [vmem:[#allocation16 + $0x8] sm:$0xff]
    %v2020 = vld [vmem:[#allocation16 + $0x10] sm:$0xff]
    %v2021 = vld [vmem:[#allocation16 + $0x18] sm:$0xff]
    %v2022 = vld [vmem:[#allocation21] sm:$0x1]
    %v2024 = vlaneseq
    %v2025 = vshrl.u32 %v2024, 7
    %v2026 = vsub.s32 0, %v2025
    %v2027 = vrot.slane %v2022, %v2026
    %2029 = vmatprep.subr.mxu0 0.0
    %2030 = vmatpush1.msra.mxu0 %v2018
    %2031 = vmatprep.subr.mxu0 0.0
    %2032 = vmatpush1.msra.mxu0 %v2019
    %2033 = vmatprep.subr.mxu0 0.0
    %2034 = vmatpush1.msra.mxu0 %v2020
    %2035 = vmatprep.subr.mxu0 0.0
    %2036 = vmatpush1.msra.mxu0 %v2021
    %2037 = vmatprep.subr.mxu0 0.0
    %2038 = vmatpush1.msra.mxu0 0.0
    %2039 = vmatprep.subr.mxu0 0.0
    %2040 = vmatpush1.msra.mxu0 0.0
    %2041 = vmatprep.subr.mxu0 0.0
    %2042 = vmatpush1.msra.mxu0 0.0
    %2043 = vmatprep.subr.mxu0 0.0
    %2044 = vmatpush1.msra.mxu0 0.0
    %2045 = vmatprep.subr.mxu0 0.0
    %2046 = vmatpush1.msra.mxu0 0.0
    %2047 = vmatprep.subr.mxu0 0.0
    %2048 = vmatpush1.msra.mxu0 0.0
    %2049 = vmatprep.subr.mxu0 0.0
    %2050 = vmatpush1.msra.mxu0 0.0
    %2051 = vmatprep.subr.mxu0 0.0
    %2052 = vmatpush1.msra.mxu0 0.0
    %2053 = vmatprep.subr.mxu0 0.0
    %2054 = vmatpush1.msra.mxu0 0.0
    %2055 = vmatprep.subr.mxu0 0.0
    %2056 = vmatpush1.msra.mxu0 0.0
    %2057 = vmatprep.subr.mxu0 0.0
    %2058 = vmatpush1.msra.mxu0 0.0
    %2059 = vmatprep.subr.mxu0 0.0
    %2060 = vmatpush1.msra.mxu0 0.0
    %2061 = vmatprep.subr.mxu0 0.0
    %2062 = vmatpush1.msra.mxu0 0.0
    %2063 = vmatprep.subr.mxu0 0.0
    %2064 = vmatpush1.msra.mxu0 0.0
    %2065 = vmatprep.subr.mxu0 0.0
    %2066 = vmatpush1.msra.mxu0 0.0
    %2067 = vmatprep.subr.mxu0 0.0
    %2068 = vmatpush1.msra.mxu0 0.0
    %2069 = vmatprep.subr.mxu0 0.0
    %2070 = vmatpush1.msra.mxu0 0.0
    %2071 = vmatprep.subr.mxu0 0.0
    %2072 = vmatpush1.msra.mxu0 0.0
    %2073 = vmatprep.subr.mxu0 0.0
    %2074 = vmatpush1.msra.mxu0 0.0
    %2075 = vmatprep.subr.mxu0 0.0
    %2076 = vmatpush1.msra.mxu0 0.0
    %2077 = vmatprep.subr.mxu0 0.0
    %2078 = vmatpush1.msra.mxu0 0.0
    %2079 = vmatprep.subr.mxu0 0.0
    %2080 = vmatpush1.msra.mxu0 0.0
    %2081 = vmatprep.subr.mxu0 0.0
    %2082 = vmatpush1.msra.mxu0 0.0
    %2083 = vmatprep.subr.mxu0 0.0
    %2084 = vmatpush1.msra.mxu0 0.0
    %2085 = vmatprep.subr.mxu0 0.0
    %2086 = vmatpush1.msra.mxu0 0.0
    %2087 = vmatprep.subr.mxu0 0.0
    %2088 = vmatpush1.msra.mxu0 0.0
    %2089 = vmatprep.subr.mxu0 0.0
    %2090 = vmatpush1.msra.mxu0 0.0
    %2091 = vmatprep.subr.mxu0 0.0
    %2092 = vmatpush1.msra.mxu0 0.0
    %2093 = vmatprep.mubr.f32.mxu0 0.0
    %2094 = vmatmul.mubr.f32.gmra.mrb[0].mxu0 %v1872
    %v2095 = vpop.f32.mrb[0].mxu0
    %v2096 = vadd.f32 %v2027, %v2095
    %v2097 = vpop.f32.mrb[0].mxu0
    %2098 = vdwg.mxu0
    %s2099 = scalar_lea.vmem [#allocation2], 40
    %v2100 = vld [vmem:[%s2099] sm:$0xff]
    %v2101 = vadd.f32 %v2100, %v1941
    %v2102 = vxor.u32 %v2101, 2147483648
    %v2103 = vmul.f32 %v2102, 1.442695
    %v2104 = vpow.pop %v2103
    %v2105 = vadd.f32 %v2104, 1.0
    %v2106 = vrcp.pop %v2105
    %v2107 = vmul.f32 1.0, %v2106
    %s2108 = scalar_lea.vmem [#allocation3], 40
    %v2109 = vld [vmem:[%s2108] sm:$0xff]
    %v2110 = vadd.f32 %v2109, %v2015
    %v2111 = vxor.u32 %v2110, 2147483648
    %v2112 = vmul.f32 %v2111, 1.442695
    %v2113 = vpow.pop %v2112
    %v2114 = vadd.f32 %v2113, 1.0
    %v2115 = vrcp.pop %v2114
    %v2116 = vmul.f32 1.0, %v2115
    %s2117 = scalar_lea.vmem [#allocation4], 40
    %v2118 = vld [vmem:[%s2117] sm:$0xff]
    %v2119 = vmul.f32 %v2107, %v2096
    %v2120 = vadd.f32 %v2118, %v2119
    %v2121 = vtanh.pop %v2120
    %v2122 = vsub.f32 1.0, %v2116
    %v2123 = vmul.f32 %v2122, %v2121
    %v2124 = vmul.f32 %v2116, %v1866
    %v2125 = vadd.f32 %v2123, %v2124
    %2126 = vst.msk [vmem:[#allocation5] sm:$0xff] %vm303, %v2125
    %s2127 = scalar_lea.vmem [#allocation6], 40
    %2128 = vst.msk [vmem:[%s2127] sm:$0xff] %vm303, %v2125
    %v2129 = vld [vmem:[#allocation5] sm:$0xff]
    %v2130 = vld [vmem:[#allocation13] sm:$0xff]
    %v2131 = vld [vmem:[#allocation13 + $0x8] sm:$0xff]
    %v2132 = vld [vmem:[#allocation13 + $0x10] sm:$0xff]
    %v2133 = vld [vmem:[#allocation13 + $0x18] sm:$0xff]
    %v2135 = vsel %vm303, %v2129, 0
    %2137 = vmatprep.subr.mxu0 0.0
    %2138 = vmatpush1.msra.mxu0 %v2130
    %2139 = vmatprep.subr.mxu0 0.0
    %2140 = vmatpush1.msra.mxu0 %v2131
    %2141 = vmatprep.subr.mxu0 0.0
    %2142 = vmatpush1.msra.mxu0 %v2132
    %2143 = vmatprep.subr.mxu0 0.0
    %2144 = vmatpush1.msra.mxu0 %v2133
    %2145 = vmatprep.subr.mxu0 0.0
    %2146 = vmatpush1.msra.mxu0 0.0
    %2147 = vmatprep.subr.mxu0 0.0
    %2148 = vmatpush1.msra.mxu0 0.0
    %2149 = vmatprep.subr.mxu0 0.0
    %2150 = vmatpush1.msra.mxu0 0.0
    %2151 = vmatprep.subr.mxu0 0.0
    %2152 = vmatpush1.msra.mxu0 0.0
    %2153 = vmatprep.subr.mxu0 0.0
    %2154 = vmatpush1.msra.mxu0 0.0
    %2155 = vmatprep.subr.mxu0 0.0
    %2156 = vmatpush1.msra.mxu0 0.0
    %2157 = vmatprep.subr.mxu0 0.0
    %2158 = vmatpush1.msra.mxu0 0.0
    %2159 = vmatprep.subr.mxu0 0.0
    %2160 = vmatpush1.msra.mxu0 0.0
    %2161 = vmatprep.subr.mxu0 0.0
    %2162 = vmatpush1.msra.mxu0 0.0
    %2163 = vmatprep.subr.mxu0 0.0
    %2164 = vmatpush1.msra.mxu0 0.0
    %2165 = vmatprep.subr.mxu0 0.0
    %2166 = vmatpush1.msra.mxu0 0.0
    %2167 = vmatprep.subr.mxu0 0.0
    %2168 = vmatpush1.msra.mxu0 0.0
    %2169 = vmatprep.subr.mxu0 0.0
    %2170 = vmatpush1.msra.mxu0 0.0
    %2171 = vmatprep.subr.mxu0 0.0
    %2172 = vmatpush1.msra.mxu0 0.0
    %2173 = vmatprep.subr.mxu0 0.0
    %2174 = vmatpush1.msra.mxu0 0.0
    %2175 = vmatprep.subr.mxu0 0.0
    %2176 = vmatpush1.msra.mxu0 0.0
    %2177 = vmatprep.subr.mxu0 0.0
    %2178 = vmatpush1.msra.mxu0 0.0
    %2179 = vmatprep.subr.mxu0 0.0
    %2180 = vmatpush1.msra.mxu0 0.0
    %2181 = vmatprep.subr.mxu0 0.0
    %2182 = vmatpush1.msra.mxu0 0.0
    %2183 = vmatprep.subr.mxu0 0.0
    %2184 = vmatpush1.msra.mxu0 0.0
    %2185 = vmatprep.subr.mxu0 0.0
    %2186 = vmatpush1.msra.mxu0 0.0
    %2187 = vmatprep.subr.mxu0 0.0
    %2188 = vmatpush1.msra.mxu0 0.0
    %2189 = vmatprep.subr.mxu0 0.0
    %2190 = vmatpush1.msra.mxu0 0.0
    %2191 = vmatprep.subr.mxu0 0.0
    %2192 = vmatpush1.msra.mxu0 0.0
    %2193 = vmatprep.subr.mxu0 0.0
    %2194 = vmatpush1.msra.mxu0 0.0
    %2195 = vmatprep.subr.mxu0 0.0
    %2196 = vmatpush1.msra.mxu0 0.0
    %2197 = vmatprep.subr.mxu0 0.0
    %2198 = vmatpush1.msra.mxu0 0.0
    %2199 = vmatprep.subr.mxu0 0.0
    %2200 = vmatpush1.msra.mxu0 0.0
    %2201 = vmatprep.mubr.f32.mxu0 0.0
    %2202 = vmatmul.mubr.f32.gmra.mrb[0].mxu0 %v2135
    %v2203 = vpop.f32.mrb[0].mxu0
    %v2204 = vadd.f32 0.0, %v2203
    %v2205 = vpop.f32.mrb[0].mxu0
    %2206 = vdwg.mxu0
    %v2207 = vld [vmem:[#allocation15] sm:$0xff]
    %v2208 = vld [vmem:[#allocation15 + $0x8] sm:$0xff]
    %v2209 = vld [vmem:[#allocation15 + $0x10] sm:$0xff]
    %v2210 = vld [vmem:[#allocation15 + $0x18] sm:$0xff]
    %2211 = vmatprep.subr.mxu0 0.0
    %2212 = vmatpush1.msra.mxu0 %v2207
    %2213 = vmatprep.subr.mxu0 0.0
    %2214 = vmatpush1.msra.mxu0 %v2208
    %2215 = vmatprep.subr.mxu0 0.0
    %2216 = vmatpush1.msra.mxu0 %v2209
    %2217 = vmatprep.subr.mxu0 0.0
    %2218 = vmatpush1.msra.mxu0 %v2210
    %2219 = vmatprep.subr.mxu0 0.0
    %2220 = vmatpush1.msra.mxu0 0.0
    %2221 = vmatprep.subr.mxu0 0.0
    %2222 = vmatpush1.msra.mxu0 0.0
    %2223 = vmatprep.subr.mxu0 0.0
    %2224 = vmatpush1.msra.mxu0 0.0
    %2225 = vmatprep.subr.mxu0 0.0
    %2226 = vmatpush1.msra.mxu0 0.0
    %2227 = vmatprep.subr.mxu0 0.0
    %2228 = vmatpush1.msra.mxu0 0.0
    %2229 = vmatprep.subr.mxu0 0.0
    %2230 = vmatpush1.msra.mxu0 0.0
    %2231 = vmatprep.subr.mxu0 0.0
    %2232 = vmatpush1.msra.mxu0 0.0
    %2233 = vmatprep.subr.mxu0 0.0
    %2234 = vmatpush1.msra.mxu0 0.0
    %2235 = vmatprep.subr.mxu0 0.0
    %2236 = vmatpush1.msra.mxu0 0.0
    %2237 = vmatprep.subr.mxu0 0.0
    %2238 = vmatpush1.msra.mxu0 0.0
    %2239 = vmatprep.subr.mxu0 0.0
    %2240 = vmatpush1.msra.mxu0 0.0
    %2241 = vmatprep.subr.mxu0 0.0
    %2242 = vmatpush1.msra.mxu0 0.0
    %2243 = vmatprep.subr.mxu0 0.0
    %2244 = vmatpush1.msra.mxu0 0.0
    %2245 = vmatprep.subr.mxu0 0.0
    %2246 = vmatpush1.msra.mxu0 0.0
    %2247 = vmatprep.subr.mxu0 0.0
    %2248 = vmatpush1.msra.mxu0 0.0
    %2249 = vmatprep.subr.mxu0 0.0
    %2250 = vmatpush1.msra.mxu0 0.0
    %2251 = vmatprep.subr.mxu0 0.0
    %2252 = vmatpush1.msra.mxu0 0.0
    %2253 = vmatprep.subr.mxu0 0.0
    %2254 = vmatpush1.msra.mxu0 0.0
    %2255 = vmatprep.subr.mxu0 0.0
    %2256 = vmatpush1.msra.mxu0 0.0
    %2257 = vmatprep.subr.mxu0 0.0
    %2258 = vmatpush1.msra.mxu0 0.0
    %2259 = vmatprep.subr.mxu0 0.0
    %2260 = vmatpush1.msra.mxu0 0.0
    %2261 = vmatprep.subr.mxu0 0.0
    %2262 = vmatpush1.msra.mxu0 0.0
    %2263 = vmatprep.subr.mxu0 0.0
    %2264 = vmatpush1.msra.mxu0 0.0
    %2265 = vmatprep.subr.mxu0 0.0
    %2266 = vmatpush1.msra.mxu0 0.0
    %2267 = vmatprep.subr.mxu0 0.0
    %2268 = vmatpush1.msra.mxu0 0.0
    %2269 = vmatprep.subr.mxu0 0.0
    %2270 = vmatpush1.msra.mxu0 0.0
    %2271 = vmatprep.subr.mxu0 0.0
    %2272 = vmatpush1.msra.mxu0 0.0
    %2273 = vmatprep.subr.mxu0 0.0
    %2274 = vmatpush1.msra.mxu0 0.0
    %2275 = vmatprep.mubr.f32.mxu0 0.0
    %2276 = vmatmul.mubr.f32.gmra.mrb[0].mxu0 %v2135
    %v2277 = vpop.f32.mrb[0].mxu0
    %v2278 = vadd.f32 0.0, %v2277
    %v2279 = vpop.f32.mrb[0].mxu0
    %2280 = vdwg.mxu0
    %v2281 = vld [vmem:[#allocation16] sm:$0xff]
    %v2282 = vld [vmem:[#allocation16 + $0x8] sm:$0xff]
    %v2283 = vld [vmem:[#allocation16 + $0x10] sm:$0xff]
    %v2284 = vld [vmem:[#allocation16 + $0x18] sm:$0xff]
    %v2285 = vld [vmem:[#allocation21] sm:$0x1]
    %v2287 = vlaneseq
    %v2288 = vshrl.u32 %v2287, 7
    %v2289 = vsub.s32 0, %v2288
    %v2290 = vrot.slane %v2285, %v2289
    %2292 = vmatprep.subr.mxu0 0.0
    %2293 = vmatpush1.msra.mxu0 %v2281
    %2294 = vmatprep.subr.mxu0 0.0
    %2295 = vmatpush1.msra.mxu0 %v2282
    %2296 = vmatprep.subr.mxu0 0.0
    %2297 = vmatpush1.msra.mxu0 %v2283
    %2298 = vmatprep.subr.mxu0 0.0
    %2299 = vmatpush1.msra.mxu0 %v2284
    %2300 = vmatprep.subr.mxu0 0.0
    %2301 = vmatpush1.msra.mxu0 0.0
    %2302 = vmatprep.subr.mxu0 0.0
    %2303 = vmatpush1.msra.mxu0 0.0
    %2304 = vmatprep.subr.mxu0 0.0
    %2305 = vmatpush1.msra.mxu0 0.0
    %2306 = vmatprep.subr.mxu0 0.0
    %2307 = vmatpush1.msra.mxu0 0.0
    %2308 = vmatprep.subr.mxu0 0.0
    %2309 = vmatpush1.msra.mxu0 0.0
    %2310 = vmatprep.subr.mxu0 0.0
    %2311 = vmatpush1.msra.mxu0 0.0
    %2312 = vmatprep.subr.mxu0 0.0
    %2313 = vmatpush1.msra.mxu0 0.0
    %2314 = vmatprep.subr.mxu0 0.0
    %2315 = vmatpush1.msra.mxu0 0.0
    %2316 = vmatprep.subr.mxu0 0.0
    %2317 = vmatpush1.msra.mxu0 0.0
    %2318 = vmatprep.subr.mxu0 0.0
    %2319 = vmatpush1.msra.mxu0 0.0
    %2320 = vmatprep.subr.mxu0 0.0
    %2321 = vmatpush1.msra.mxu0 0.0
    %2322 = vmatprep.subr.mxu0 0.0
    %2323 = vmatpush1.msra.mxu0 0.0
    %2324 = vmatprep.subr.mxu0 0.0
    %2325 = vmatpush1.msra.mxu0 0.0
    %2326 = vmatprep.subr.mxu0 0.0
    %2327 = vmatpush1.msra.mxu0 0.0
    %2328 = vmatprep.subr.mxu0 0.0
    %2329 = vmatpush1.msra.mxu0 0.0
    %2330 = vmatprep.subr.mxu0 0.0
    %2331 = vmatpush1.msra.mxu0 0.0
    %2332 = vmatprep.subr.mxu0 0.0
    %2333 = vmatpush1.msra.mxu0 0.0
    %2334 = vmatprep.subr.mxu0 0.0
    %2335 = vmatpush1.msra.mxu0 0.0
    %2336 = vmatprep.subr.mxu0 0.0
    %2337 = vmatpush1.msra.mxu0 0.0
    %2338 = vmatprep.subr.mxu0 0.0
    %2339 = vmatpush1.msra.mxu0 0.0
    %2340 = vmatprep.subr.mxu0 0.0
    %2341 = vmatpush1.msra.mxu0 0.0
    %2342 = vmatprep.subr.mxu0 0.0
    %2343 = vmatpush1.msra.mxu0 0.0
    %2344 = vmatprep.subr.mxu0 0.0
    %2345 = vmatpush1.msra.mxu0 0.0
    %2346 = vmatprep.subr.mxu0 0.0
    %2347 = vmatpush1.msra.mxu0 0.0
    %2348 = vmatprep.subr.mxu0 0.0
    %2349 = vmatpush1.msra.mxu0 0.0
    %2350 = vmatprep.subr.mxu0 0.0
    %2351 = vmatpush1.msra.mxu0 0.0
    %2352 = vmatprep.subr.mxu0 0.0
    %2353 = vmatpush1.msra.mxu0 0.0
    %2354 = vmatprep.subr.mxu0 0.0
    %2355 = vmatpush1.msra.mxu0 0.0
    %2356 = vmatprep.mubr.f32.mxu0 0.0
    %2357 = vmatmul.mubr.f32.gmra.mrb[0].mxu0 %v2135
    %v2358 = vpop.f32.mrb[0].mxu0
    %v2359 = vadd.f32 %v2290, %v2358
    %v2360 = vpop.f32.mrb[0].mxu0
    %2361 = vdwg.mxu0
    %s2362 = scalar_lea.vmem [#allocation2], 48
    %v2363 = vld [vmem:[%s2362] sm:$0xff]
    %v2364 = vadd.f32 %v2363, %v2204
    %v2365 = vxor.u32 %v2364, 2147483648
    %v2366 = vmul.f32 %v2365, 1.442695
    %v2367 = vpow.pop %v2366
    %v2368 = vadd.f32 %v2367, 1.0
    %v2369 = vrcp.pop %v2368
    %v2370 = vmul.f32 1.0, %v2369
    %s2371 = scalar_lea.vmem [#allocation3], 48
    %v2372 = vld [vmem:[%s2371] sm:$0xff]
    %v2373 = vadd.f32 %v2372, %v2278
    %v2374 = vxor.u32 %v2373, 2147483648
    %v2375 = vmul.f32 %v2374, 1.442695
    %v2376 = vpow.pop %v2375
    %v2377 = vadd.f32 %v2376, 1.0
    %v2378 = vrcp.pop %v2377
    %v2379 = vmul.f32 1.0, %v2378
    %s2380 = scalar_lea.vmem [#allocation4], 48
    %v2381 = vld [vmem:[%s2380] sm:$0xff]
    %v2382 = vmul.f32 %v2370, %v2359
    %v2383 = vadd.f32 %v2381, %v2382
    %v2384 = vtanh.pop %v2383
    %v2385 = vsub.f32 1.0, %v2379
    %v2386 = vmul.f32 %v2385, %v2384
    %v2387 = vmul.f32 %v2379, %v2129
    %v2388 = vadd.f32 %v2386, %v2387
    %2389 = vst.msk [vmem:[#allocation5] sm:$0xff] %vm303, %v2388
    %s2390 = scalar_lea.vmem [#allocation6], 48
    %2391 = vst.msk [vmem:[%s2390] sm:$0xff] %vm303, %v2388
    %v2392 = vld [vmem:[#allocation5] sm:$0xff]
    %v2393 = vld [vmem:[#allocation13] sm:$0xff]
    %v2394 = vld [vmem:[#allocation13 + $0x8] sm:$0xff]
    %v2395 = vld [vmem:[#allocation13 + $0x10] sm:$0xff]
    %v2396 = vld [vmem:[#allocation13 + $0x18] sm:$0xff]
    %v2398 = vsel %vm303, %v2392, 0
    %2400 = vmatprep.subr.mxu0 0.0
    %2401 = vmatpush1.msra.mxu0 %v2393
    %2402 = vmatprep.subr.mxu0 0.0
    %2403 = vmatpush1.msra.mxu0 %v2394
    %2404 = vmatprep.subr.mxu0 0.0
    %2405 = vmatpush1.msra.mxu0 %v2395
    %2406 = vmatprep.subr.mxu0 0.0
    %2407 = vmatpush1.msra.mxu0 %v2396
    %2408 = vmatprep.subr.mxu0 0.0
    %2409 = vmatpush1.msra.mxu0 0.0
    %2410 = vmatprep.subr.mxu0 0.0
    %2411 = vmatpush1.msra.mxu0 0.0
    %2412 = vmatprep.subr.mxu0 0.0
    %2413 = vmatpush1.msra.mxu0 0.0
    %2414 = vmatprep.subr.mxu0 0.0
    %2415 = vmatpush1.msra.mxu0 0.0
    %2416 = vmatprep.subr.mxu0 0.0
    %2417 = vmatpush1.msra.mxu0 0.0
    %2418 = vmatprep.subr.mxu0 0.0
    %2419 = vmatpush1.msra.mxu0 0.0
    %2420 = vmatprep.subr.mxu0 0.0
    %2421 = vmatpush1.msra.mxu0 0.0
    %2422 = vmatprep.subr.mxu0 0.0
    %2423 = vmatpush1.msra.mxu0 0.0
    %2424 = vmatprep.subr.mxu0 0.0
    %2425 = vmatpush1.msra.mxu0 0.0
    %2426 = vmatprep.subr.mxu0 0.0
    %2427 = vmatpush1.msra.mxu0 0.0
    %2428 = vmatprep.subr.mxu0 0.0
    %2429 = vmatpush1.msra.mxu0 0.0
    %2430 = vmatprep.subr.mxu0 0.0
    %2431 = vmatpush1.msra.mxu0 0.0
    %2432 = vmatprep.subr.mxu0 0.0
    %2433 = vmatpush1.msra.mxu0 0.0
    %2434 = vmatprep.subr.mxu0 0.0
    %2435 = vmatpush1.msra.mxu0 0.0
    %2436 = vmatprep.subr.mxu0 0.0
    %2437 = vmatpush1.msra.mxu0 0.0
    %2438 = vmatprep.subr.mxu0 0.0
    %2439 = vmatpush1.msra.mxu0 0.0
    %2440 = vmatprep.subr.mxu0 0.0
    %2441 = vmatpush1.msra.mxu0 0.0
    %2442 = vmatprep.subr.mxu0 0.0
    %2443 = vmatpush1.msra.mxu0 0.0
    %2444 = vmatprep.subr.mxu0 0.0
    %2445 = vmatpush1.msra.mxu0 0.0
    %2446 = vmatprep.subr.mxu0 0.0
    %2447 = vmatpush1.msra.mxu0 0.0
    %2448 = vmatprep.subr.mxu0 0.0
    %2449 = vmatpush1.msra.mxu0 0.0
    %2450 = vmatprep.subr.mxu0 0.0
    %2451 = vmatpush1.msra.mxu0 0.0
    %2452 = vmatprep.subr.mxu0 0.0
    %2453 = vmatpush1.msra.mxu0 0.0
    %2454 = vmatprep.subr.mxu0 0.0
    %2455 = vmatpush1.msra.mxu0 0.0
    %2456 = vmatprep.subr.mxu0 0.0
    %2457 = vmatpush1.msra.mxu0 0.0
    %2458 = vmatprep.subr.mxu0 0.0
    %2459 = vmatpush1.msra.mxu0 0.0
    %2460 = vmatprep.subr.mxu0 0.0
    %2461 = vmatpush1.msra.mxu0 0.0
    %2462 = vmatprep.subr.mxu0 0.0
    %2463 = vmatpush1.msra.mxu0 0.0
    %2464 = vmatprep.mubr.f32.mxu0 0.0
    %2465 = vmatmul.mubr.f32.gmra.mrb[0].mxu0 %v2398
    %v2466 = vpop.f32.mrb[0].mxu0
    %v2467 = vadd.f32 0.0, %v2466
    %v2468 = vpop.f32.mrb[0].mxu0
    %2469 = vdwg.mxu0
    %v2470 = vld [vmem:[#allocation15] sm:$0xff]
    %v2471 = vld [vmem:[#allocation15 + $0x8] sm:$0xff]
    %v2472 = vld [vmem:[#allocation15 + $0x10] sm:$0xff]
    %v2473 = vld [vmem:[#allocation15 + $0x18] sm:$0xff]
    %2474 = vmatprep.subr.mxu0 0.0
    %2475 = vmatpush1.msra.mxu0 %v2470
    %2476 = vmatprep.subr.mxu0 0.0
    %2477 = vmatpush1.msra.mxu0 %v2471
    %2478 = vmatprep.subr.mxu0 0.0
    %2479 = vmatpush1.msra.mxu0 %v2472
    %2480 = vmatprep.subr.mxu0 0.0
    %2481 = vmatpush1.msra.mxu0 %v2473
    %2482 = vmatprep.subr.mxu0 0.0
    %2483 = vmatpush1.msra.mxu0 0.0
    %2484 = vmatprep.subr.mxu0 0.0
    %2485 = vmatpush1.msra.mxu0 0.0
    %2486 = vmatprep.subr.mxu0 0.0
    %2487 = vmatpush1.msra.mxu0 0.0
    %2488 = vmatprep.subr.mxu0 0.0
    %2489 = vmatpush1.msra.mxu0 0.0
    %2490 = vmatprep.subr.mxu0 0.0
    %2491 = vmatpush1.msra.mxu0 0.0
    %2492 = vmatprep.subr.mxu0 0.0
    %2493 = vmatpush1.msra.mxu0 0.0
    %2494 = vmatprep.subr.mxu0 0.0
    %2495 = vmatpush1.msra.mxu0 0.0
    %2496 = vmatprep.subr.mxu0 0.0
    %2497 = vmatpush1.msra.mxu0 0.0
    %2498 = vmatprep.subr.mxu0 0.0
    %2499 = vmatpush1.msra.mxu0 0.0
    %2500 = vmatprep.subr.mxu0 0.0
    %2501 = vmatpush1.msra.mxu0 0.0
    %2502 = vmatprep.subr.mxu0 0.0
    %2503 = vmatpush1.msra.mxu0 0.0
    %2504 = vmatprep.subr.mxu0 0.0
    %2505 = vmatpush1.msra.mxu0 0.0
    %2506 = vmatprep.subr.mxu0 0.0
    %2507 = vmatpush1.msra.mxu0 0.0
    %2508 = vmatprep.subr.mxu0 0.0
    %2509 = vmatpush1.msra.mxu0 0.0
    %2510 = vmatprep.subr.mxu0 0.0
    %2511 = vmatpush1.msra.mxu0 0.0
    %2512 = vmatprep.subr.mxu0 0.0
    %2513 = vmatpush1.msra.mxu0 0.0
    %2514 = vmatprep.subr.mxu0 0.0
    %2515 = vmatpush1.msra.mxu0 0.0
    %2516 = vmatprep.subr.mxu0 0.0
    %2517 = vmatpush1.msra.mxu0 0.0
    %2518 = vmatprep.subr.mxu0 0.0
    %2519 = vmatpush1.msra.mxu0 0.0
    %2520 = vmatprep.subr.mxu0 0.0
    %2521 = vmatpush1.msra.mxu0 0.0
    %2522 = vmatprep.subr.mxu0 0.0
    %2523 = vmatpush1.msra.mxu0 0.0
    %2524 = vmatprep.subr.mxu0 0.0
    %2525 = vmatpush1.msra.mxu0 0.0
    %2526 = vmatprep.subr.mxu0 0.0
    %2527 = vmatpush1.msra.mxu0 0.0
    %2528 = vmatprep.subr.mxu0 0.0
    %2529 = vmatpush1.msra.mxu0 0.0
    %2530 = vmatprep.subr.mxu0 0.0
    %2531 = vmatpush1.msra.mxu0 0.0
    %2532 = vmatprep.subr.mxu0 0.0
    %2533 = vmatpush1.msra.mxu0 0.0
    %2534 = vmatprep.subr.mxu0 0.0
    %2535 = vmatpush1.msra.mxu0 0.0
    %2536 = vmatprep.subr.mxu0 0.0
    %2537 = vmatpush1.msra.mxu0 0.0
    %2538 = vmatprep.mubr.f32.mxu0 0.0
    %2539 = vmatmul.mubr.f32.gmra.mrb[0].mxu0 %v2398
    %v2540 = vpop.f32.mrb[0].mxu0
    %v2541 = vadd.f32 0.0, %v2540
    %v2542 = vpop.f32.mrb[0].mxu0
    %2543 = vdwg.mxu0
    %v2544 = vld [vmem:[#allocation16] sm:$0xff]
    %v2545 = vld [vmem:[#allocation16 + $0x8] sm:$0xff]
    %v2546 = vld [vmem:[#allocation16 + $0x10] sm:$0xff]
    %v2547 = vld [vmem:[#allocation16 + $0x18] sm:$0xff]
    %v2548 = vld [vmem:[#allocation21] sm:$0x1]
    %v2550 = vlaneseq
    %v2551 = vshrl.u32 %v2550, 7
    %v2552 = vsub.s32 0, %v2551
    %v2553 = vrot.slane %v2548, %v2552
    %2555 = vmatprep.subr.mxu0 0.0
    %2556 = vmatpush1.msra.mxu0 %v2544
    %2557 = vmatprep.subr.mxu0 0.0
    %2558 = vmatpush1.msra.mxu0 %v2545
    %2559 = vmatprep.subr.mxu0 0.0
    %2560 = vmatpush1.msra.mxu0 %v2546
    %2561 = vmatprep.subr.mxu0 0.0
    %2562 = vmatpush1.msra.mxu0 %v2547
    %2563 = vmatprep.subr.mxu0 0.0
    %2564 = vmatpush1.msra.mxu0 0.0
    %2565 = vmatprep.subr.mxu0 0.0
    %2566 = vmatpush1.msra.mxu0 0.0
    %2567 = vmatprep.subr.mxu0 0.0
    %2568 = vmatpush1.msra.mxu0 0.0
    %2569 = vmatprep.subr.mxu0 0.0
    %2570 = vmatpush1.msra.mxu0 0.0
    %2571 = vmatprep.subr.mxu0 0.0
    %2572 = vmatpush1.msra.mxu0 0.0
    %2573 = vmatprep.subr.mxu0 0.0
    %2574 = vmatpush1.msra.mxu0 0.0
    %2575 = vmatprep.subr.mxu0 0.0
    %2576 = vmatpush1.msra.mxu0 0.0
    %2577 = vmatprep.subr.mxu0 0.0
    %2578 = vmatpush1.msra.mxu0 0.0
    %2579 = vmatprep.subr.mxu0 0.0
    %2580 = vmatpush1.msra.mxu0 0.0
    %2581 = vmatprep.subr.mxu0 0.0
    %2582 = vmatpush1.msra.mxu0 0.0
    %2583 = vmatprep.subr.mxu0 0.0
    %2584 = vmatpush1.msra.mxu0 0.0
    %2585 = vmatprep.subr.mxu0 0.0
    %2586 = vmatpush1.msra.mxu0 0.0
    %2587 = vmatprep.subr.mxu0 0.0
    %2588 = vmatpush1.msra.mxu0 0.0
    %2589 = vmatprep.subr.mxu0 0.0
    %2590 = vmatpush1.msra.mxu0 0.0
    %2591 = vmatprep.subr.mxu0 0.0
    %2592 = vmatpush1.msra.mxu0 0.0
    %2593 = vmatprep.subr.mxu0 0.0
    %2594 = vmatpush1.msra.mxu0 0.0
    %2595 = vmatprep.subr.mxu0 0.0
    %2596 = vmatpush1.msra.mxu0 0.0
    %2597 = vmatprep.subr.mxu0 0.0
    %2598 = vmatpush1.msra.mxu0 0.0
    %2599 = vmatprep.subr.mxu0 0.0
    %2600 = vmatpush1.msra.mxu0 0.0
    %2601 = vmatprep.subr.mxu0 0.0
    %2602 = vmatpush1.msra.mxu0 0.0
    %2603 = vmatprep.subr.mxu0 0.0
    %2604 = vmatpush1.msra.mxu0 0.0
    %2605 = vmatprep.subr.mxu0 0.0
    %2606 = vmatpush1.msra.mxu0 0.0
    %2607 = vmatprep.subr.mxu0 0.0
    %2608 = vmatpush1.msra.mxu0 0.0
    %2609 = vmatprep.subr.mxu0 0.0
    %2610 = vmatpush1.msra.mxu0 0.0
    %2611 = vmatprep.subr.mxu0 0.0
    %2612 = vmatpush1.msra.mxu0 0.0
    %2613 = vmatprep.subr.mxu0 0.0
    %2614 = vmatpush1.msra.mxu0 0.0
    %2615 = vmatprep.subr.mxu0 0.0
    %2616 = vmatpush1.msra.mxu0 0.0
    %2617 = vmatprep.subr.mxu0 0.0
    %2618 = vmatpush1.msra.mxu0 0.0
    %2619 = vmatprep.mubr.f32.mxu0 0.0
    %2620 = vmatmul.mubr.f32.gmra.mrb[0].mxu0 %v2398
    %v2621 = vpop.f32.mrb[0].mxu0
    %v2622 = vadd.f32 %v2553, %v2621
    %v2623 = vpop.f32.mrb[0].mxu0
    %2624 = vdwg.mxu0
    %s2625 = scalar_lea.vmem [#allocation2], 56
    %v2626 = vld [vmem:[%s2625] sm:$0xff]
    %v2627 = vadd.f32 %v2626, %v2467
    %v2628 = vxor.u32 %v2627, 2147483648
    %v2629 = vmul.f32 %v2628, 1.442695
    %v2630 = vpow.pop %v2629
    %v2631 = vadd.f32 %v2630, 1.0
    %v2632 = vrcp.pop %v2631
    %v2633 = vmul.f32 1.0, %v2632
    %s2634 = scalar_lea.vmem [#allocation3], 56
    %v2635 = vld [vmem:[%s2634] sm:$0xff]
    %v2636 = vadd.f32 %v2635, %v2541
    %v2637 = vxor.u32 %v2636, 2147483648
    %v2638 = vmul.f32 %v2637, 1.442695
    %v2639 = vpow.pop %v2638
    %v2640 = vadd.f32 %v2639, 1.0
    %v2641 = vrcp.pop %v2640
    %v2642 = vmul.f32 1.0, %v2641
    %s2643 = scalar_lea.vmem [#allocation4], 56
    %v2644 = vld [vmem:[%s2643] sm:$0xff]
    %v2645 = vmul.f32 %v2633, %v2622
    %v2646 = vadd.f32 %v2644, %v2645
    %v2647 = vtanh.pop %v2646
    %v2648 = vsub.f32 1.0, %v2642
    %v2649 = vmul.f32 %v2648, %v2647
    %v2650 = vmul.f32 %v2642, %v2392
    %v2651 = vadd.f32 %v2649, %v2650
    %2652 = vst.msk [vmem:[#allocation5] sm:$0xff] %vm303, %v2651
    %s2653 = scalar_lea.vmem [#allocation6], 56
    %2654 = vst.msk [vmem:[%s2653] sm:$0xff] %vm303, %v2651
    %v2655 = vld [vmem:[#allocation6] sm:$0xff]
    %v2656 = vld [vmem:[#allocation6 + $0x8] sm:$0xff]
    %v2657 = vld [vmem:[#allocation6 + $0x10] sm:$0xff]
    %v2658 = vld [vmem:[#allocation6 + $0x18] sm:$0xff]
    %v2659 = vld [vmem:[#allocation6 + $0x20] sm:$0xff]
    %v2660 = vld [vmem:[#allocation6 + $0x28] sm:$0xff]
    %v2661 = vld [vmem:[#allocation6 + $0x30] sm:$0xff]
    %v2662 = vld [vmem:[#allocation6 + $0x38] sm:$0xff]
    %v2663 = vld [vmem:[%s11] sm:$0xff]
    %v2664 = vld [vmem:[%s11 + $0x8] sm:$0xff]
    %v2665 = vld [vmem:[%s11 + $0x10] sm:$0xff]
    %v2666 = vld [vmem:[%s11 + $0x18] sm:$0xff]
    %v2667 = vld [vmem:[%s12] sm:$0x1]
    %v2669 = vlaneseq
    %v2670 = vshrl.u32 %v2669, 7
    %v2671 = vsub.s32 0, %v2670
    %v2672 = vrot.slane %v2667, %v2671
    %v2675 = vsel %vm303, %v2655, 0
    %v2678 = vsel %vm303, %v2656, 0
    %v2681 = vsel %vm303, %v2657, 0
    %v2684 = vsel %vm303, %v2658, 0
    %v2687 = vsel %vm303, %v2659, 0
    %v2690 = vsel %vm303, %v2660, 0
    %v2693 = vsel %vm303, %v2661, 0
    %v2696 = vsel %vm303, %v2662, 0
    %2698 = vmatprep.subr.mxu0 0.0
    %2699 = vmatpush1.msra.mxu0 %v2663
    %2700 = vmatprep.subr.mxu0 0.0
    %2701 = vmatpush1.msra.mxu0 %v2664
    %2702 = vmatprep.subr.mxu0 0.0
    %2703 = vmatpush1.msra.mxu0 %v2665
    %2704 = vmatprep.subr.mxu0 0.0
    %2705 = vmatpush1.msra.mxu0 %v2666
    %2706 = vmatprep.subr.mxu0 0.0
    %2707 = vmatpush1.msra.mxu0 0.0
    %2708 = vmatprep.subr.mxu0 0.0
    %2709 = vmatpush1.msra.mxu0 0.0
    %2710 = vmatprep.subr.mxu0 0.0
    %2711 = vmatpush1.msra.mxu0 0.0
    %2712 = vmatprep.subr.mxu0 0.0
    %2713 = vmatpush1.msra.mxu0 0.0
    %2714 = vmatprep.subr.mxu0 0.0
    %2715 = vmatpush1.msra.mxu0 0.0
    %2716 = vmatprep.subr.mxu0 0.0
    %2717 = vmatpush1.msra.mxu0 0.0
    %2718 = vmatprep.subr.mxu0 0.0
    %2719 = vmatpush1.msra.mxu0 0.0
    %2720 = vmatprep.subr.mxu0 0.0
    %2721 = vmatpush1.msra.mxu0 0.0
    %2722 = vmatprep.subr.mxu0 0.0
    %2723 = vmatpush1.msra.mxu0 0.0
    %2724 = vmatprep.subr.mxu0 0.0
    %2725 = vmatpush1.msra.mxu0 0.0
    %2726 = vmatprep.subr.mxu0 0.0
    %2727 = vmatpush1.msra.mxu0 0.0
    %2728 = vmatprep.subr.mxu0 0.0
    %2729 = vmatpush1.msra.mxu0 0.0
    %2730 = vmatprep.subr.mxu0 0.0
    %2731 = vmatpush1.msra.mxu0 0.0
    %2732 = vmatprep.subr.mxu0 0.0
    %2733 = vmatpush1.msra.mxu0 0.0
    %2734 = vmatprep.subr.mxu0 0.0
    %2735 = vmatpush1.msra.mxu0 0.0
    %2736 = vmatprep.subr.mxu0 0.0
    %2737 = vmatpush1.msra.mxu0 0.0
    %2738 = vmatprep.subr.mxu0 0.0
    %2739 = vmatpush1.msra.mxu0 0.0
    %2740 = vmatprep.subr.mxu0 0.0
    %2741 = vmatpush1.msra.mxu0 0.0
    %2742 = vmatprep.subr.mxu0 0.0
    %2743 = vmatpush1.msra.mxu0 0.0
    %2744 = vmatprep.subr.mxu0 0.0
    %2745 = vmatpush1.msra.mxu0 0.0
    %2746 = vmatprep.subr.mxu0 0.0
    %2747 = vmatpush1.msra.mxu0 0.0
    %2748 = vmatprep.subr.mxu0 0.0
    %2749 = vmatpush1.msra.mxu0 0.0
    %2750 = vmatprep.subr.mxu0 0.0
    %2751 = vmatpush1.msra.mxu0 0.0
    %2752 = vmatprep.subr.mxu0 0.0
    %2753 = vmatpush1.msra.mxu0 0.0
    %2754 = vmatprep.subr.mxu0 0.0
    %2755 = vmatpush1.msra.mxu0 0.0
    %2756 = vmatprep.subr.mxu0 0.0
    %2757 = vmatpush1.msra.mxu0 0.0
    %2758 = vmatprep.subr.mxu0 0.0
    %2759 = vmatpush1.msra.mxu0 0.0
    %2760 = vmatprep.subr.mxu0 0.0
    %2761 = vmatpush1.msra.mxu0 0.0
    %2762 = vmatprep.mubr.f32.mxu0 0.0
    %2763 = vmatmul.mubr.f32.gmra.mrb[0].mxu0 %v2675
    %v2764 = vpop.f32.mrb[0].mxu0
    %v2765 = vadd.f32 %v2672, %v2764
    %v2766 = vpop.f32.mrb[0].mxu0
    %2767 = vmatprep.mubr.f32.mxu0 0.0
    %2768 = vmatmul.mubr.f32.gmra.mrb[0].mxu0 %v2678
    %v2769 = vpop.f32.mrb[0].mxu0
    %v2770 = vadd.f32 %v2672, %v2769
    %v2771 = vpop.f32.mrb[0].mxu0
    %2772 = vmatprep.mubr.f32.mxu0 0.0
    %2773 = vmatmul.mubr.f32.gmra.mrb[0].mxu0 %v2681
    %v2774 = vpop.f32.mrb[0].mxu0
    %v2775 = vadd.f32 %v2672, %v2774
    %v2776 = vpop.f32.mrb[0].mxu0
    %2777 = vmatprep.mubr.f32.mxu0 0.0
    %2778 = vmatmul.mubr.f32.gmra.mrb[0].mxu0 %v2684
    %v2779 = vpop.f32.mrb[0].mxu0
    %v2780 = vadd.f32 %v2672, %v2779
    %v2781 = vpop.f32.mrb[0].mxu0
    %2782 = vmatprep.mubr.f32.mxu0 0.0
    %2783 = vmatmul.mubr.f32.gmra.mrb[0].mxu0 %v2687
    %v2784 = vpop.f32.mrb[0].mxu0
    %v2785 = vadd.f32 %v2672, %v2784
    %v2786 = vpop.f32.mrb[0].mxu0
    %2787 = vmatprep.mubr.f32.mxu0 0.0
    %2788 = vmatmul.mubr.f32.gmra.mrb[0].mxu0 %v2690
    %v2789 = vpop.f32.mrb[0].mxu0
    %v2790 = vadd.f32 %v2672, %v2789
    %v2791 = vpop.f32.mrb[0].mxu0
    %2792 = vmatprep.mubr.f32.mxu0 0.0
    %2793 = vmatmul.mubr.f32.gmra.mrb[0].mxu0 %v2693
    %v2794 = vpop.f32.mrb[0].mxu0
    %v2795 = vadd.f32 %v2672, %v2794
    %v2796 = vpop.f32.mrb[0].mxu0
    %2797 = vmatprep.mubr.f32.mxu0 0.0
    %2798 = vmatmul.mubr.f32.gmra.mrb[0].mxu0 %v2696
    %v2799 = vpop.f32.mrb[0].mxu0
    %v2800 = vadd.f32 %v2672, %v2799
    %v2801 = vpop.f32.mrb[0].mxu0
    %2802 = vdwg.mxu0
    %2803 = vst.msk [vmem:[#allocation22] sm:$0xff] %vm303, %v2765
    %2804 = vst.msk [vmem:[#allocation22 + $0x8] sm:$0xff] %vm303, %v2770
    %2805 = vst.msk [vmem:[#allocation22 + $0x10] sm:$0xff] %vm303, %v2775
    %2806 = vst.msk [vmem:[#allocation22 + $0x18] sm:$0xff] %vm303, %v2780
    %2807 = vst.msk [vmem:[#allocation22 + $0x20] sm:$0xff] %vm303, %v2785
    %2808 = vst.msk [vmem:[#allocation22 + $0x28] sm:$0xff] %vm303, %v2790
    %2809 = vst.msk [vmem:[#allocation22 + $0x30] sm:$0xff] %vm303, %v2795
    %2810 = vst.msk [vmem:[#allocation22 + $0x38] sm:$0xff] %vm303, %v2800
    // Predicated region
    $region90: #{tpu_custom_call.1} parent=1 // pred_check
      _
    $region91: #{tpu_custom_call.1} parent=1 // pred_check_branch
      %2812 = sbr.rel (0) target = $region93
    $region92: #{tpu_custom_call.1} parent=1 // pred_region
      %s2814 = ssub.s32 1024, 1024
      %2815 = vsyncadd [#allocation9], %s2814
      %s2816 = sshll.u32 [#allocation22], 4
      %s2817 = int_to_ptr.vmem [resolvable:$true] %s2816
      %2822 = dma.vmem_to_hbm [thread:$0]  %s2817, 1024, %s13, [#allocation9], 128, 128, 8
    $region93: #{tpu_custom_call.1} parent=1 // pred_fallthru
      _
    // Predicated region
    $region94: #{tpu_custom_call.1} parent=1 // pred_check
      _
    $region95: #{tpu_custom_call.1} parent=1 // pred_check_branch
      %2824 = sbr.rel (0) target = $region97
    $region96: #{tpu_custom_call.1} parent=1 // pred_region
      %2825 = dma.done [#allocation9], 1024
    $region97: #{tpu_custom_call.1} parent=1 // pred_fallthru
      _
    %2826 = vsyncpa [#allocation8], 1
    %2827 = vsyncpa [#allocation11], 1
    %2828 = vsyncpa [#allocation14], 1
    %2829 = vsyncpa [#allocation17], 1
    %2830 = vsyncpa [#allocation20], 1
    %2831 = vsyncpa [#allocation9], 1

</llo_original>
